<compile_context>
chip_gen: v5e
topology: v5e:2x2
jax: 0.10.0
libtpu: 0.0.40
codegen_flags: <defaults>
</compile_context>

<pallas_src>
import functools

import jax
import jax.numpy as jnp
import numpy as np
from jax.experimental import pallas as pl
from jax.experimental.pallas import tpu as pltpu


def _round_up(x, m):
    return (x + m - 1) // m * m


# ---------------------------------------------------------------------------
# In-kernel helpers
# ---------------------------------------------------------------------------
def _bn_mish(x, n_rows):
    """BatchNorm2d (training batch stats, gamma=1, beta=0, eps=1e-5) + Mish.

    x: (rows, C) f32, all rows real.  Zero-padded channels stay exactly zero.
    """
    inv_n = 1.0 / float(n_rows)
    mean = jnp.sum(x, axis=0, keepdims=True) * inv_n
    ex2 = jnp.sum(x * x, axis=0, keepdims=True) * inv_n
    var = jnp.maximum(ex2 - mean * mean, 0.0)
    y = (x - mean) * jax.lax.rsqrt(var + 1e-5)
    # Mish(y) = y * tanh(softplus(y)) = y * ((1+e^y)^2 - 1) / ((1+e^y)^2 + 1)
    t = jnp.exp(jnp.minimum(y, 20.0))
    u = 1.0 + t
    u2 = u * u
    return y * (u2 - 1.0) * pl.reciprocal(u2 + 1.0, approx=True)


def _bdot(a_f32, b_bf16):
    """bf16 MXU matmul with f32 accumulation."""
    return jnp.dot(a_f32.astype(jnp.bfloat16), b_bf16,
                   preferred_element_type=jnp.float32)


def _tap_shifts(rows, h, w):
    """Static sublane-roll amounts for the 9 taps of a 3x3, pad-1 conv."""
    return tuple((-((kh - 1) * w + (kw - 1))) % rows
                 for kh in range(3) for kw in range(3))


# ---------------------------------------------------------------------------
# Kernel 1: stem = conv0 (im2col matmul) + norm0 + Mish + maxpool(3,2,1)
#           maxpool = 9 rolls + masked max + ONE stride-2 selection matmul.
# ---------------------------------------------------------------------------
def _stem_kernel(a_ref, w0_ref, mask_ref, sel_ref, o_ref, *, h, w):
    rows = a_ref.shape[0]
    shifts = _tap_shifts(rows, h, w)
    y = _bn_mish(_bdot(a_ref[...], w0_ref[...]), rows)
    m = None
    for k, s in enumerate(shifts):
        valid = mask_ref[:, k:k + 1] > 0.0                  # (rows, 1) border mask
        tap = jnp.where(valid, pltpu.roll(y, shift=s, axis=0), -1e30)
        m = tap if m is None else jnp.maximum(m, tap)
    o_ref[...] = jnp.dot(sel_ref[...], m.astype(jnp.bfloat16),
                         preferred_element_type=jnp.float32)


# ---------------------------------------------------------------------------
# Kernels 2-4: fused dense block (+ transition / final global pool)
# ---------------------------------------------------------------------------
def _dense_layers(x_ref, w1_ref, w2_ref, mask_ref, h, w):
    rows = x_ref.shape[0]
    num_layers = w1_ref.shape[0]
    shifts = _tap_shifts(rows, h, w)

    def body(i, feat):
        y = _bn_mish(feat, rows)                            # norm1 + relu1(Mish)
        hm = _bn_mish(_bdot(y, w1_ref[i]), rows)            # conv1 1x1, norm2, relu2
        # conv2 3x3 pad 1: 9 sublane rolls, border mask, one K=9*48 matmul.
        hcat = jnp.concatenate(
            [pltpu.roll(hm, shift=s, axis=0) for s in shifts], axis=-1)
        hcat = (hcat * mask_ref[...]).astype(jnp.bfloat16)
        # w2 is zero-embedded at this layer's channel offset -> in-place
        # "torch.cat" of the new growth_rate features.
        return feat + jnp.dot(hcat, w2_ref[i],
                              preferred_element_type=jnp.float32)

    return jax.lax.fori_loop(0, num_layers, body, x_ref[...])


def _block_trans_kernel(x_ref, w1_ref, w2_ref, mask_ref, wt_ref, ap_ref,
                        o_ref, *, h, w):
    feat = _dense_layers(x_ref, w1_ref, w2_ref, mask_ref, h, w)
    y = _bn_mish(feat, feat.shape[0])                       # transition norm + Mish
    t = _bdot(y, wt_ref[...])                               # transition 1x1 conv
    o_ref[...] = jnp.dot(ap_ref[...], t.astype(jnp.bfloat16),
                         preferred_element_type=jnp.float32)     # 2x2 avg pool


def _block_final_kernel(x_ref, w1_ref, w2_ref, mask_ref, gp_ref, o_ref, *, h, w):
    feat = _dense_layers(x_ref, w1_ref, w2_ref, mask_ref, h, w)
    y = _bn_mish(feat, feat.shape[0])                       # norm5 + relu5(Mish)
    o_ref[...] = jnp.dot(gp_ref[...], y.astype(jnp.bfloat16),
                         preferred_element_type=jnp.float32)     # global avg pool


# ---------------------------------------------------------------------------
# pallas_call wrappers (grid = 2 branches, whole-array blocks)
# ---------------------------------------------------------------------------
def _branch_spec(shape):
    rest = tuple(int(d) for d in shape[1:])
    zeros = (0,) * len(rest)
    return pl.BlockSpec((None,) + rest, lambda b, _z=zeros: (b,) + _z)


def _shared_spec(shape):
    dims = tuple(int(d) for d in shape)
    zeros = (0,) * len(dims)
    return pl.BlockSpec(dims, lambda b, _z=zeros: _z)


def run_stem(a, w0, mask0, sel0, h, w):
    branches = a.shape[0]
    rows_out = sel0.shape[0]
    cp = w0.shape[-1]
    kern = functools.partial(_stem_kernel, h=h, w=w)
    return pl.pallas_call(
        kern,
        out_shape=jax.ShapeDtypeStruct((branches, rows_out, cp), jnp.float32),
        grid_spec=pltpu.PrefetchScalarGridSpec(
            num_scalar_prefetch=0, grid=(branches,),
            in_specs=[_branch_spec(a.shape), _branch_spec(w0.shape),
                      _shared_spec(mask0.shape), _shared_spec(sel0.shape)],
            out_specs=pl.BlockSpec((None, rows_out, cp), lambda b: (b, 0, 0)),
        ),
        compiler_params=pltpu.CompilerParams(
            dimension_semantics=("parallel",)),
    )(a, w0, mask0, sel0)


def run_dense_block(x, blk, tap_mask, pool_mat, h, w, *, final):
    branches, _, cp = x.shape
    if final:
        kern = functools.partial(_block_final_kernel, h=h, w=w)
        ins = [x, blk["w1"], blk["w2"], tap_mask, pool_mat]
        specs = [_branch_spec(x.shape), _branch_spec(blk["w1"].shape),
                 _branch_spec(blk["w2"].shape), _shared_spec(tap_mask.shape),
                 _shared_spec(pool_mat.shape)]
        rows_out, cnext = pool_mat.shape[0], cp
    else:
        kern = functools.partial(_block_trans_kernel, h=h, w=w)
        ins = [x, blk["w1"], blk["w2"], tap_mask, blk["wt"], pool_mat]
        specs = [_branch_spec(x.shape), _branch_spec(blk["w1"].shape),
                 _branch_spec(blk["w2"].shape), _shared_spec(tap_mask.shape),
                 _branch_spec(blk["wt"].shape), _shared_spec(pool_mat.shape)]
        rows_out, cnext = pool_mat.shape[0], blk["wt"].shape[-1]
    return pl.pallas_call(
        kern,
        out_shape=jax.ShapeDtypeStruct((branches, rows_out, cnext), jnp.float32),
        grid_spec=pltpu.PrefetchScalarGridSpec(
            num_scalar_prefetch=0, grid=(branches,),
            in_specs=specs,
            out_specs=pl.BlockSpec((None, rows_out, cnext), lambda b: (b, 0, 0)),
        ),
        compiler_params=pltpu.CompilerParams(
            dimension_semantics=("parallel",)),
    )(*ins)


# ---------------------------------------------------------------------------
# Host-side, one-time precomputed masks / pooling matrices (numpy)
# ---------------------------------------------------------------------------
def _np_stem_tap_mask(n, h, w):
    """(n*h*w, 9) f32: 1 where 3x3 tap (kh,kw) lies inside the image."""
    m = np.zeros((n * h * w, 9), np.float32)
    for ni in range(n):
        for i in range(h):
            for j in range(w):
                r = ni * h * w + i * w + j
                for kh in range(3):
                    for kw in range(3):
                        if 0 <= i + kh - 1 < h and 0 <= j + kw - 1 < w:
                            m[r, kh * 3 + kw] = 1.0
    return m


def _np_tap_mask_cat(n, h, w, cmid):
    """(n*h*w, 9*cmid) f32: lane-group k is the border mask of tap k."""
    m = np.zeros((n * h * w, 9 * cmid), np.float32)
    for ni in range(n):
        for i in range(h):
            for j in range(w):
                r = ni * h * w + i * w + j
                for kh in range(3):
                    for kw in range(3):
                        if 0 <= i + kh - 1 < h and 0 <= j + kw - 1 < w:
                            k = kh * 3 + kw
                            m[r, k * cmid:(k + 1) * cmid] = 1.0
    return m


def _np_pool0_select(n, hi, wi):
    """Stride-2 row selection for maxpool(3,2,1): (n*ho*wo, n*hi*wi)."""
    ho, wo = (hi - 1) // 2 + 1, (wi - 1) // 2 + 1
    s = np.zeros((n * ho * wo, n * hi * wi), np.float32)
    for ni in range(n):
        for i in range(ho):
            for j in range(wo):
                s[ni * ho * wo + i * wo + j,
                  ni * hi * wi + (2 * i) * wi + (2 * j)] = 1.0
    return s


def _np_avgpool_mat(n, h, w):
    ho, wo = h // 2, w // 2
    a = np.zeros((n * ho * wo, n * h * w), np.float32)
    for ni in range(n):
        for i in range(ho):
            for j in range(wo):
                r = ni * ho * wo + i * wo + j
                for dh in range(2):
                    for dw in range(2):
                        a[r, ni * h * w + (2 * i + dh) * w + 2 * j + dw] = 0.25
    return a


def _np_gap_mat(n, h, w, rows_out):
    g = np.zeros((rows_out, n * h * w), np.float32)
    for ni in range(n):
        g[ni, ni * h * w:(ni + 1) * h * w] = 1.0 / (h * w)
    return g


# ---------------------------------------------------------------------------
# Host-side glue: one-time im2col for conv0 (k=7, s=2, p=3)
# ---------------------------------------------------------------------------
def _im2col_conv0(x_nhwc):
    n, h, w, c = x_nhwc.shape
    xp = jnp.pad(x_nhwc, ((0, 0), (3, 3), (3, 3), (0, 0)))
    ho = (h - 1) // 2 + 1
    wo = (w - 1) // 2 + 1
    cols = []
    for dh in range(7):
        for dw in range(7):
            cols.append(xp[:, dh:dh + 2 * (ho - 1) + 1:2,
                           dw:dw + 2 * (wo - 1) + 1:2, :])
    return jnp.concatenate(cols, axis=-1).reshape(n * ho * wo, 49 * c)


# ---------------------------------------------------------------------------
# Parameter construction (deterministic, mirrors the PyTorch module's shapes)
# ---------------------------------------------------------------------------
def build_params(key, batch, height, width, growth=12, block_config=(6, 12, 4),
                 bn_size=4, theta=0.5, num_classes=2):
    c0 = 2 * growth
    cmid = bn_size * growth                                   # 48

    # channel plan
    chans_in, chans_out, trans_out = [], [], []
    c = c0
    for bi, nl in enumerate(block_config):
        chans_in.append(c)
        c = c + growth * nl
        chans_out.append(c)
        if bi != len(block_config) - 1:
            c = int(c * theta)
            trans_out.append(c)
    cps = [_round_up(co, 128) for co in chans_out]            # padded widths

    # spatial plan
    h1, w1 = (height - 1) // 2 + 1, (width - 1) // 2 + 1      # after conv0 s=2
    h2, w2 = (h1 - 1) // 2 + 1, (w1 - 1) // 2 + 1             # after pool0 s=2
    spatial = [(h2, w2)]
    for _ in range(len(block_config) - 1):
        spatial.append((spatial[-1][0] // 2, spatial[-1][1] // 2))

    cnt = [0]

    def nk():
        cnt[0] += 1
        return jax.random.fold_in(key, cnt[0])

    def rnd(shape, fan_in):
        return jax.random.normal(nk(), shape, jnp.float32) / np.sqrt(fan_in)

    params = {
        "num_classes": num_classes,
        "feat_per_branch": chans_out[-1],
        "pre_pool_spatial": (h1, w1),
        "spatial": spatial,
    }

    # per-branch raw weights (two identical-shaped branches)
    w0s, branch_raw = [], []
    for _b in range(2):
        w0 = rnd((7, 7, 3, c0), 3 * 49).reshape(49 * 3, c0)
        w0s.append(jnp.pad(w0, ((0, 0), (0, cps[0] - c0))).astype(jnp.bfloat16))
        blocks = []
        for bi, nl in enumerate(block_config):
            layers = []
            for li in range(nl):
                ci = chans_in[bi] + growth * li
                layers.append((rnd((ci, cmid), ci),
                               rnd((3, 3, cmid, growth), cmid * 9)))
            wt = None
            if bi != len(block_config) - 1:
                wt = rnd((chans_out[bi], trans_out[bi]), chans_out[bi])
            blocks.append((layers, wt))
        branch_raw.append(blocks)
    params["w0"] = jnp.stack(w0s)                             # (2, 147, 128)

    # packed dense-block weights: w1 zero-embedded over cp rows,
    # w2 of each layer fused over 9 taps -> (9*cmid, cp), zero-embedded at the
    # layer's channel offset (in-place DenseNet concat).
    params["blocks"] = []
    for bi, nl in enumerate(block_config):
        cp = cps[bi]
        w1_b, w2_b, wt_b = [], [], []
        for b in range(2):
            layers, wt = branch_raw[b][bi]
            w1s, w2s = [], []
            for li, (w1_, w2_) in enumerate(layers):
                ci = chans_in[bi] + growth * li
                w1s.append(jnp.zeros((cp, cmid), jnp.float32).at[:ci].set(w1_))
                w2cat = jnp.zeros((9 * cmid, cp), jnp.float32)
                for kh in range(3):
                    for kw in range(3):
                        k = kh * 3 + kw
                        w2cat = w2cat.at[k * cmid:(k + 1) * cmid,
                                         ci:ci + growth].set(w2_[kh, kw])
                w2s.append(w2cat)
            w1_b.append(jnp.stack(w1s).astype(jnp.bfloat16))   # (L, cp, 48)
            w2_b.append(jnp.stack(w2s).astype(jnp.bfloat16))   # (L, 432, cp)
            if wt is not None:
                cnext = cps[bi + 1]
                wt_b.append(
                    jnp.zeros((cp, cnext), jnp.float32)
                    .at[:chans_out[bi], :trans_out[bi]].set(wt)
                    .astype(jnp.bfloat16))
        blk = {"w1": jnp.stack(w1_b), "w2": jnp.stack(w2_b)}
        if wt_b:
            blk["wt"] = jnp.stack(wt_b)
        params["blocks"].append(blk)

    # shared (branch-independent) masks and pooling matrices
    params["mask0"] = jnp.asarray(_np_stem_tap_mask(batch, h1, w1), jnp.float32)
    params["sel0"] = jnp.asarray(_np_pool0_select(batch, h1, w1), jnp.bfloat16)
    tap_masks, pool_list = [], []
    for bi in range(len(block_config)):
        h, w = spatial[bi]
        tap_masks.append(jnp.asarray(_np_tap_mask_cat(batch, h, w, cmid),
                                     jnp.float32))
        if bi != len(block_config) - 1:
            pool_list.append(jnp.asarray(_np_avgpool_mat(batch, h, w),
                                         jnp.bfloat16))
        else:
            rows_out = max(8, _round_up(batch, 8))
            pool_list.append(jnp.asarray(_np_gap_mat(batch, h, w, rows_out),
                                         jnp.bfloat16))
    params["tap_mask"] = tap_masks
    params["pool"] = pool_list

    # classifier (no bias) -> tiny, executed as plain XLA per perf review
    feat_dim = 2 * chans_out[-1]
    params["wc"] = rnd((feat_dim, num_classes), feat_dim)
    return params


# ---------------------------------------------------------------------------
# Forward pass
# ---------------------------------------------------------------------------
def double_branch_dense_net(inputs_nchw, params):
    # inputs_nchw: tuple of two (N, 3, H, W) arrays (matches the torch forward)
    a_list = []
    for x in inputs_nchw:
        xn = jnp.transpose(x, (0, 2, 3, 1)).astype(jnp.float32)
        a_list.append(_im2col_conv0(xn))
    a = jnp.stack(a_list, axis=0)                       # (2, N*Ho*Wo, 147)

    h1, w1 = params["pre_pool_spatial"]
    x = run_stem(a, params["w0"], params["mask0"], params["sel0"], h1, w1)

    n_blocks = len(params["blocks"])
    for bi, blk in enumerate(params["blocks"]):
        h, w = params["spatial"][bi]
        x = run_dense_block(x, blk, params["tap_mask"][bi], params["pool"][bi],
                            h, w, final=(bi == n_blocks - 1))  # final: (2, 8, 256)

    n = inputs_nchw[0].shape[0]
    c = params["feat_per_branch"]
    l_feat = x[0, :n, :c]
    r_feat = x[1, :n, :c]
    feats = jnp.concatenate([l_feat, r_feat], axis=1)   # (N, 2*C)
    logits = jnp.dot(feats, params["wc"])               # tiny matmul -> plain XLA
    # torch returns branch features as (N, C, 1, 1)
    return (logits,
            l_feat.reshape(n, c, 1, 1),
            r_feat.reshape(n, c, 1, 1))


if __name__ == "__main__":
    key = jax.random.PRNGKey(0)
    k_params, k_x0, k_x1 = jax.random.split(key, 3)

    N, H, W = 2, 32, 32
    num_classes = 2
    params = build_params(k_params, N, H, W, growth=12,
                          block_config=(6, 12, 4), bn_size=4, theta=0.5,
                          num_classes=num_classes)

    x_light = jax.random.normal(k_x0, (N, 3, H, W), jnp.float32)
    x_rgb = jax.random.normal(k_x1, (N, 3, H, W), jnp.float32)

    out, l_feat, r_feat = double_branch_dense_net((x_light, x_rgb), params)
    jax.block_until_ready((out, l_feat, r_feat))

    assert out.shape == (N, num_classes)
    assert l_feat.shape == (N, 144, 1, 1) and r_feat.shape == (N, 144, 1, 1)
    assert bool(jnp.all(jnp.isfinite(out)))
    assert bool(jnp.all(jnp.isfinite(l_feat))) and bool(jnp.all(jnp.isfinite(r_feat)))
    print("KERNEL_OK")
</pallas_src>

<mosaic_0001>
module attributes {stable_mosaic.version = 11 : i64} {
  func.func @_stem_kernel(%arg0: i32, %arg1: memref<1x512x147xf32, #tpu.memory_space<vmem>>, %arg2: memref<1x147x128xbf16, #tpu.memory_space<vmem>>, %arg3: memref<512x9xf32, #tpu.memory_space<vmem>>, %arg4: memref<128x512xbf16, #tpu.memory_space<vmem>>, %arg5: memref<1x128x128xf32, #tpu.memory_space<vmem>>) attributes {dimension_semantics = [#tpu.dimension_semantics<parallel>], iteration_bounds = array<i64: 2>, scalar_prefetch = 0 : i64, scratch_operands = 0 : i64, tpu.core_type = #tpu.core_type<tc>, window_params = [{transform_indices = @transform_0, window_bounds = array<i64: 1, 512, 147>}, {transform_indices = @transform_1, window_bounds = array<i64: 1, 147, 128>}, {pipeline_mode = #tpu.pipeline_mode<synchronous>, transform_indices = @transform_2, window_bounds = array<i64: 512, 9>}, {pipeline_mode = #tpu.pipeline_mode<synchronous>, transform_indices = @transform_3, window_bounds = array<i64: 128, 512>}, {transform_indices = @transform_4, window_bounds = array<i64: 1, 128, 128>}]} {
    %c0 = arith.constant 0 : index
    %c0_0 = arith.constant 0 : index
    %c0_1 = arith.constant 0 : index
    %0 = vector.load %arg1[%c0, %c0_0, %c0_1] : memref<1x512x147xf32, #tpu.memory_space<vmem>>, vector<1x512x147xf32>
    %1 = vector.shape_cast %0 : vector<1x512x147xf32> to vector<512x147xf32>
    %c0_2 = arith.constant 0 : index
    %c0_3 = arith.constant 0 : index
    %c0_4 = arith.constant 0 : index
    %2 = vector.load %arg2[%c0_2, %c0_3, %c0_4] : memref<1x147x128xbf16, #tpu.memory_space<vmem>>, vector<1x147x128xbf16>
    %3 = vector.shape_cast %2 : vector<1x147x128xbf16> to vector<147x128xbf16>
    %4 = arith.truncf %1 : vector<512x147xf32> to vector<512x147xbf16>
    %cst = arith.constant dense<0.000000e+00> : vector<512x128xf32>
    %5 = tpu.matmul %4, %3, %cst {dimension_numbers = #tpu.dot_dimension_numbers<[1], [0], [0], [1], [0, 0, 1, 1], [], []>} : vector<512x147xbf16>, vector<147x128xbf16>, vector<512x128xf32> -> vector<512x128xf32>
    %cst_5 = arith.constant dense<0.000000e+00> : vector<128xf32>
    %6 = vector.multi_reduction <add>, %5, %cst_5 [0] : vector<512x128xf32> to vector<128xf32>
    %7 = vector.shape_cast %6 : vector<128xf32> to vector<1x128xf32>
    %cst_6 = arith.constant 0.001953125 : f32
    %8 = vector.broadcast %cst_6 : f32 to vector<1x128xf32>
    %9 = arith.mulf %7, %8 : vector<1x128xf32>
    %10 = arith.mulf %5, %5 : vector<512x128xf32>
    %cst_7 = arith.constant dense<0.000000e+00> : vector<128xf32>
    %11 = vector.multi_reduction <add>, %10, %cst_7 [0] : vector<512x128xf32> to vector<128xf32>
    %12 = vector.shape_cast %11 : vector<128xf32> to vector<1x128xf32>
    %cst_8 = arith.constant 0.001953125 : f32
    %13 = vector.broadcast %cst_8 : f32 to vector<1x128xf32>
    %14 = arith.mulf %12, %13 : vector<1x128xf32>
    %15 = arith.mulf %9, %9 : vector<1x128xf32>
    %16 = arith.subf %14, %15 : vector<1x128xf32>
    %cst_9 = arith.constant 0.000000e+00 : f32
    %17 = vector.broadcast %cst_9 : f32 to vector<1x128xf32>
    %18 = arith.maximumf %16, %17 : vector<1x128xf32>
    %19 = vector.broadcast %9 : vector<1x128xf32> to vector<512x128xf32>
    %20 = arith.subf %5, %19 : vector<512x128xf32>
    %cst_10 = arith.constant 9.99999974E-6 : f32
    %21 = vector.broadcast %cst_10 : f32 to vector<1x128xf32>
    %22 = arith.addf %18, %21 : vector<1x128xf32>
    %23 = math.rsqrt %22 : vector<1x128xf32>
    %24 = vector.broadcast %23 : vector<1x128xf32> to vector<512x128xf32>
    %25 = arith.mulf %20, %24 : vector<512x128xf32>
    %cst_11 = arith.constant 2.000000e+01 : f32
    %26 = vector.broadcast %cst_11 : f32 to vector<512x128xf32>
    %27 = arith.minimumf %25, %26 : vector<512x128xf32>
    %28 = math.exp %27 : vector<512x128xf32>
    %cst_12 = arith.constant 1.000000e+00 : f32
    %29 = vector.broadcast %cst_12 : f32 to vector<512x128xf32>
    %30 = arith.addf %29, %28 : vector<512x128xf32>
    %31 = arith.mulf %30, %30 : vector<512x128xf32>
    %cst_13 = arith.constant 1.000000e+00 : f32
    %32 = vector.broadcast %cst_13 : f32 to vector<512x128xf32>
    %33 = arith.subf %31, %32 : vector<512x128xf32>
    %34 = arith.mulf %25, %33 : vector<512x128xf32>
    %cst_14 = arith.constant 1.000000e+00 : f32
    %35 = vector.broadcast %cst_14 : f32 to vector<512x128xf32>
    %36 = arith.addf %31, %35 : vector<512x128xf32>
    %37 = tpu.reciprocal %36 {approx = true} : vector<512x128xf32> -> vector<512x128xf32>
    %38 = arith.mulf %34, %37 : vector<512x128xf32>
    %c0_15 = arith.constant 0 : index
    %c0_16 = arith.constant 0 : index
    %39 = vector.load %arg3[%c0_15, %c0_16] : memref<512x9xf32, #tpu.memory_space<vmem>>, vector<512x1xf32>
    %cst_17 = arith.constant 0.000000e+00 : f32
    %40 = vector.broadcast %cst_17 : f32 to vector<512x1xf32>
    %41 = arith.cmpf ogt, %39, %40 : vector<512x1xf32>
    %c17_i32 = arith.constant 17 : i32
    %42 = tpu.dynamic_rotate %38 by %c17_i32 dim 0 : vector<512x128xf32>, i32 -> vector<512x128xf32>
    %cst_18 = arith.constant -1.000000e+30 : f32
    %43 = vector.shape_cast %41 : vector<512x1xi1> to vector<512x1xi1>
    %44 = vector.broadcast %43 : vector<512x1xi1> to vector<512x128xi1>
    %45 = vector.broadcast %cst_18 : f32 to vector<512x128xf32>
    %46 = arith.select %44, %42, %45 : vector<512x128xi1>, vector<512x128xf32>
    %c0_19 = arith.constant 0 : index
    %c1 = arith.constant 1 : index
    %47 = vector.load %arg3[%c0_19, %c1] : memref<512x9xf32, #tpu.memory_space<vmem>>, vector<512x1xf32>
    %cst_20 = arith.constant 0.000000e+00 : f32
    %48 = vector.broadcast %cst_20 : f32 to vector<512x1xf32>
    %49 = arith.cmpf ogt, %47, %48 : vector<512x1xf32>
    %c16_i32 = arith.constant 16 : i32
    %50 = tpu.dynamic_rotate %38 by %c16_i32 dim 0 : vector<512x128xf32>, i32 -> vector<512x128xf32>
    %cst_21 = arith.constant -1.000000e+30 : f32
    %51 = vector.shape_cast %49 : vector<512x1xi1> to vector<512x1xi1>
    %52 = vector.broadcast %51 : vector<512x1xi1> to vector<512x128xi1>
    %53 = vector.broadcast %cst_21 : f32 to vector<512x128xf32>
    %54 = arith.select %52, %50, %53 : vector<512x128xi1>, vector<512x128xf32>
    %55 = arith.maximumf %46, %54 : vector<512x128xf32>
    %c0_22 = arith.constant 0 : index
    %c2 = arith.constant 2 : index
    %56 = vector.load %arg3[%c0_22, %c2] : memref<512x9xf32, #tpu.memory_space<vmem>>, vector<512x1xf32>
    %cst_23 = arith.constant 0.000000e+00 : f32
    %57 = vector.broadcast %cst_23 : f32 to vector<512x1xf32>
    %58 = arith.cmpf ogt, %56, %57 : vector<512x1xf32>
    %c15_i32 = arith.constant 15 : i32
    %59 = tpu.dynamic_rotate %38 by %c15_i32 dim 0 : vector<512x128xf32>, i32 -> vector<512x128xf32>
    %cst_24 = arith.constant -1.000000e+30 : f32
    %60 = vector.shape_cast %58 : vector<512x1xi1> to vector<512x1xi1>
    %61 = vector.broadcast %60 : vector<512x1xi1> to vector<512x128xi1>
    %62 = vector.broadcast %cst_24 : f32 to vector<512x128xf32>
    %63 = arith.select %61, %59, %62 : vector<512x128xi1>, vector<512x128xf32>
    %64 = arith.maximumf %55, %63 : vector<512x128xf32>
    %c0_25 = arith.constant 0 : index
    %c3 = arith.constant 3 : index
    %65 = vector.load %arg3[%c0_25, %c3] : memref<512x9xf32, #tpu.memory_space<vmem>>, vector<512x1xf32>
    %cst_26 = arith.constant 0.000000e+00 : f32
    %66 = vector.broadcast %cst_26 : f32 to vector<512x1xf32>
    %67 = arith.cmpf ogt, %65, %66 : vector<512x1xf32>
    %c1_i32 = arith.constant 1 : i32
    %68 = tpu.dynamic_rotate %38 by %c1_i32 dim 0 : vector<512x128xf32>, i32 -> vector<512x128xf32>
    %cst_27 = arith.constant -1.000000e+30 : f32
    %69 = vector.shape_cast %67 : vector<512x1xi1> to vector<512x1xi1>
    %70 = vector.broadcast %69 : vector<512x1xi1> to vector<512x128xi1>
    %71 = vector.broadcast %cst_27 : f32 to vector<512x128xf32>
    %72 = arith.select %70, %68, %71 : vector<512x128xi1>, vector<512x128xf32>
    %73 = arith.maximumf %64, %72 : vector<512x128xf32>
    %c0_28 = arith.constant 0 : index
    %c4 = arith.constant 4 : index
    %74 = vector.load %arg3[%c0_28, %c4] : memref<512x9xf32, #tpu.memory_space<vmem>>, vector<512x1xf32>
    %cst_29 = arith.constant 0.000000e+00 : f32
    %75 = vector.broadcast %cst_29 : f32 to vector<512x1xf32>
    %76 = arith.cmpf ogt, %74, %75 : vector<512x1xf32>
    %c0_i32 = arith.constant 0 : i32
    %77 = tpu.dynamic_rotate %38 by %c0_i32 dim 0 : vector<512x128xf32>, i32 -> vector<512x128xf32>
    %cst_30 = arith.constant -1.000000e+30 : f32
    %78 = vector.shape_cast %76 : vector<512x1xi1> to vector<512x1xi1>
    %79 = vector.broadcast %78 : vector<512x1xi1> to vector<512x128xi1>
    %80 = vector.broadcast %cst_30 : f32 to vector<512x128xf32>
    %81 = arith.select %79, %77, %80 : vector<512x128xi1>, vector<512x128xf32>
    %82 = arith.maximumf %73, %81 : vector<512x128xf32>
    %c0_31 = arith.constant 0 : index
    %c5 = arith.constant 5 : index
    %83 = vector.load %arg3[%c0_31, %c5] : memref<512x9xf32, #tpu.memory_space<vmem>>, vector<512x1xf32>
    %cst_32 = arith.constant 0.000000e+00 : f32
    %84 = vector.broadcast %cst_32 : f32 to vector<512x1xf32>
    %85 = arith.cmpf ogt, %83, %84 : vector<512x1xf32>
    %c511_i32 = arith.constant 511 : i32
    %86 = tpu.dynamic_rotate %38 by %c511_i32 dim 0 : vector<512x128xf32>, i32 -> vector<512x128xf32>
    %cst_33 = arith.constant -1.000000e+30 : f32
    %87 = vector.shape_cast %85 : vector<512x1xi1> to vector<512x1xi1>
    %88 = vector.broadcast %87 : vector<512x1xi1> to vector<512x128xi1>
    %89 = vector.broadcast %cst_33 : f32 to vector<512x128xf32>
    %90 = arith.select %88, %86, %89 : vector<512x128xi1>, vector<512x128xf32>
    %91 = arith.maximumf %82, %90 : vector<512x128xf32>
    %c0_34 = arith.constant 0 : index
    %c6 = arith.constant 6 : index
    %92 = vector.load %arg3[%c0_34, %c6] : memref<512x9xf32, #tpu.memory_space<vmem>>, vector<512x1xf32>
    %cst_35 = arith.constant 0.000000e+00 : f32
    %93 = vector.broadcast %cst_35 : f32 to vector<512x1xf32>
    %94 = arith.cmpf ogt, %92, %93 : vector<512x1xf32>
    %c497_i32 = arith.constant 497 : i32
    %95 = tpu.dynamic_rotate %38 by %c497_i32 dim 0 : vector<512x128xf32>, i32 -> vector<512x128xf32>
    %cst_36 = arith.constant -1.000000e+30 : f32
    %96 = vector.shape_cast %94 : vector<512x1xi1> to vector<512x1xi1>
    %97 = vector.broadcast %96 : vector<512x1xi1> to vector<512x128xi1>
    %98 = vector.broadcast %cst_36 : f32 to vector<512x128xf32>
    %99 = arith.select %97, %95, %98 : vector<512x128xi1>, vector<512x128xf32>
    %100 = arith.maximumf %91, %99 : vector<512x128xf32>
    %c0_37 = arith.constant 0 : index
    %c7 = arith.constant 7 : index
    %101 = vector.load %arg3[%c0_37, %c7] : memref<512x9xf32, #tpu.memory_space<vmem>>, vector<512x1xf32>
    %cst_38 = arith.constant 0.000000e+00 : f32
    %102 = vector.broadcast %cst_38 : f32 to vector<512x1xf32>
    %103 = arith.cmpf ogt, %101, %102 : vector<512x1xf32>
    %c496_i32 = arith.constant 496 : i32
    %104 = tpu.dynamic_rotate %38 by %c496_i32 dim 0 : vector<512x128xf32>, i32 -> vector<512x128xf32>
    %cst_39 = arith.constant -1.000000e+30 : f32
    %105 = vector.shape_cast %103 : vector<512x1xi1> to vector<512x1xi1>
    %106 = vector.broadcast %105 : vector<512x1xi1> to vector<512x128xi1>
    %107 = vector.broadcast %cst_39 : f32 to vector<512x128xf32>
    %108 = arith.select %106, %104, %107 : vector<512x128xi1>, vector<512x128xf32>
    %109 = arith.maximumf %100, %108 : vector<512x128xf32>
    %c0_40 = arith.constant 0 : index
    %c8 = arith.constant 8 : index
    %110 = vector.load %arg3[%c0_40, %c8] : memref<512x9xf32, #tpu.memory_space<vmem>>, vector<512x1xf32>
    %cst_41 = arith.constant 0.000000e+00 : f32
    %111 = vector.broadcast %cst_41 : f32 to vector<512x1xf32>
    %112 = arith.cmpf ogt, %110, %111 : vector<512x1xf32>
    %c495_i32 = arith.constant 495 : i32
    %113 = tpu.dynamic_rotate %38 by %c495_i32 dim 0 : vector<512x128xf32>, i32 -> vector<512x128xf32>
    %cst_42 = arith.constant -1.000000e+30 : f32
    %114 = vector.shape_cast %112 : vector<512x1xi1> to vector<512x1xi1>
    %115 = vector.broadcast %114 : vector<512x1xi1> to vector<512x128xi1>
    %116 = vector.broadcast %cst_42 : f32 to vector<512x128xf32>
    %117 = arith.select %115, %113, %116 : vector<512x128xi1>, vector<512x128xf32>
    %118 = arith.maximumf %109, %117 : vector<512x128xf32>
    %c0_43 = arith.constant 0 : index
    %c0_44 = arith.constant 0 : index
    %119 = vector.load %arg4[%c0_43, %c0_44] : memref<128x512xbf16, #tpu.memory_space<vmem>>, vector<128x512xbf16>
    %120 = arith.truncf %118 : vector<512x128xf32> to vector<512x128xbf16>
    %cst_45 = arith.constant dense<0.000000e+00> : vector<128x128xf32>
    %121 = tpu.matmul %119, %120, %cst_45 {dimension_numbers = #tpu.dot_dimension_numbers<[1], [0], [0], [1], [0, 0, 1, 1], [], []>} : vector<128x512xbf16>, vector<512x128xbf16>, vector<128x128xf32> -> vector<128x128xf32>
    %c0_46 = arith.constant 0 : index
    %c0_47 = arith.constant 0 : index
    %c0_48 = arith.constant 0 : index
    %122 = vector.load %arg5[%c0_46, %c0_47, %c0_48] : memref<1x128x128xf32, #tpu.memory_space<vmem>>, vector<1x128x128xf32>
    %123 = vector.shape_cast %122 : vector<1x128x128xf32> to vector<128x128xf32>
    %124 = vector.shape_cast %121 : vector<128x128xf32> to vector<1x128x128xf32>
    tpu.vector_store %arg5[%c0_46, %c0_47, %c0_48], %124 {strides = array<i32>} : memref<1x128x128xf32, #tpu.memory_space<vmem>>, vector<1x128x128xf32>,
    return
  }
  func.func @transform_0(%arg0: i32) -> (i32, i32, i32) {
    %c0_i32 = arith.constant 0 : i32
    %c0_i32_0 = arith.constant 0 : i32
    %c0_i32_1 = arith.constant 0 : i32
    return %arg0, %c0_i32, %c0_i32_0 : i32, i32, i32
  }
  func.func @transform_1(%arg0: i32) -> (i32, i32, i32) {
    %c0_i32 = arith.constant 0 : i32
    %c0_i32_0 = arith.constant 0 : i32
    %c0_i32_1 = arith.constant 0 : i32
    return %arg0, %c0_i32, %c0_i32_0 : i32, i32, i32
  }
  func.func @transform_2(%arg0: i32) -> (i32, i32) {
    %c0_i32 = arith.constant 0 : i32
    %c0_i32_0 = arith.constant 0 : i32
    %c0_i32_1 = arith.constant 0 : i32
    return %c0_i32, %c0_i32_0 : i32, i32
  }
  func.func @transform_3(%arg0: i32) -> (i32, i32) {
    %c0_i32 = arith.constant 0 : i32
    %c0_i32_0 = arith.constant 0 : i32
    %c0_i32_1 = arith.constant 0 : i32
    return %c0_i32, %c0_i32_0 : i32, i32
  }
  func.func @transform_4(%arg0: i32) -> (i32, i32, i32) {
    %c0_i32 = arith.constant 0 : i32
    %c0_i32_0 = arith.constant 0 : i32
    %c0_i32_1 = arith.constant 0 : i32
    return %arg0, %c0_i32, %c0_i32_0 : i32, i32, i32
  }
}

</mosaic_0001>

<llo_original>
// kernel: tpu_custom_call.1
$region0: #{tpu_custom_call.1}
  #allocation0 [shape = 'u32[]', space=smem, size = 0x4, offset = 0x4, fixed_abs, tag = 'smem constant byte address 0x4 - core index']
  #allocation1 [shape = 'u32[72,128]{1,0:T(1,128)}', space=vmem, size = 0x9000, scoped, tag = 'internal scratch']
  %s0 = inlined_call_operand.vmem [shape: f32[2,512,147], index: 0, kind: input, shape index: {}]
  %s1 = inlined_call_operand.vmem [shape: bf16[2,147,128], index: 1, kind: input, shape index: {}]
  %s2 = inlined_call_operand.vmem [shape: f32[512,9], index: 2, kind: input, shape index: {}]
  %s3 = inlined_call_operand.vmem [shape: bf16[128,512], index: 3, kind: input, shape index: {}]
  %s4 = inlined_call_operand.hbm [shape: f32[2,128,128], index: 4, kind: output, shape index: {}]
  %s5 = sld [smem:[#allocation0]]
  $region49: #{tpu_custom_call.1} parent=0
    _
  %s7 = ssub.s32 1, %s5
  %s8 = scalar_select 0, %s7, %s5
  $region1: #{tpu_custom_call.1} parent=0
    #allocation2 [shape = 'u8[131072]{0}', space=vmem, size = 0x20000, scoped, tag = 'output window, operand 0']
    #allocation3 [shape = 's32[2]{0}', space=sflag, size = 0x8, scoped, tag = 'scoped memory for tpu_custom_call.1']
    %9 = vsyncpa [#allocation3], 0
    %s10 = scalar_lea.sflag [#allocation3], 1
    %11 = vsyncpa %s10, 0
    loop: start=0, step=1, limit=4
    $region2: #{tpu_custom_call.1} parent=1 // loop_pre_header
      _
    $region3: #{tpu_custom_call.1} parent=1 // loop_header
      %s13 = sphi 0, %s17
      %p14 = scmp.ge.s32.totalorder %s13, 4
      %s23 = sphi 0, %s25
      %s26 = sphi 0, %s23
      %s27 = sphi 0, %s26
      %s43 = sphi 0, %s27
      %s49 = sphi 0, %s51
      %s52 = sphi 0, %s49
      %s53 = sphi 0, %s52
      %s69 = sphi 0, %s53
      %s73 = sphi 0, %s73
      %s75 = sphi 0, %s73
      %s76 = sphi 0, %s75
      %s90 = sphi 0, %s76
      %s94 = sphi 0, %s94
      %s96 = sphi 0, %s94
      %s97 = sphi 0, %s96
      %s111 = sphi 0, %s97
      %s117 = sphi 0, %s119
      %s120 = sphi 0, %s117
      %s121 = sphi 0, %s120
      %s137 = sphi 0, %s121
    $region4: #{tpu_custom_call.1} parent=1 // loop_header_branch
      %16 = sbr.rel (%p14) target = $region8
    $region5: #{tpu_custom_call.1} parent=1 // loop_body
      %s18 = ssub.s32 %s13, 1
      %s19 = ssub.s32 %s13, 2
      %s20 = sadd.s32 %s13, 1
      %s21 = ssub.s32 %s13, %s20
      %p22 = scmp.eq.s32.totalorder %s21, 0
      %s24 = sadd.s32 %s23, 1
      %s25 = scalar_select %p22, %s23, %s24
      %p28 = pneg %p22
      %p29 = scmp.eq.s32.totalorder %s13, 1
      %p30 = por %p28, %p29
      %p31 = scmp.ne.s32.totalorder %s23, %s26
      %p32 = scmp.eq.s32.totalorder %s13, 0
      %p33 = por %p31, %p32
      %p34 = scmp.ne.s32.totalorder %s23, %s26
      %p35 = scmp.eq.s32.totalorder %s18, 1
      %p36 = por %p34, %p35
      %p37 = scmp.ne.s32.totalorder %s26, %s27
      %p38 = scmp.eq.s32.totalorder %s18, 0
      %p39 = por %p37, %p38
      %p40 = scmp.ne.s32.totalorder %s26, %s27
      %p41 = scmp.eq.s32.totalorder %s19, 1
      %p42 = por %p40, %p41
      %p44 = scmp.ne.s32.totalorder %s27, %s43
      %p45 = scmp.eq.s32.totalorder %s19, 0
      %p46 = por %p44, %p45
      %s47 = ssub.s32 %s13, %s20
      %p48 = scmp.eq.s32.totalorder %s47, 0
      %s50 = sadd.s32 %s49, 1
      %s51 = scalar_select %p48, %s49, %s50
      %p54 = pneg %p48
      %p55 = scmp.eq.s32.totalorder %s13, 1
      %p56 = por %p54, %p55
      %p57 = scmp.ne.s32.totalorder %s49, %s52
      %p58 = scmp.eq.s32.totalorder %s13, 0
      %p59 = por %p57, %p58
      %p60 = scmp.ne.s32.totalorder %s49, %s52
      %p61 = scmp.eq.s32.totalorder %s18, 1
      %p62 = por %p60, %p61
      %p63 = scmp.ne.s32.totalorder %s52, %s53
      %p64 = scmp.eq.s32.totalorder %s18, 0
      %p65 = por %p63, %p64
      %p66 = scmp.ne.s32.totalorder %s52, %s53
      %p67 = scmp.eq.s32.totalorder %s19, 1
      %p68 = por %p66, %p67
      %p70 = scmp.ne.s32.totalorder %s53, %s69
      %p71 = scmp.eq.s32.totalorder %s19, 0
      %p72 = por %p70, %p71
      %s74 = sadd.s32 %s73, 1
      %p77 = scmp.eq.s32.totalorder %s13, 1
      %p78 = scmp.ne.s32.totalorder %s73, %s75
      %p79 = scmp.eq.s32.totalorder %s13, 0
      %p80 = por %p78, %p79
      %p81 = scmp.ne.s32.totalorder %s73, %s75
      %p82 = scmp.eq.s32.totalorder %s18, 1
      %p83 = por %p81, %p82
      %p84 = scmp.ne.s32.totalorder %s75, %s76
      %p85 = scmp.eq.s32.totalorder %s18, 0
      %p86 = por %p84, %p85
      %p87 = scmp.ne.s32.totalorder %s75, %s76
      %p88 = scmp.eq.s32.totalorder %s19, 1
      %p89 = por %p87, %p88
      %p91 = scmp.ne.s32.totalorder %s76, %s90
      %p92 = scmp.eq.s32.totalorder %s19, 0
      %p93 = por %p91, %p92
      %s95 = sadd.s32 %s94, 1
      %p98 = scmp.eq.s32.totalorder %s13, 1
      %p99 = scmp.ne.s32.totalorder %s94, %s96
      %p100 = scmp.eq.s32.totalorder %s13, 0
      %p101 = por %p99, %p100
      %p102 = scmp.ne.s32.totalorder %s94, %s96
      %p103 = scmp.eq.s32.totalorder %s18, 1
      %p104 = por %p102, %p103
      %p105 = scmp.ne.s32.totalorder %s96, %s97
      %p106 = scmp.eq.s32.totalorder %s18, 0
      %p107 = por %p105, %p106
      %p108 = scmp.ne.s32.totalorder %s96, %s97
      %p109 = scmp.eq.s32.totalorder %s19, 1
      %p110 = por %p108, %p109
      %p112 = scmp.ne.s32.totalorder %s97, %s111
      %p113 = scmp.eq.s32.totalorder %s19, 0
      %p114 = por %p112, %p113
      %s115 = ssub.s32 %s13, %s20
      %p116 = scmp.eq.s32.totalorder %s115, 0
      %s118 = sadd.s32 %s117, 1
      %s119 = scalar_select %p116, %s117, %s118
      %p122 = pneg %p116
      %p123 = scmp.eq.s32.totalorder %s13, 1
      %p124 = por %p122, %p123
      %p125 = scmp.ne.s32.totalorder %s117, %s120
      %p126 = scmp.eq.s32.totalorder %s13, 0
      %p127 = por %p125, %p126
      %p128 = scmp.ne.s32.totalorder %s117, %s120
      %p129 = scmp.eq.s32.totalorder %s18, 1
      %p130 = por %p128, %p129
      %p131 = scmp.ne.s32.totalorder %s120, %s121
      %p132 = scmp.eq.s32.totalorder %s18, 0
      %p133 = por %p131, %p132
      %p134 = scmp.ne.s32.totalorder %s120, %s121
      %p135 = scmp.eq.s32.totalorder %s19, 1
      %p136 = por %p134, %p135
      %p138 = scmp.ne.s32.totalorder %s121, %s137
      %p139 = scmp.eq.s32.totalorder %s19, 0
      %p140 = por %p138, %p139
      %p141 = scmp.le.s32.totalorder 1, %s13
      %p142 = scmp.lt.s32.totalorder %s13, 3
      %p143 = pnand %p141, %p142
      %p144 = pneg %p143
      // Predicated region
      $region9: #{tpu_custom_call.1} parent=5 // pred_check
        _
      $region10: #{tpu_custom_call.1} parent=5 // pred_check_branch
        %146 = sbr.rel (%p143) target = $region12
      $region11: #{tpu_custom_call.1} parent=5 // pred_region
        %s147 = ssub.s32 %s13, 1
        // Predicated region
        $region13: #{tpu_custom_call.1} parent=11 // pred_check
          %p148 = pneg %p86
        $region14: #{tpu_custom_call.1} parent=11 // pred_check_branch
          %150 = sbr.rel (%p148) target = $region16
        $region15: #{tpu_custom_call.1} parent=11 // pred_region
          _
        $region16: #{tpu_custom_call.1} parent=11 // pred_fallthru
          _
        // Predicated region
        $region17: #{tpu_custom_call.1} parent=11 // pred_check
          %p151 = pneg %p107
        $region18: #{tpu_custom_call.1} parent=11 // pred_check_branch
          %153 = sbr.rel (%p151) target = $region20
        $region19: #{tpu_custom_call.1} parent=11 // pred_region
          _
        $region20: #{tpu_custom_call.1} parent=11 // pred_fallthru
          _
      $region12: #{tpu_custom_call.1} parent=5 // pred_fallthru
        _
      %p154 = scmp.lt.s32.totalorder %s13, 2
      // Predicated region
      $region21: #{tpu_custom_call.1} parent=5 // pred_check
        %p155 = pneg %p154
      $region22: #{tpu_custom_call.1} parent=5 // pred_check_branch
        %157 = sbr.rel (%p155) target = $region24
      $region23: #{tpu_custom_call.1} parent=5 // pred_region
        // Predicated region
        $region25: #{tpu_custom_call.1} parent=23 // pred_check
          %p158 = pneg %p33
        $region26: #{tpu_custom_call.1} parent=23 // pred_check_branch
          %160 = sbr.rel (%p158) target = $region28
        $region27: #{tpu_custom_call.1} parent=23 // pred_region
          %p161 = scmp.lt.s32.totalorder %s13, 1
          %s162 = scalar_select %p161, %s13, 1
          %s163 = smul.addr %s162, 128
          %s164 = smul.addr %s163, 8
          %s165 = scalar_lea.vmem %s0, %s164
        $region28: #{tpu_custom_call.1} parent=23 // pred_fallthru
          _
        // Predicated region
        $region29: #{tpu_custom_call.1} parent=23 // pred_check
          %p166 = pneg %p59
        $region30: #{tpu_custom_call.1} parent=23 // pred_check_branch
          %168 = sbr.rel (%p166) target = $region32
        $region31: #{tpu_custom_call.1} parent=23 // pred_region
          %p169 = scmp.lt.s32.totalorder %s13, 1
          %s170 = scalar_select %p169, %s13, 1
          %s171 = smul.addr %s170, 19
          %s172 = smul.addr %s171, 4
          %s173 = scalar_lea.vmem %s1, %s172
        $region32: #{tpu_custom_call.1} parent=23 // pred_fallthru
          _
      $region24: #{tpu_custom_call.1} parent=5 // pred_fallthru
        _
      %p174 = scmp.le.s32.totalorder 1, %s13
      %p175 = scmp.lt.s32.totalorder %s13, 3
      %p176 = pnand %p174, %p175
      %p177 = pneg %p176
      // Predicated region
      $region33: #{tpu_custom_call.1} parent=5 // pred_check
        _
      $region34: #{tpu_custom_call.1} parent=5 // pred_check_branch
        %179 = sbr.rel (%p176) target = $region36
      $region35: #{tpu_custom_call.1} parent=5 // pred_region
        %s180 = ssub.s32 %s13, 1
        %p181 = scmp.lt.s32.totalorder %s18, 1
        %s182 = scalar_select %p181, %s18, 1
        %s183 = smul.addr %s182, 128
        %s184 = smul.addr %s183, 8
        %s185 = scalar_lea.vmem %s0, %s184
        %p186 = pneg %p39
        %p187 = pneg %p36
        %p188 = scmp.lt.s32.totalorder %s18, 1
        %s189 = scalar_select %p188, %s18, 1
        %s190 = smul.addr %s189, 19
        %s191 = smul.addr %s190, 4
        %s192 = scalar_lea.vmem %s1, %s191
        %p193 = pneg %p65
        %p194 = pneg %p62
        %p195 = pneg %p86
        %p196 = pneg %p83
        %p197 = pneg %p107
        %p198 = pneg %p104
        %p199 = pneg %p133
        %p200 = pneg %p130
        %s201 = sand.u32 %s120, 1
        %s202 = scalar_lea.sflag [#allocation3], %s201
        %s203 = sand.u32 %s120, 1
        %s204 = smul.addr %s203, 128
        %s205 = scalar_lea.vmem [#allocation2], %s204
        %p206 = scmp.lt.s32.totalorder %s18, 1
        %s207 = scalar_select %p206, %s18, 1
        %s208 = smul.addr %s207, 128
        %s209 = smul.addr %s208, 8
        %s210 = scalar_lea.vmem %s0, %s209
        %p211 = scmp.lt.s32.totalorder %s18, 1
        %s212 = scalar_select %p211, %s18, 1
        %s213 = smul.addr %s212, 19
        %s214 = smul.addr %s213, 4
        %s215 = scalar_lea.vmem %s1, %s214
        %v217 = vld [vmem:[%s210] sm:$0xff]
        %v218 = vld [vmem:[%s210 + $0x8] sm:$0xff]
        %v219 = vld [vmem:[%s210 + $0x10] sm:$0xff]
        %v220 = vld [vmem:[%s210 + $0x18] sm:$0xff]
        %v221 = vld [vmem:[%s210 + $0x20] sm:$0xff]
        %v222 = vld [vmem:[%s210 + $0x28] sm:$0xff]
        %v223 = vld [vmem:[%s210 + $0x30] sm:$0xff]
        %v224 = vld [vmem:[%s210 + $0x38] sm:$0xff]
        %v225 = vld [vmem:[%s210 + $0x40] sm:$0xff]
        %v226 = vld [vmem:[%s210 + $0x48] sm:$0xff]
        %v227 = vld [vmem:[%s210 + $0x50] sm:$0xff]
        %v228 = vld [vmem:[%s210 + $0x58] sm:$0xff]
        %v229 = vld [vmem:[%s210 + $0x60] sm:$0xff]
        %v230 = vld [vmem:[%s210 + $0x68] sm:$0xff]
        %v231 = vld [vmem:[%s210 + $0x70] sm:$0xff]
        %v232 = vld [vmem:[%s210 + $0x78] sm:$0xff]
        %v233 = vld [vmem:[%s210 + $0x80] sm:$0xff]
        %v234 = vld [vmem:[%s210 + $0x88] sm:$0xff]
        %v235 = vld [vmem:[%s210 + $0x90] sm:$0xff]
        %v236 = vld [vmem:[%s210 + $0x98] sm:$0xff]
        %v237 = vld [vmem:[%s210 + $0xa0] sm:$0xff]
        %v238 = vld [vmem:[%s210 + $0xa8] sm:$0xff]
        %v239 = vld [vmem:[%s210 + $0xb0] sm:$0xff]
        %v240 = vld [vmem:[%s210 + $0xb8] sm:$0xff]
        %v241 = vld [vmem:[%s210 + $0xc0] sm:$0xff]
        %v242 = vld [vmem:[%s210 + $0xc8] sm:$0xff]
        %v243 = vld [vmem:[%s210 + $0xd0] sm:$0xff]
        %v244 = vld [vmem:[%s210 + $0xd8] sm:$0xff]
        %v245 = vld [vmem:[%s210 + $0xe0] sm:$0xff]
        %v246 = vld [vmem:[%s210 + $0xe8] sm:$0xff]
        %v247 = vld [vmem:[%s210 + $0xf0] sm:$0xff]
        %v248 = vld [vmem:[%s210 + $0xf8] sm:$0xff]
        %v249 = vld [vmem:[%s210 + $0x100] sm:$0xff]
        %v250 = vld [vmem:[%s210 + $0x108] sm:$0xff]
        %v251 = vld [vmem:[%s210 + $0x110] sm:$0xff]
        %v252 = vld [vmem:[%s210 + $0x118] sm:$0xff]
        %v253 = vld [vmem:[%s210 + $0x120] sm:$0xff]
        %v254 = vld [vmem:[%s210 + $0x128] sm:$0xff]
        %v255 = vld [vmem:[%s210 + $0x130] sm:$0xff]
        %v256 = vld [vmem:[%s210 + $0x138] sm:$0xff]
        %v257 = vld [vmem:[%s210 + $0x140] sm:$0xff]
        %v258 = vld [vmem:[%s210 + $0x148] sm:$0xff]
        %v259 = vld [vmem:[%s210 + $0x150] sm:$0xff]
        %v260 = vld [vmem:[%s210 + $0x158] sm:$0xff]
        %v261 = vld [vmem:[%s210 + $0x160] sm:$0xff]
        %v262 = vld [vmem:[%s210 + $0x168] sm:$0xff]
        %v263 = vld [vmem:[%s210 + $0x170] sm:$0xff]
        %v264 = vld [vmem:[%s210 + $0x178] sm:$0xff]
        %v265 = vld [vmem:[%s210 + $0x180] sm:$0xff]
        %v266 = vld [vmem:[%s210 + $0x188] sm:$0xff]
        %v267 = vld [vmem:[%s210 + $0x190] sm:$0xff]
        %v268 = vld [vmem:[%s210 + $0x198] sm:$0xff]
        %v269 = vld [vmem:[%s210 + $0x1a0] sm:$0xff]
        %v270 = vld [vmem:[%s210 + $0x1a8] sm:$0xff]
        %v271 = vld [vmem:[%s210 + $0x1b0] sm:$0xff]
        %v272 = vld [vmem:[%s210 + $0x1b8] sm:$0xff]
        %v273 = vld [vmem:[%s210 + $0x1c0] sm:$0xff]
        %v274 = vld [vmem:[%s210 + $0x1c8] sm:$0xff]
        %v275 = vld [vmem:[%s210 + $0x1d0] sm:$0xff]
        %v276 = vld [vmem:[%s210 + $0x1d8] sm:$0xff]
        %v277 = vld [vmem:[%s210 + $0x1e0] sm:$0xff]
        %v278 = vld [vmem:[%s210 + $0x1e8] sm:$0xff]
        %v279 = vld [vmem:[%s210 + $0x1f0] sm:$0xff]
        %v280 = vld [vmem:[%s210 + $0x1f8] sm:$0xff]
        %v281 = vld [vmem:[%s210 + $0x200] sm:$0xff]
        %v282 = vld [vmem:[%s210 + $0x208] sm:$0xff]
        %v283 = vld [vmem:[%s210 + $0x210] sm:$0xff]
        %v284 = vld [vmem:[%s210 + $0x218] sm:$0xff]
        %v285 = vld [vmem:[%s210 + $0x220] sm:$0xff]
        %v286 = vld [vmem:[%s210 + $0x228] sm:$0xff]
        %v287 = vld [vmem:[%s210 + $0x230] sm:$0xff]
        %v288 = vld [vmem:[%s210 + $0x238] sm:$0xff]
        %v289 = vld [vmem:[%s210 + $0x240] sm:$0xff]
        %v290 = vld [vmem:[%s210 + $0x248] sm:$0xff]
        %v291 = vld [vmem:[%s210 + $0x250] sm:$0xff]
        %v292 = vld [vmem:[%s210 + $0x258] sm:$0xff]
        %v293 = vld [vmem:[%s210 + $0x260] sm:$0xff]
        %v294 = vld [vmem:[%s210 + $0x268] sm:$0xff]
        %v295 = vld [vmem:[%s210 + $0x270] sm:$0xff]
        %v296 = vld [vmem:[%s210 + $0x278] sm:$0xff]
        %v297 = vld [vmem:[%s210 + $0x280] sm:$0xff]
        %v298 = vld [vmem:[%s210 + $0x288] sm:$0xff]
        %v299 = vld [vmem:[%s210 + $0x290] sm:$0xff]
        %v300 = vld [vmem:[%s210 + $0x298] sm:$0xff]
        %v301 = vld [vmem:[%s210 + $0x2a0] sm:$0xff]
        %v302 = vld [vmem:[%s210 + $0x2a8] sm:$0xff]
        %v303 = vld [vmem:[%s210 + $0x2b0] sm:$0xff]
        %v304 = vld [vmem:[%s210 + $0x2b8] sm:$0xff]
        %v305 = vld [vmem:[%s210 + $0x2c0] sm:$0xff]
        %v306 = vld [vmem:[%s210 + $0x2c8] sm:$0xff]
        %v307 = vld [vmem:[%s210 + $0x2d0] sm:$0xff]
        %v308 = vld [vmem:[%s210 + $0x2d8] sm:$0xff]
        %v309 = vld [vmem:[%s210 + $0x2e0] sm:$0xff]
        %v310 = vld [vmem:[%s210 + $0x2e8] sm:$0xff]
        %v311 = vld [vmem:[%s210 + $0x2f0] sm:$0xff]
        %v312 = vld [vmem:[%s210 + $0x2f8] sm:$0xff]
        %v313 = vld [vmem:[%s210 + $0x300] sm:$0xff]
        %v314 = vld [vmem:[%s210 + $0x308] sm:$0xff]
        %v315 = vld [vmem:[%s210 + $0x310] sm:$0xff]
        %v316 = vld [vmem:[%s210 + $0x318] sm:$0xff]
        %v317 = vld [vmem:[%s210 + $0x320] sm:$0xff]
        %v318 = vld [vmem:[%s210 + $0x328] sm:$0xff]
        %v319 = vld [vmem:[%s210 + $0x330] sm:$0xff]
        %v320 = vld [vmem:[%s210 + $0x338] sm:$0xff]
        %v321 = vld [vmem:[%s210 + $0x340] sm:$0xff]
        %v322 = vld [vmem:[%s210 + $0x348] sm:$0xff]
        %v323 = vld [vmem:[%s210 + $0x350] sm:$0xff]
        %v324 = vld [vmem:[%s210 + $0x358] sm:$0xff]
        %v325 = vld [vmem:[%s210 + $0x360] sm:$0xff]
        %v326 = vld [vmem:[%s210 + $0x368] sm:$0xff]
        %v327 = vld [vmem:[%s210 + $0x370] sm:$0xff]
        %v328 = vld [vmem:[%s210 + $0x378] sm:$0xff]
        %v329 = vld [vmem:[%s210 + $0x380] sm:$0xff]
        %v330 = vld [vmem:[%s210 + $0x388] sm:$0xff]
        %v331 = vld [vmem:[%s210 + $0x390] sm:$0xff]
        %v332 = vld [vmem:[%s210 + $0x398] sm:$0xff]
        %v333 = vld [vmem:[%s210 + $0x3a0] sm:$0xff]
        %v334 = vld [vmem:[%s210 + $0x3a8] sm:$0xff]
        %v335 = vld [vmem:[%s210 + $0x3b0] sm:$0xff]
        %v336 = vld [vmem:[%s210 + $0x3b8] sm:$0xff]
        %v337 = vld [vmem:[%s210 + $0x3c0] sm:$0xff]
        %v338 = vld [vmem:[%s210 + $0x3c8] sm:$0xff]
        %v339 = vld [vmem:[%s210 + $0x3d0] sm:$0xff]
        %v340 = vld [vmem:[%s210 + $0x3d8] sm:$0xff]
        %v341 = vld [vmem:[%s210 + $0x3e0] sm:$0xff]
        %v342 = vld [vmem:[%s210 + $0x3e8] sm:$0xff]
        %v343 = vld [vmem:[%s210 + $0x3f0] sm:$0xff]
        %v344 = vld [vmem:[%s210 + $0x3f8] sm:$0xff]
        %v345 = vld [vmem:[%s215] sm:$0xf]
        %v346 = vld [vmem:[%s215 + $0x4] sm:$0xf]
        %v347 = vld [vmem:[%s215 + $0x8] sm:$0xf]
        %v348 = vld [vmem:[%s215 + $0xc] sm:$0xf]
        %v349 = vld [vmem:[%s215 + $0x10] sm:$0xf]
        %v350 = vld [vmem:[%s215 + $0x14] sm:$0xf]
        %v351 = vld [vmem:[%s215 + $0x18] sm:$0xf]
        %v352 = vld [vmem:[%s215 + $0x1c] sm:$0xf]
        %v353 = vld [vmem:[%s215 + $0x20] sm:$0xf]
        %v354 = vld [vmem:[%s215 + $0x24] sm:$0xf]
        %v355 = vld [vmem:[%s215 + $0x28] sm:$0xf]
        %v356 = vld [vmem:[%s215 + $0x2c] sm:$0xf]
        %v357 = vld [vmem:[%s215 + $0x30] sm:$0xf]
        %v358 = vld [vmem:[%s215 + $0x34] sm:$0xf]
        %v359 = vld [vmem:[%s215 + $0x38] sm:$0xf]
        %v360 = vld [vmem:[%s215 + $0x3c] sm:$0xf]
        %v361 = vld [vmem:[%s215 + $0x40] sm:$0xf]
        %v362 = vld [vmem:[%s215 + $0x44] sm:$0xf]
        %v363 = vld [vmem:[%s215 + $0x48] sm:$0x3]
        %v364 = vpack.c.bf16 %v219, %v217
        %v365 = vpack.c.bf16 %v220, %v218
        %v366 = vpack.c.bf16 %v223, %v221
        %v367 = vpack.c.bf16 %v224, %v222
        %v368 = vpack.c.bf16 %v227, %v225
        %v369 = vpack.c.bf16 %v228, %v226
        %v370 = vpack.c.bf16 %v231, %v229
        %v371 = vpack.c.bf16 %v232, %v230
        %v372 = vpack.c.bf16 %v235, %v233
        %v373 = vpack.c.bf16 %v236, %v234
        %v374 = vpack.c.bf16 %v239, %v237
        %v375 = vpack.c.bf16 %v240, %v238
        %v376 = vpack.c.bf16 %v243, %v241
        %v377 = vpack.c.bf16 %v244, %v242
        %v378 = vpack.c.bf16 %v247, %v245
        %v379 = vpack.c.bf16 %v248, %v246
        %v380 = vpack.c.bf16 %v251, %v249
        %v381 = vpack.c.bf16 %v252, %v250
        %v382 = vpack.c.bf16 %v255, %v253
        %v383 = vpack.c.bf16 %v256, %v254
        %v384 = vpack.c.bf16 %v259, %v257
        %v385 = vpack.c.bf16 %v260, %v258
        %v386 = vpack.c.bf16 %v263, %v261
        %v387 = vpack.c.bf16 %v264, %v262
        %v388 = vpack.c.bf16 %v267, %v265
        %v389 = vpack.c.bf16 %v268, %v266
        %v390 = vpack.c.bf16 %v271, %v269
        %v391 = vpack.c.bf16 %v272, %v270
        %v392 = vpack.c.bf16 %v275, %v273
        %v393 = vpack.c.bf16 %v276, %v274
        %v394 = vpack.c.bf16 %v279, %v277
        %v395 = vpack.c.bf16 %v280, %v278
        %v396 = vpack.c.bf16 %v283, %v281
        %v397 = vpack.c.bf16 %v284, %v282
        %v398 = vpack.c.bf16 %v287, %v285
        %v399 = vpack.c.bf16 %v288, %v286
        %v400 = vpack.c.bf16 %v291, %v289
        %v401 = vpack.c.bf16 %v292, %v290
        %v402 = vpack.c.bf16 %v295, %v293
        %v403 = vpack.c.bf16 %v296, %v294
        %v404 = vpack.c.bf16 %v299, %v297
        %v405 = vpack.c.bf16 %v300, %v298
        %v406 = vpack.c.bf16 %v303, %v301
        %v407 = vpack.c.bf16 %v304, %v302
        %v408 = vpack.c.bf16 %v307, %v305
        %v409 = vpack.c.bf16 %v308, %v306
        %v410 = vpack.c.bf16 %v311, %v309
        %v411 = vpack.c.bf16 %v312, %v310
        %v412 = vpack.c.bf16 %v315, %v313
        %v413 = vpack.c.bf16 %v316, %v314
        %v414 = vpack.c.bf16 %v319, %v317
        %v415 = vpack.c.bf16 %v320, %v318
        %v416 = vpack.c.bf16 %v323, %v321
        %v417 = vpack.c.bf16 %v324, %v322
        %v418 = vpack.c.bf16 %v327, %v325
        %v419 = vpack.c.bf16 %v328, %v326
        %v420 = vpack.c.bf16 %v331, %v329
        %v421 = vpack.c.bf16 %v332, %v330
        %v422 = vpack.c.bf16 %v335, %v333
        %v423 = vpack.c.bf16 %v336, %v334
        %v424 = vpack.c.bf16 %v339, %v337
        %v425 = vpack.c.bf16 %v340, %v338
        %v426 = vpack.c.bf16 %v343, %v341
        %v427 = vpack.c.bf16 %v344, %v342
        %v447 = vunpack.c.l.b16 %v345
        %v448 = vunpack.c.l.b16 %v346
        %v449 = vunpack.c.l.b16 %v347
        %v450 = vunpack.c.l.b16 %v348
        %v451 = vunpack.c.l.b16 %v349
        %v452 = vunpack.c.l.b16 %v350
        %v453 = vunpack.c.l.b16 %v351
        %v454 = vunpack.c.l.b16 %v352
        %v455 = vunpack.c.l.b16 %v353
        %v456 = vunpack.c.l.b16 %v354
        %v457 = vunpack.c.l.b16 %v355
        %v458 = vunpack.c.l.b16 %v356
        %v459 = vunpack.c.l.b16 %v357
        %v460 = vunpack.c.l.b16 %v358
        %v461 = vunpack.c.l.b16 %v359
        %v462 = vunpack.c.l.b16 %v360
        %v463 = vunpack.c.l.b16 %v361
        %v464 = vunpack.c.l.b16 %v362
        %v465 = vunpack.c.l.b16 %v363
        %v466 = vpack.c.b16 %v448, %v447
        %v467 = vpack.c.b16 %v450, %v449
        %v468 = vpack.c.b16 %v452, %v451
        %v469 = vpack.c.b16 %v454, %v453
        %v470 = vpack.c.b16 %v456, %v455
        %v471 = vpack.c.b16 %v458, %v457
        %v472 = vpack.c.b16 %v460, %v459
        %v473 = vpack.c.b16 %v462, %v461
        %v474 = vpack.c.b16 %v464, %v463
        %v475 = vpack.c.b16 %v465, %v465
        %vm485 = vcmask 154624
        %v487 = vsel %vm485, %v365, 0
        %v490 = vsel %vm485, %v367, 0
        %v493 = vsel %vm485, %v369, 0
        %v496 = vsel %vm485, %v371, 0
        %v499 = vsel %vm485, %v373, 0
        %v502 = vsel %vm485, %v375, 0
        %v505 = vsel %vm485, %v377, 0
        %v508 = vsel %vm485, %v379, 0
        %v511 = vsel %vm485, %v381, 0
        %v514 = vsel %vm485, %v383, 0
        %v517 = vsel %vm485, %v385, 0
        %v520 = vsel %vm485, %v387, 0
        %v523 = vsel %vm485, %v389, 0
        %v526 = vsel %vm485, %v391, 0
        %v529 = vsel %vm485, %v393, 0
        %v532 = vsel %vm485, %v395, 0
        %v535 = vsel %vm485, %v397, 0
        %v538 = vsel %vm485, %v399, 0
        %v541 = vsel %vm485, %v401, 0
        %v544 = vsel %vm485, %v403, 0
        %v547 = vsel %vm485, %v405, 0
        %v550 = vsel %vm485, %v407, 0
        %v553 = vsel %vm485, %v409, 0
        %v556 = vsel %vm485, %v411, 0
        %v559 = vsel %vm485, %v413, 0
        %v562 = vsel %vm485, %v415, 0
        %v565 = vsel %vm485, %v417, 0
        %v568 = vsel %vm485, %v419, 0
        %v571 = vsel %vm485, %v421, 0
        %v574 = vsel %vm485, %v423, 0
        %v577 = vsel %vm485, %v425, 0
        %v580 = vsel %vm485, %v427, 0
        %vm582 = vcmask 1040384
        %vm583 = vcmask 1041408
        %v584 = vsel %vm582, 4294967295, 65535
        %v585 = vsel %vm583, %v584, 0
        %v587 = vand.u32 %v475, %v585
        %589 = vmatpush.bf16.msra.mxu0 %v473
        %590 = vmatpush.bf16.msra.mxu0 %v472
        %591 = vmatpush.bf16.msra.mxu0 %v471
        %592 = vmatpush.bf16.msra.mxu0 %v470
        %593 = vmatpush.bf16.msra.mxu0 %v469
        %594 = vmatpush.bf16.msra.mxu0 %v468
        %595 = vmatpush.bf16.msra.mxu0 %v467
        %596 = vmatpush.bf16.msra.mxu0 %v466
        %597 = vmatmul.bf16.gmra.mxu0 %v364
        %v598 = vpop.f32.mrf.mxu0
        %v599 = vadd.f32 0.0, %v598
        %v600 = vpop.f32.mrf.mxu0
        %v601 = vadd.f32 0.0, %v600
        %602 = vmatmul.bf16.gmra.mxu0 %v366
        %v603 = vpop.f32.mrf.mxu0
        %v604 = vadd.f32 0.0, %v603
        %v605 = vpop.f32.mrf.mxu0
        %v606 = vadd.f32 0.0, %v605
        %607 = vmatmul.bf16.gmra.mxu0 %v368
        %v608 = vpop.f32.mrf.mxu0
        %v609 = vadd.f32 0.0, %v608
        %v610 = vpop.f32.mrf.mxu0
        %v611 = vadd.f32 0.0, %v610
        %612 = vmatmul.bf16.gmra.mxu0 %v370
        %v613 = vpop.f32.mrf.mxu0
        %v614 = vadd.f32 0.0, %v613
        %v615 = vpop.f32.mrf.mxu0
        %v616 = vadd.f32 0.0, %v615
        %617 = vmatmul.bf16.gmra.mxu0 %v372
        %v618 = vpop.f32.mrf.mxu0
        %v619 = vadd.f32 0.0, %v618
        %v620 = vpop.f32.mrf.mxu0
        %v621 = vadd.f32 0.0, %v620
        %622 = vmatmul.bf16.gmra.mxu0 %v374
        %v623 = vpop.f32.mrf.mxu0
        %v624 = vadd.f32 0.0, %v623
        %v625 = vpop.f32.mrf.mxu0
        %v626 = vadd.f32 0.0, %v625
        %627 = vmatmul.bf16.gmra.mxu0 %v376
        %v628 = vpop.f32.mrf.mxu0
        %v629 = vadd.f32 0.0, %v628
        %v630 = vpop.f32.mrf.mxu0
        %v631 = vadd.f32 0.0, %v630
        %632 = vmatmul.bf16.gmra.mxu0 %v378
        %v633 = vpop.f32.mrf.mxu0
        %v634 = vadd.f32 0.0, %v633
        %v635 = vpop.f32.mrf.mxu0
        %v636 = vadd.f32 0.0, %v635
        %637 = vmatmul.bf16.gmra.mxu0 %v380
        %v638 = vpop.f32.mrf.mxu0
        %v639 = vadd.f32 0.0, %v638
        %v640 = vpop.f32.mrf.mxu0
        %v641 = vadd.f32 0.0, %v640
        %642 = vmatmul.bf16.gmra.mxu0 %v382
        %v643 = vpop.f32.mrf.mxu0
        %v644 = vadd.f32 0.0, %v643
        %v645 = vpop.f32.mrf.mxu0
        %v646 = vadd.f32 0.0, %v645
        %647 = vmatmul.bf16.gmra.mxu0 %v384
        %v648 = vpop.f32.mrf.mxu0
        %v649 = vadd.f32 0.0, %v648
        %v650 = vpop.f32.mrf.mxu0
        %v651 = vadd.f32 0.0, %v650
        %652 = vmatmul.bf16.gmra.mxu0 %v386
        %v653 = vpop.f32.mrf.mxu0
        %v654 = vadd.f32 0.0, %v653
        %v655 = vpop.f32.mrf.mxu0
        %v656 = vadd.f32 0.0, %v655
        %657 = vmatmul.bf16.gmra.mxu0 %v388
        %v658 = vpop.f32.mrf.mxu0
        %v659 = vadd.f32 0.0, %v658
        %v660 = vpop.f32.mrf.mxu0
        %v661 = vadd.f32 0.0, %v660
        %662 = vmatmul.bf16.gmra.mxu0 %v390
        %v663 = vpop.f32.mrf.mxu0
        %v664 = vadd.f32 0.0, %v663
        %v665 = vpop.f32.mrf.mxu0
        %v666 = vadd.f32 0.0, %v665
        %667 = vmatmul.bf16.gmra.mxu0 %v392
        %v668 = vpop.f32.mrf.mxu0
        %v669 = vadd.f32 0.0, %v668
        %v670 = vpop.f32.mrf.mxu0
        %v671 = vadd.f32 0.0, %v670
        %672 = vmatmul.bf16.gmra.mxu0 %v394
        %v673 = vpop.f32.mrf.mxu0
        %v674 = vadd.f32 0.0, %v673
        %v675 = vpop.f32.mrf.mxu0
        %v676 = vadd.f32 0.0, %v675
        %677 = vmatmul.bf16.gmra.mxu0 %v396
        %v678 = vpop.f32.mrf.mxu0
        %v679 = vadd.f32 0.0, %v678
        %v680 = vpop.f32.mrf.mxu0
        %v681 = vadd.f32 0.0, %v680
        %682 = vmatmul.bf16.gmra.mxu0 %v398
        %v683 = vpop.f32.mrf.mxu0
        %v684 = vadd.f32 0.0, %v683
        %v685 = vpop.f32.mrf.mxu0
        %v686 = vadd.f32 0.0, %v685
        %687 = vmatmul.bf16.gmra.mxu0 %v400
        %v688 = vpop.f32.mrf.mxu0
        %v689 = vadd.f32 0.0, %v688
        %v690 = vpop.f32.mrf.mxu0
        %v691 = vadd.f32 0.0, %v690
        %692 = vmatmul.bf16.gmra.mxu0 %v402
        %v693 = vpop.f32.mrf.mxu0
        %v694 = vadd.f32 0.0, %v693
        %v695 = vpop.f32.mrf.mxu0
        %v696 = vadd.f32 0.0, %v695
        %697 = vmatmul.bf16.gmra.mxu0 %v404
        %v698 = vpop.f32.mrf.mxu0
        %v699 = vadd.f32 0.0, %v698
        %v700 = vpop.f32.mrf.mxu0
        %v701 = vadd.f32 0.0, %v700
        %702 = vmatmul.bf16.gmra.mxu0 %v406
        %v703 = vpop.f32.mrf.mxu0
        %v704 = vadd.f32 0.0, %v703
        %v705 = vpop.f32.mrf.mxu0
        %v706 = vadd.f32 0.0, %v705
        %707 = vmatmul.bf16.gmra.mxu0 %v408
        %v708 = vpop.f32.mrf.mxu0
        %v709 = vadd.f32 0.0, %v708
        %v710 = vpop.f32.mrf.mxu0
        %v711 = vadd.f32 0.0, %v710
        %712 = vmatmul.bf16.gmra.mxu0 %v410
        %v713 = vpop.f32.mrf.mxu0
        %v714 = vadd.f32 0.0, %v713
        %v715 = vpop.f32.mrf.mxu0
        %v716 = vadd.f32 0.0, %v715
        %717 = vmatmul.bf16.gmra.mxu0 %v412
        %v718 = vpop.f32.mrf.mxu0
        %v719 = vadd.f32 0.0, %v718
        %v720 = vpop.f32.mrf.mxu0
        %v721 = vadd.f32 0.0, %v720
        %722 = vmatmul.bf16.gmra.mxu0 %v414
        %v723 = vpop.f32.mrf.mxu0
        %v724 = vadd.f32 0.0, %v723
        %v725 = vpop.f32.mrf.mxu0
        %v726 = vadd.f32 0.0, %v725
        %727 = vmatmul.bf16.gmra.mxu0 %v416
        %v728 = vpop.f32.mrf.mxu0
        %v729 = vadd.f32 0.0, %v728
        %v730 = vpop.f32.mrf.mxu0
        %v731 = vadd.f32 0.0, %v730
        %732 = vmatmul.bf16.gmra.mxu0 %v418
        %v733 = vpop.f32.mrf.mxu0
        %v734 = vadd.f32 0.0, %v733
        %v735 = vpop.f32.mrf.mxu0
        %v736 = vadd.f32 0.0, %v735
        %737 = vmatmul.bf16.gmra.mxu0 %v420
        %v738 = vpop.f32.mrf.mxu0
        %v739 = vadd.f32 0.0, %v738
        %v740 = vpop.f32.mrf.mxu0
        %v741 = vadd.f32 0.0, %v740
        %742 = vmatmul.bf16.gmra.mxu0 %v422
        %v743 = vpop.f32.mrf.mxu0
        %v744 = vadd.f32 0.0, %v743
        %v745 = vpop.f32.mrf.mxu0
        %v746 = vadd.f32 0.0, %v745
        %747 = vmatmul.bf16.gmra.mxu0 %v424
        %v748 = vpop.f32.mrf.mxu0
        %v749 = vadd.f32 0.0, %v748
        %v750 = vpop.f32.mrf.mxu0
        %v751 = vadd.f32 0.0, %v750
        %752 = vmatmul.bf16.gmra.mxu0 %v426
        %v753 = vpop.f32.mrf.mxu0
        %v754 = vadd.f32 0.0, %v753
        %v755 = vpop.f32.mrf.mxu0
        %v756 = vadd.f32 0.0, %v755
        %757 = vdwg.mxu0
        %758 = vmatpush.bf16.msra.mxu0 0
        %759 = vmatpush.bf16.msra.mxu0 0
        %760 = vmatpush.bf16.msra.mxu0 0
        %761 = vmatpush.bf16.msra.mxu0 0
        %762 = vmatpush.bf16.msra.mxu0 0
        %763 = vmatpush.bf16.msra.mxu0 0
        %764 = vmatpush.bf16.msra.mxu0 %v587
        %765 = vmatpush.bf16.msra.mxu0 %v474
        %766 = vmatmul.bf16.gmra.mxu0 %v487
        %v767 = vpop.f32.mrf.mxu0
        %v768 = vadd.f32 %v599, %v767
        %v769 = vpop.f32.mrf.mxu0
        %v770 = vadd.f32 %v601, %v769
        %771 = vmatmul.bf16.gmra.mxu0 %v490
        %v772 = vpop.f32.mrf.mxu0
        %v773 = vadd.f32 %v604, %v772
        %v774 = vpop.f32.mrf.mxu0
        %v775 = vadd.f32 %v606, %v774
        %776 = vmatmul.bf16.gmra.mxu0 %v493
        %v777 = vpop.f32.mrf.mxu0
        %v778 = vadd.f32 %v609, %v777
        %v779 = vpop.f32.mrf.mxu0
        %v780 = vadd.f32 %v611, %v779
        %781 = vmatmul.bf16.gmra.mxu0 %v496
        %v782 = vpop.f32.mrf.mxu0
        %v783 = vadd.f32 %v614, %v782
        %v784 = vpop.f32.mrf.mxu0
        %v785 = vadd.f32 %v616, %v784
        %786 = vmatmul.bf16.gmra.mxu0 %v499
        %v787 = vpop.f32.mrf.mxu0
        %v788 = vadd.f32 %v619, %v787
        %v789 = vpop.f32.mrf.mxu0
        %v790 = vadd.f32 %v621, %v789
        %791 = vmatmul.bf16.gmra.mxu0 %v502
        %v792 = vpop.f32.mrf.mxu0
        %v793 = vadd.f32 %v624, %v792
        %v794 = vpop.f32.mrf.mxu0
        %v795 = vadd.f32 %v626, %v794
        %796 = vmatmul.bf16.gmra.mxu0 %v505
        %v797 = vpop.f32.mrf.mxu0
        %v798 = vadd.f32 %v629, %v797
        %v799 = vpop.f32.mrf.mxu0
        %v800 = vadd.f32 %v631, %v799
        %801 = vmatmul.bf16.gmra.mxu0 %v508
        %v802 = vpop.f32.mrf.mxu0
        %v803 = vadd.f32 %v634, %v802
        %v804 = vpop.f32.mrf.mxu0
        %v805 = vadd.f32 %v636, %v804
        %806 = vmatmul.bf16.gmra.mxu0 %v511
        %v807 = vpop.f32.mrf.mxu0
        %v808 = vadd.f32 %v639, %v807
        %v809 = vpop.f32.mrf.mxu0
        %v810 = vadd.f32 %v641, %v809
        %811 = vmatmul.bf16.gmra.mxu0 %v514
        %v812 = vpop.f32.mrf.mxu0
        %v813 = vadd.f32 %v644, %v812
        %v814 = vpop.f32.mrf.mxu0
        %v815 = vadd.f32 %v646, %v814
        %816 = vmatmul.bf16.gmra.mxu0 %v517
        %v817 = vpop.f32.mrf.mxu0
        %v818 = vadd.f32 %v649, %v817
        %v819 = vpop.f32.mrf.mxu0
        %v820 = vadd.f32 %v651, %v819
        %821 = vmatmul.bf16.gmra.mxu0 %v520
        %v822 = vpop.f32.mrf.mxu0
        %v823 = vadd.f32 %v654, %v822
        %v824 = vpop.f32.mrf.mxu0
        %v825 = vadd.f32 %v656, %v824
        %826 = vmatmul.bf16.gmra.mxu0 %v523
        %v827 = vpop.f32.mrf.mxu0
        %v828 = vadd.f32 %v659, %v827
        %v829 = vpop.f32.mrf.mxu0
        %v830 = vadd.f32 %v661, %v829
        %831 = vmatmul.bf16.gmra.mxu0 %v526
        %v832 = vpop.f32.mrf.mxu0
        %v833 = vadd.f32 %v664, %v832
        %v834 = vpop.f32.mrf.mxu0
        %v835 = vadd.f32 %v666, %v834
        %836 = vmatmul.bf16.gmra.mxu0 %v529
        %v837 = vpop.f32.mrf.mxu0
        %v838 = vadd.f32 %v669, %v837
        %v839 = vpop.f32.mrf.mxu0
        %v840 = vadd.f32 %v671, %v839
        %841 = vmatmul.bf16.gmra.mxu0 %v532
        %v842 = vpop.f32.mrf.mxu0
        %v843 = vadd.f32 %v674, %v842
        %v844 = vpop.f32.mrf.mxu0
        %v845 = vadd.f32 %v676, %v844
        %846 = vmatmul.bf16.gmra.mxu0 %v535
        %v847 = vpop.f32.mrf.mxu0
        %v848 = vadd.f32 %v679, %v847
        %v849 = vpop.f32.mrf.mxu0
        %v850 = vadd.f32 %v681, %v849
        %851 = vmatmul.bf16.gmra.mxu0 %v538
        %v852 = vpop.f32.mrf.mxu0
        %v853 = vadd.f32 %v684, %v852
        %v854 = vpop.f32.mrf.mxu0
        %v855 = vadd.f32 %v686, %v854
        %856 = vmatmul.bf16.gmra.mxu0 %v541
        %v857 = vpop.f32.mrf.mxu0
        %v858 = vadd.f32 %v689, %v857
        %v859 = vpop.f32.mrf.mxu0
        %v860 = vadd.f32 %v691, %v859
        %861 = vmatmul.bf16.gmra.mxu0 %v544
        %v862 = vpop.f32.mrf.mxu0
        %v863 = vadd.f32 %v694, %v862
        %v864 = vpop.f32.mrf.mxu0
        %v865 = vadd.f32 %v696, %v864
        %866 = vmatmul.bf16.gmra.mxu0 %v547
        %v867 = vpop.f32.mrf.mxu0
        %v868 = vadd.f32 %v699, %v867
        %v869 = vpop.f32.mrf.mxu0
        %v870 = vadd.f32 %v701, %v869
        %871 = vmatmul.bf16.gmra.mxu0 %v550
        %v872 = vpop.f32.mrf.mxu0
        %v873 = vadd.f32 %v704, %v872
        %v874 = vpop.f32.mrf.mxu0
        %v875 = vadd.f32 %v706, %v874
        %876 = vmatmul.bf16.gmra.mxu0 %v553
        %v877 = vpop.f32.mrf.mxu0
        %v878 = vadd.f32 %v709, %v877
        %v879 = vpop.f32.mrf.mxu0
        %v880 = vadd.f32 %v711, %v879
        %881 = vmatmul.bf16.gmra.mxu0 %v556
        %v882 = vpop.f32.mrf.mxu0
        %v883 = vadd.f32 %v714, %v882
        %v884 = vpop.f32.mrf.mxu0
        %v885 = vadd.f32 %v716, %v884
        %886 = vmatmul.bf16.gmra.mxu0 %v559
        %v887 = vpop.f32.mrf.mxu0
        %v888 = vadd.f32 %v719, %v887
        %v889 = vpop.f32.mrf.mxu0
        %v890 = vadd.f32 %v721, %v889
        %891 = vmatmul.bf16.gmra.mxu0 %v562
        %v892 = vpop.f32.mrf.mxu0
        %v893 = vadd.f32 %v724, %v892
        %v894 = vpop.f32.mrf.mxu0
        %v895 = vadd.f32 %v726, %v894
        %896 = vmatmul.bf16.gmra.mxu0 %v565
        %v897 = vpop.f32.mrf.mxu0
        %v898 = vadd.f32 %v729, %v897
        %v899 = vpop.f32.mrf.mxu0
        %v900 = vadd.f32 %v731, %v899
        %901 = vmatmul.bf16.gmra.mxu0 %v568
        %v902 = vpop.f32.mrf.mxu0
        %v903 = vadd.f32 %v734, %v902
        %v904 = vpop.f32.mrf.mxu0
        %v905 = vadd.f32 %v736, %v904
        %906 = vmatmul.bf16.gmra.mxu0 %v571
        %v907 = vpop.f32.mrf.mxu0
        %v908 = vadd.f32 %v739, %v907
        %v909 = vpop.f32.mrf.mxu0
        %v910 = vadd.f32 %v741, %v909
        %911 = vmatmul.bf16.gmra.mxu0 %v574
        %v912 = vpop.f32.mrf.mxu0
        %v913 = vadd.f32 %v744, %v912
        %v914 = vpop.f32.mrf.mxu0
        %v915 = vadd.f32 %v746, %v914
        %916 = vmatmul.bf16.gmra.mxu0 %v577
        %v917 = vpop.f32.mrf.mxu0
        %v918 = vadd.f32 %v749, %v917
        %v919 = vpop.f32.mrf.mxu0
        %v920 = vadd.f32 %v751, %v919
        %921 = vmatmul.bf16.gmra.mxu0 %v580
        %v922 = vpop.f32.mrf.mxu0
        %v923 = vadd.f32 %v754, %v922
        %v924 = vpop.f32.mrf.mxu0
        %v925 = vadd.f32 %v756, %v924
        %926 = vdwg.mxu0
        %v927 = vadd.f32 %v768, %v770
        %v928 = vadd.f32 %v927, %v773
        %v929 = vadd.f32 %v928, %v775
        %v930 = vadd.f32 %v929, %v778
        %v931 = vadd.f32 %v930, %v780
        %v932 = vadd.f32 %v931, %v783
        %v933 = vadd.f32 %v932, %v785
        %v934 = vadd.f32 %v933, %v788
        %v935 = vadd.f32 %v934, %v790
        %v936 = vadd.f32 %v935, %v793
        %v937 = vadd.f32 %v936, %v795
        %v938 = vadd.f32 %v937, %v798
        %v939 = vadd.f32 %v938, %v800
        %v940 = vadd.f32 %v939, %v803
        %v941 = vadd.f32 %v940, %v805
        %v942 = vadd.f32 %v941, %v808
        %v943 = vadd.f32 %v942, %v810
        %v944 = vadd.f32 %v943, %v813
        %v945 = vadd.f32 %v944, %v815
        %v946 = vadd.f32 %v945, %v818
        %v947 = vadd.f32 %v946, %v820
        %v948 = vadd.f32 %v947, %v823
        %v949 = vadd.f32 %v948, %v825
        %v950 = vadd.f32 %v949, %v828
        %v951 = vadd.f32 %v950, %v830
        %v952 = vadd.f32 %v951, %v833
        %v953 = vadd.f32 %v952, %v835
        %v954 = vadd.f32 %v953, %v838
        %v955 = vadd.f32 %v954, %v840
        %v956 = vadd.f32 %v955, %v843
        %v957 = vadd.f32 %v956, %v845
        %v958 = vadd.f32 %v957, %v848
        %v959 = vadd.f32 %v958, %v850
        %v960 = vadd.f32 %v959, %v853
        %v961 = vadd.f32 %v960, %v855
        %v962 = vadd.f32 %v961, %v858
        %v963 = vadd.f32 %v962, %v860
        %v964 = vadd.f32 %v963, %v863
        %v965 = vadd.f32 %v964, %v865
        %v966 = vadd.f32 %v965, %v868
        %v967 = vadd.f32 %v966, %v870
        %v968 = vadd.f32 %v967, %v873
        %v969 = vadd.f32 %v968, %v875
        %v970 = vadd.f32 %v969, %v878
        %v971 = vadd.f32 %v970, %v880
        %v972 = vadd.f32 %v971, %v883
        %v973 = vadd.f32 %v972, %v885
        %v974 = vadd.f32 %v973, %v888
        %v975 = vadd.f32 %v974, %v890
        %v976 = vadd.f32 %v975, %v893
        %v977 = vadd.f32 %v976, %v895
        %v978 = vadd.f32 %v977, %v898
        %v979 = vadd.f32 %v978, %v900
        %v980 = vadd.f32 %v979, %v903
        %v981 = vadd.f32 %v980, %v905
        %v982 = vadd.f32 %v981, %v908
        %v983 = vadd.f32 %v982, %v910
        %v984 = vadd.f32 %v983, %v913
        %v985 = vadd.f32 %v984, %v915
        %v986 = vadd.f32 %v985, %v918
        %v987 = vadd.f32 %v986, %v920
        %v988 = vadd.f32 %v987, %v923
        %v989 = vadd.f32 %v988, %v925
        %v990 = vrot.slane %v989, 4
        %v991 = vadd.f32 %v989, %v990
        %v992 = vrot.slane %v991, 2
        %v993 = vadd.f32 %v991, %v992
        %v994 = vrot.slane %v993, 1
        %v995 = vadd.f32 %v993, %v994
        %v996 = vmul.f32 %v995, 0.001953125
        %v997 = vmul.f32 %v768, %v768
        %v998 = vmul.f32 %v770, %v770
        %v999 = vmul.f32 %v773, %v773
        %v1000 = vmul.f32 %v775, %v775
        %v1001 = vmul.f32 %v778, %v778
        %v1002 = vmul.f32 %v780, %v780
        %v1003 = vmul.f32 %v783, %v783
        %v1004 = vmul.f32 %v785, %v785
        %v1005 = vmul.f32 %v788, %v788
        %v1006 = vmul.f32 %v790, %v790
        %v1007 = vmul.f32 %v793, %v793
        %v1008 = vmul.f32 %v795, %v795
        %v1009 = vmul.f32 %v798, %v798
        %v1010 = vmul.f32 %v800, %v800
        %v1011 = vmul.f32 %v803, %v803
        %v1012 = vmul.f32 %v805, %v805
        %v1013 = vmul.f32 %v808, %v808
        %v1014 = vmul.f32 %v810, %v810
        %v1015 = vmul.f32 %v813, %v813
        %v1016 = vmul.f32 %v815, %v815
        %v1017 = vmul.f32 %v818, %v818
        %v1018 = vmul.f32 %v820, %v820
        %v1019 = vmul.f32 %v823, %v823
        %v1020 = vmul.f32 %v825, %v825
        %v1021 = vmul.f32 %v828, %v828
        %v1022 = vmul.f32 %v830, %v830
        %v1023 = vmul.f32 %v833, %v833
        %v1024 = vmul.f32 %v835, %v835
        %v1025 = vmul.f32 %v838, %v838
        %v1026 = vmul.f32 %v840, %v840
        %v1027 = vmul.f32 %v843, %v843
        %v1028 = vmul.f32 %v845, %v845
        %v1029 = vmul.f32 %v848, %v848
        %v1030 = vmul.f32 %v850, %v850
        %v1031 = vmul.f32 %v853, %v853
        %v1032 = vmul.f32 %v855, %v855
        %v1033 = vmul.f32 %v858, %v858
        %v1034 = vmul.f32 %v860, %v860
        %v1035 = vmul.f32 %v863, %v863
        %v1036 = vmul.f32 %v865, %v865
        %v1037 = vmul.f32 %v868, %v868
        %v1038 = vmul.f32 %v870, %v870
        %v1039 = vmul.f32 %v873, %v873
        %v1040 = vmul.f32 %v875, %v875
        %v1041 = vmul.f32 %v878, %v878
        %v1042 = vmul.f32 %v880, %v880
        %v1043 = vmul.f32 %v883, %v883
        %v1044 = vmul.f32 %v885, %v885
        %v1045 = vmul.f32 %v888, %v888
        %v1046 = vmul.f32 %v890, %v890
        %v1047 = vmul.f32 %v893, %v893
        %v1048 = vmul.f32 %v895, %v895
        %v1049 = vmul.f32 %v898, %v898
        %v1050 = vmul.f32 %v900, %v900
        %v1051 = vmul.f32 %v903, %v903
        %v1052 = vmul.f32 %v905, %v905
        %v1053 = vmul.f32 %v908, %v908
        %v1054 = vmul.f32 %v910, %v910
        %v1055 = vmul.f32 %v913, %v913
        %v1056 = vmul.f32 %v915, %v915
        %v1057 = vmul.f32 %v918, %v918
        %v1058 = vmul.f32 %v920, %v920
        %v1059 = vmul.f32 %v923, %v923
        %v1060 = vmul.f32 %v925, %v925
        %v1061 = vadd.f32 %v997, %v998
        %v1062 = vadd.f32 %v1061, %v999
        %v1063 = vadd.f32 %v1062, %v1000
        %v1064 = vadd.f32 %v1063, %v1001
        %v1065 = vadd.f32 %v1064, %v1002
        %v1066 = vadd.f32 %v1065, %v1003
        %v1067 = vadd.f32 %v1066, %v1004
        %v1068 = vadd.f32 %v1067, %v1005
        %v1069 = vadd.f32 %v1068, %v1006
        %v1070 = vadd.f32 %v1069, %v1007
        %v1071 = vadd.f32 %v1070, %v1008
        %v1072 = vadd.f32 %v1071, %v1009
        %v1073 = vadd.f32 %v1072, %v1010
        %v1074 = vadd.f32 %v1073, %v1011
        %v1075 = vadd.f32 %v1074, %v1012
        %v1076 = vadd.f32 %v1075, %v1013
        %v1077 = vadd.f32 %v1076, %v1014
        %v1078 = vadd.f32 %v1077, %v1015
        %v1079 = vadd.f32 %v1078, %v1016
        %v1080 = vadd.f32 %v1079, %v1017
        %v1081 = vadd.f32 %v1080, %v1018
        %v1082 = vadd.f32 %v1081, %v1019
        %v1083 = vadd.f32 %v1082, %v1020
        %v1084 = vadd.f32 %v1083, %v1021
        %v1085 = vadd.f32 %v1084, %v1022
        %v1086 = vadd.f32 %v1085, %v1023
        %v1087 = vadd.f32 %v1086, %v1024
        %v1088 = vadd.f32 %v1087, %v1025
        %v1089 = vadd.f32 %v1088, %v1026
        %v1090 = vadd.f32 %v1089, %v1027
        %v1091 = vadd.f32 %v1090, %v1028
        %v1092 = vadd.f32 %v1091, %v1029
        %v1093 = vadd.f32 %v1092, %v1030
        %v1094 = vadd.f32 %v1093, %v1031
        %v1095 = vadd.f32 %v1094, %v1032
        %v1096 = vadd.f32 %v1095, %v1033
        %v1097 = vadd.f32 %v1096, %v1034
        %v1098 = vadd.f32 %v1097, %v1035
        %v1099 = vadd.f32 %v1098, %v1036
        %v1100 = vadd.f32 %v1099, %v1037
        %v1101 = vadd.f32 %v1100, %v1038
        %v1102 = vadd.f32 %v1101, %v1039
        %v1103 = vadd.f32 %v1102, %v1040
        %v1104 = vadd.f32 %v1103, %v1041
        %v1105 = vadd.f32 %v1104, %v1042
        %v1106 = vadd.f32 %v1105, %v1043
        %v1107 = vadd.f32 %v1106, %v1044
        %v1108 = vadd.f32 %v1107, %v1045
        %v1109 = vadd.f32 %v1108, %v1046
        %v1110 = vadd.f32 %v1109, %v1047
        %v1111 = vadd.f32 %v1110, %v1048
        %v1112 = vadd.f32 %v1111, %v1049
        %v1113 = vadd.f32 %v1112, %v1050
        %v1114 = vadd.f32 %v1113, %v1051
        %v1115 = vadd.f32 %v1114, %v1052
        %v1116 = vadd.f32 %v1115, %v1053
        %v1117 = vadd.f32 %v1116, %v1054
        %v1118 = vadd.f32 %v1117, %v1055
        %v1119 = vadd.f32 %v1118, %v1056
        %v1120 = vadd.f32 %v1119, %v1057
        %v1121 = vadd.f32 %v1120, %v1058
        %v1122 = vadd.f32 %v1121, %v1059
        %v1123 = vadd.f32 %v1122, %v1060
        %v1124 = vrot.slane %v1123, 4
        %v1125 = vadd.f32 %v1123, %v1124
        %v1126 = vrot.slane %v1125, 2
        %v1127 = vadd.f32 %v1125, %v1126
        %v1128 = vrot.slane %v1127, 1
        %v1129 = vadd.f32 %v1127, %v1128
        %v1130 = vmul.f32 %v1129, 0.001953125
        %v1131 = vmul.f32 %v996, %v996
        %v1132 = vsub.f32 %v1130, %v1131
        %v1133 = vmax.f32 %v1132, 0.0
        %v1134 = vsub.f32 %v768, %v996
        %v1135 = vsub.f32 %v770, %v996
        %v1136 = vsub.f32 %v773, %v996
        %v1137 = vsub.f32 %v775, %v996
        %v1138 = vsub.f32 %v778, %v996
        %v1139 = vsub.f32 %v780, %v996
        %v1140 = vsub.f32 %v783, %v996
        %v1141 = vsub.f32 %v785, %v996
        %v1142 = vsub.f32 %v788, %v996
        %v1143 = vsub.f32 %v790, %v996
        %v1144 = vsub.f32 %v793, %v996
        %v1145 = vsub.f32 %v795, %v996
        %v1146 = vsub.f32 %v798, %v996
        %v1147 = vsub.f32 %v800, %v996
        %v1148 = vsub.f32 %v803, %v996
        %v1149 = vsub.f32 %v805, %v996
        %v1150 = vsub.f32 %v808, %v996
        %v1151 = vsub.f32 %v810, %v996
        %v1152 = vsub.f32 %v813, %v996
        %v1153 = vsub.f32 %v815, %v996
        %v1154 = vsub.f32 %v818, %v996
        %v1155 = vsub.f32 %v820, %v996
        %v1156 = vsub.f32 %v823, %v996
        %v1157 = vsub.f32 %v825, %v996
        %v1158 = vsub.f32 %v828, %v996
        %v1159 = vsub.f32 %v830, %v996
        %v1160 = vsub.f32 %v833, %v996
        %v1161 = vsub.f32 %v835, %v996
        %v1162 = vsub.f32 %v838, %v996
        %v1163 = vsub.f32 %v840, %v996
        %v1164 = vsub.f32 %v843, %v996
        %v1165 = vsub.f32 %v845, %v996
        %v1166 = vsub.f32 %v848, %v996
        %v1167 = vsub.f32 %v850, %v996
        %v1168 = vsub.f32 %v853, %v996
        %v1169 = vsub.f32 %v855, %v996
        %v1170 = vsub.f32 %v858, %v996
        %v1171 = vsub.f32 %v860, %v996
        %v1172 = vsub.f32 %v863, %v996
        %v1173 = vsub.f32 %v865, %v996
        %v1174 = vsub.f32 %v868, %v996
        %v1175 = vsub.f32 %v870, %v996
        %v1176 = vsub.f32 %v873, %v996
        %v1177 = vsub.f32 %v875, %v996
        %v1178 = vsub.f32 %v878, %v996
        %v1179 = vsub.f32 %v880, %v996
        %v1180 = vsub.f32 %v883, %v996
        %v1181 = vsub.f32 %v885, %v996
        %v1182 = vsub.f32 %v888, %v996
        %v1183 = vsub.f32 %v890, %v996
        %v1184 = vsub.f32 %v893, %v996
        %v1185 = vsub.f32 %v895, %v996
        %v1186 = vsub.f32 %v898, %v996
        %v1187 = vsub.f32 %v900, %v996
        %v1188 = vsub.f32 %v903, %v996
        %v1189 = vsub.f32 %v905, %v996
        %v1190 = vsub.f32 %v908, %v996
        %v1191 = vsub.f32 %v910, %v996
        %v1192 = vsub.f32 %v913, %v996
        %v1193 = vsub.f32 %v915, %v996
        %v1194 = vsub.f32 %v918, %v996
        %v1195 = vsub.f32 %v920, %v996
        %v1196 = vsub.f32 %v923, %v996
        %v1197 = vsub.f32 %v925, %v996
        %v1198 = vadd.f32 %v1133, 1e-05
        %v1199 = vrsqrt.pop %v1198
        %v1200 = vmul.f32 %v1199, %v1198
        %v1201 = vmul.f32 %v1200, %v1199
        %v1202 = vmul.f32 0.5, %v1201
        %v1203 = vsub.f32 1.5, %v1202
        %v1204 = vmul.f32 %v1199, %v1203
        %vm1205 = vweird.f32 %v1198
        %vm1206 = vweird.f32 %v1199
        %vm1207 = vmor %vm1205, %vm1206
        %v1208 = vsel %vm1207, %v1199, %v1204
        %v1209 = vmul.f32 %v1134, %v1208
        %v1210 = vmul.f32 %v1135, %v1208
        %v1211 = vmul.f32 %v1136, %v1208
        %v1212 = vmul.f32 %v1137, %v1208
        %v1213 = vmul.f32 %v1138, %v1208
        %v1214 = vmul.f32 %v1139, %v1208
        %v1215 = vmul.f32 %v1140, %v1208
        %v1216 = vmul.f32 %v1141, %v1208
        %v1217 = vmul.f32 %v1142, %v1208
        %v1218 = vmul.f32 %v1143, %v1208
        %v1219 = vmul.f32 %v1144, %v1208
        %v1220 = vmul.f32 %v1145, %v1208
        %v1221 = vmul.f32 %v1146, %v1208
        %v1222 = vmul.f32 %v1147, %v1208
        %v1223 = vmul.f32 %v1148, %v1208
        %v1224 = vmul.f32 %v1149, %v1208
        %v1225 = vmul.f32 %v1150, %v1208
        %v1226 = vmul.f32 %v1151, %v1208
        %v1227 = vmul.f32 %v1152, %v1208
        %v1228 = vmul.f32 %v1153, %v1208
        %v1229 = vmul.f32 %v1154, %v1208
        %v1230 = vmul.f32 %v1155, %v1208
        %v1231 = vmul.f32 %v1156, %v1208
        %v1232 = vmul.f32 %v1157, %v1208
        %v1233 = vmul.f32 %v1158, %v1208
        %v1234 = vmul.f32 %v1159, %v1208
        %v1235 = vmul.f32 %v1160, %v1208
        %v1236 = vmul.f32 %v1161, %v1208
        %v1237 = vmul.f32 %v1162, %v1208
        %v1238 = vmul.f32 %v1163, %v1208
        %v1239 = vmul.f32 %v1164, %v1208
        %v1240 = vmul.f32 %v1165, %v1208
        %v1241 = vmul.f32 %v1166, %v1208
        %v1242 = vmul.f32 %v1167, %v1208
        %v1243 = vmul.f32 %v1168, %v1208
        %v1244 = vmul.f32 %v1169, %v1208
        %v1245 = vmul.f32 %v1170, %v1208
        %v1246 = vmul.f32 %v1171, %v1208
        %v1247 = vmul.f32 %v1172, %v1208
        %v1248 = vmul.f32 %v1173, %v1208
        %v1249 = vmul.f32 %v1174, %v1208
        %v1250 = vmul.f32 %v1175, %v1208
        %v1251 = vmul.f32 %v1176, %v1208
        %v1252 = vmul.f32 %v1177, %v1208
        %v1253 = vmul.f32 %v1178, %v1208
        %v1254 = vmul.f32 %v1179, %v1208
        %v1255 = vmul.f32 %v1180, %v1208
        %v1256 = vmul.f32 %v1181, %v1208
        %v1257 = vmul.f32 %v1182, %v1208
        %v1258 = vmul.f32 %v1183, %v1208
        %v1259 = vmul.f32 %v1184, %v1208
        %v1260 = vmul.f32 %v1185, %v1208
        %v1261 = vmul.f32 %v1186, %v1208
        %v1262 = vmul.f32 %v1187, %v1208
        %v1263 = vmul.f32 %v1188, %v1208
        %v1264 = vmul.f32 %v1189, %v1208
        %v1265 = vmul.f32 %v1190, %v1208
        %v1266 = vmul.f32 %v1191, %v1208
        %v1267 = vmul.f32 %v1192, %v1208
        %v1268 = vmul.f32 %v1193, %v1208
        %v1269 = vmul.f32 %v1194, %v1208
        %v1270 = vmul.f32 %v1195, %v1208
        %v1271 = vmul.f32 %v1196, %v1208
        %v1272 = vmul.f32 %v1197, %v1208
        %v1273 = vmin.f32 %v1209, 20.0
        %v1274 = vmin.f32 %v1210, 20.0
        %v1275 = vmin.f32 %v1211, 20.0
        %v1276 = vmin.f32 %v1212, 20.0
        %v1277 = vmin.f32 %v1213, 20.0
        %v1278 = vmin.f32 %v1214, 20.0
        %v1279 = vmin.f32 %v1215, 20.0
        %v1280 = vmin.f32 %v1216, 20.0
        %v1281 = vmin.f32 %v1217, 20.0
        %v1282 = vmin.f32 %v1218, 20.0
        %v1283 = vmin.f32 %v1219, 20.0
        %v1284 = vmin.f32 %v1220, 20.0
        %v1285 = vmin.f32 %v1221, 20.0
        %v1286 = vmin.f32 %v1222, 20.0
        %v1287 = vmin.f32 %v1223, 20.0
        %v1288 = vmin.f32 %v1224, 20.0
        %v1289 = vmin.f32 %v1225, 20.0
        %v1290 = vmin.f32 %v1226, 20.0
        %v1291 = vmin.f32 %v1227, 20.0
        %v1292 = vmin.f32 %v1228, 20.0
        %v1293 = vmin.f32 %v1229, 20.0
        %v1294 = vmin.f32 %v1230, 20.0
        %v1295 = vmin.f32 %v1231, 20.0
        %v1296 = vmin.f32 %v1232, 20.0
        %v1297 = vmin.f32 %v1233, 20.0
        %v1298 = vmin.f32 %v1234, 20.0
        %v1299 = vmin.f32 %v1235, 20.0
        %v1300 = vmin.f32 %v1236, 20.0
        %v1301 = vmin.f32 %v1237, 20.0
        %v1302 = vmin.f32 %v1238, 20.0
        %v1303 = vmin.f32 %v1239, 20.0
        %v1304 = vmin.f32 %v1240, 20.0
        %v1305 = vmin.f32 %v1241, 20.0
        %v1306 = vmin.f32 %v1242, 20.0
        %v1307 = vmin.f32 %v1243, 20.0
        %v1308 = vmin.f32 %v1244, 20.0
        %v1309 = vmin.f32 %v1245, 20.0
        %v1310 = vmin.f32 %v1246, 20.0
        %v1311 = vmin.f32 %v1247, 20.0
        %v1312 = vmin.f32 %v1248, 20.0
        %v1313 = vmin.f32 %v1249, 20.0
        %v1314 = vmin.f32 %v1250, 20.0
        %v1315 = vmin.f32 %v1251, 20.0
        %v1316 = vmin.f32 %v1252, 20.0
        %v1317 = vmin.f32 %v1253, 20.0
        %v1318 = vmin.f32 %v1254, 20.0
        %v1319 = vmin.f32 %v1255, 20.0
        %v1320 = vmin.f32 %v1256, 20.0
        %v1321 = vmin.f32 %v1257, 20.0
        %v1322 = vmin.f32 %v1258, 20.0
        %v1323 = vmin.f32 %v1259, 20.0
        %v1324 = vmin.f32 %v1260, 20.0
        %v1325 = vmin.f32 %v1261, 20.0
        %v1326 = vmin.f32 %v1262, 20.0
        %v1327 = vmin.f32 %v1263, 20.0
        %v1328 = vmin.f32 %v1264, 20.0
        %v1329 = vmin.f32 %v1265, 20.0
        %v1330 = vmin.f32 %v1266, 20.0
        %v1331 = vmin.f32 %v1267, 20.0
        %v1332 = vmin.f32 %v1268, 20.0
        %v1333 = vmin.f32 %v1269, 20.0
        %v1334 = vmin.f32 %v1270, 20.0
        %v1335 = vmin.f32 %v1271, 20.0
        %v1336 = vmin.f32 %v1272, 20.0
        %v1337 = vmul.f32 %v1273, 1.442695
        %v1338 = vpow.pop %v1337
        %v1339 = vmul.f32 %v1274, 1.442695
        %v1340 = vpow.pop %v1339
        %v1341 = vmul.f32 %v1275, 1.442695
        %v1342 = vpow.pop %v1341
        %v1343 = vmul.f32 %v1276, 1.442695
        %v1344 = vpow.pop %v1343
        %v1345 = vmul.f32 %v1277, 1.442695
        %v1346 = vpow.pop %v1345
        %v1347 = vmul.f32 %v1278, 1.442695
        %v1348 = vpow.pop %v1347
        %v1349 = vmul.f32 %v1279, 1.442695
        %v1350 = vpow.pop %v1349
        %v1351 = vmul.f32 %v1280, 1.442695
        %v1352 = vpow.pop %v1351
        %v1353 = vmul.f32 %v1281, 1.442695
        %v1354 = vpow.pop %v1353
        %v1355 = vmul.f32 %v1282, 1.442695
        %v1356 = vpow.pop %v1355
        %v1357 = vmul.f32 %v1283, 1.442695
        %v1358 = vpow.pop %v1357
        %v1359 = vmul.f32 %v1284, 1.442695
        %v1360 = vpow.pop %v1359
        %v1361 = vmul.f32 %v1285, 1.442695
        %v1362 = vpow.pop %v1361
        %v1363 = vmul.f32 %v1286, 1.442695
        %v1364 = vpow.pop %v1363
        %v1365 = vmul.f32 %v1287, 1.442695
        %v1366 = vpow.pop %v1365
        %v1367 = vmul.f32 %v1288, 1.442695
        %v1368 = vpow.pop %v1367
        %v1369 = vmul.f32 %v1289, 1.442695
        %v1370 = vpow.pop %v1369
        %v1371 = vmul.f32 %v1290, 1.442695
        %v1372 = vpow.pop %v1371
        %v1373 = vmul.f32 %v1291, 1.442695
        %v1374 = vpow.pop %v1373
        %v1375 = vmul.f32 %v1292, 1.442695
        %v1376 = vpow.pop %v1375
        %v1377 = vmul.f32 %v1293, 1.442695
        %v1378 = vpow.pop %v1377
        %v1379 = vmul.f32 %v1294, 1.442695
        %v1380 = vpow.pop %v1379
        %v1381 = vmul.f32 %v1295, 1.442695
        %v1382 = vpow.pop %v1381
        %v1383 = vmul.f32 %v1296, 1.442695
        %v1384 = vpow.pop %v1383
        %v1385 = vmul.f32 %v1297, 1.442695
        %v1386 = vpow.pop %v1385
        %v1387 = vmul.f32 %v1298, 1.442695
        %v1388 = vpow.pop %v1387
        %v1389 = vmul.f32 %v1299, 1.442695
        %v1390 = vpow.pop %v1389
        %v1391 = vmul.f32 %v1300, 1.442695
        %v1392 = vpow.pop %v1391
        %v1393 = vmul.f32 %v1301, 1.442695
        %v1394 = vpow.pop %v1393
        %v1395 = vmul.f32 %v1302, 1.442695
        %v1396 = vpow.pop %v1395
        %v1397 = vmul.f32 %v1303, 1.442695
        %v1398 = vpow.pop %v1397
        %v1399 = vmul.f32 %v1304, 1.442695
        %v1400 = vpow.pop %v1399
        %v1401 = vmul.f32 %v1305, 1.442695
        %v1402 = vpow.pop %v1401
        %v1403 = vmul.f32 %v1306, 1.442695
        %v1404 = vpow.pop %v1403
        %v1405 = vmul.f32 %v1307, 1.442695
        %v1406 = vpow.pop %v1405
        %v1407 = vmul.f32 %v1308, 1.442695
        %v1408 = vpow.pop %v1407
        %v1409 = vmul.f32 %v1309, 1.442695
        %v1410 = vpow.pop %v1409
        %v1411 = vmul.f32 %v1310, 1.442695
        %v1412 = vpow.pop %v1411
        %v1413 = vmul.f32 %v1311, 1.442695
        %v1414 = vpow.pop %v1413
        %v1415 = vmul.f32 %v1312, 1.442695
        %v1416 = vpow.pop %v1415
        %v1417 = vmul.f32 %v1313, 1.442695
        %v1418 = vpow.pop %v1417
        %v1419 = vmul.f32 %v1314, 1.442695
        %v1420 = vpow.pop %v1419
        %v1421 = vmul.f32 %v1315, 1.442695
        %v1422 = vpow.pop %v1421
        %v1423 = vmul.f32 %v1316, 1.442695
        %v1424 = vpow.pop %v1423
        %v1425 = vmul.f32 %v1317, 1.442695
        %v1426 = vpow.pop %v1425
        %v1427 = vmul.f32 %v1318, 1.442695
        %v1428 = vpow.pop %v1427
        %v1429 = vmul.f32 %v1319, 1.442695
        %v1430 = vpow.pop %v1429
        %v1431 = vmul.f32 %v1320, 1.442695
        %v1432 = vpow.pop %v1431
        %v1433 = vmul.f32 %v1321, 1.442695
        %v1434 = vpow.pop %v1433
        %v1435 = vmul.f32 %v1322, 1.442695
        %v1436 = vpow.pop %v1435
        %v1437 = vmul.f32 %v1323, 1.442695
        %v1438 = vpow.pop %v1437
        %v1439 = vmul.f32 %v1324, 1.442695
        %v1440 = vpow.pop %v1439
        %v1441 = vmul.f32 %v1325, 1.442695
        %v1442 = vpow.pop %v1441
        %v1443 = vmul.f32 %v1326, 1.442695
        %v1444 = vpow.pop %v1443
        %v1445 = vmul.f32 %v1327, 1.442695
        %v1446 = vpow.pop %v1445
        %v1447 = vmul.f32 %v1328, 1.442695
        %v1448 = vpow.pop %v1447
        %v1449 = vmul.f32 %v1329, 1.442695
        %v1450 = vpow.pop %v1449
        %v1451 = vmul.f32 %v1330, 1.442695
        %v1452 = vpow.pop %v1451
        %v1453 = vmul.f32 %v1331, 1.442695
        %v1454 = vpow.pop %v1453
        %v1455 = vmul.f32 %v1332, 1.442695
        %v1456 = vpow.pop %v1455
        %v1457 = vmul.f32 %v1333, 1.442695
        %v1458 = vpow.pop %v1457
        %v1459 = vmul.f32 %v1334, 1.442695
        %v1460 = vpow.pop %v1459
        %v1461 = vmul.f32 %v1335, 1.442695
        %v1462 = vpow.pop %v1461
        %v1463 = vmul.f32 %v1336, 1.442695
        %v1464 = vpow.pop %v1463
        %v1465 = vadd.f32 %v1338, 1.0
        %v1466 = vadd.f32 %v1340, 1.0
        %v1467 = vadd.f32 %v1342, 1.0
        %v1468 = vadd.f32 %v1344, 1.0
        %v1469 = vadd.f32 %v1346, 1.0
        %v1470 = vadd.f32 %v1348, 1.0
        %v1471 = vadd.f32 %v1350, 1.0
        %v1472 = vadd.f32 %v1352, 1.0
        %v1473 = vadd.f32 %v1354, 1.0
        %v1474 = vadd.f32 %v1356, 1.0
        %v1475 = vadd.f32 %v1358, 1.0
        %v1476 = vadd.f32 %v1360, 1.0
        %v1477 = vadd.f32 %v1362, 1.0
        %v1478 = vadd.f32 %v1364, 1.0
        %v1479 = vadd.f32 %v1366, 1.0
        %v1480 = vadd.f32 %v1368, 1.0
        %v1481 = vadd.f32 %v1370, 1.0
        %v1482 = vadd.f32 %v1372, 1.0
        %v1483 = vadd.f32 %v1374, 1.0
        %v1484 = vadd.f32 %v1376, 1.0
        %v1485 = vadd.f32 %v1378, 1.0
        %v1486 = vadd.f32 %v1380, 1.0
        %v1487 = vadd.f32 %v1382, 1.0
        %v1488 = vadd.f32 %v1384, 1.0
        %v1489 = vadd.f32 %v1386, 1.0
        %v1490 = vadd.f32 %v1388, 1.0
        %v1491 = vadd.f32 %v1390, 1.0
        %v1492 = vadd.f32 %v1392, 1.0
        %v1493 = vadd.f32 %v1394, 1.0
        %v1494 = vadd.f32 %v1396, 1.0
        %v1495 = vadd.f32 %v1398, 1.0
        %v1496 = vadd.f32 %v1400, 1.0
        %v1497 = vadd.f32 %v1402, 1.0
        %v1498 = vadd.f32 %v1404, 1.0
        %v1499 = vadd.f32 %v1406, 1.0
        %v1500 = vadd.f32 %v1408, 1.0
        %v1501 = vadd.f32 %v1410, 1.0
        %v1502 = vadd.f32 %v1412, 1.0
        %v1503 = vadd.f32 %v1414, 1.0
        %v1504 = vadd.f32 %v1416, 1.0
        %v1505 = vadd.f32 %v1418, 1.0
        %v1506 = vadd.f32 %v1420, 1.0
        %v1507 = vadd.f32 %v1422, 1.0
        %v1508 = vadd.f32 %v1424, 1.0
        %v1509 = vadd.f32 %v1426, 1.0
        %v1510 = vadd.f32 %v1428, 1.0
        %v1511 = vadd.f32 %v1430, 1.0
        %v1512 = vadd.f32 %v1432, 1.0
        %v1513 = vadd.f32 %v1434, 1.0
        %v1514 = vadd.f32 %v1436, 1.0
        %v1515 = vadd.f32 %v1438, 1.0
        %v1516 = vadd.f32 %v1440, 1.0
        %v1517 = vadd.f32 %v1442, 1.0
        %v1518 = vadd.f32 %v1444, 1.0
        %v1519 = vadd.f32 %v1446, 1.0
        %v1520 = vadd.f32 %v1448, 1.0
        %v1521 = vadd.f32 %v1450, 1.0
        %v1522 = vadd.f32 %v1452, 1.0
        %v1523 = vadd.f32 %v1454, 1.0
        %v1524 = vadd.f32 %v1456, 1.0
        %v1525 = vadd.f32 %v1458, 1.0
        %v1526 = vadd.f32 %v1460, 1.0
        %v1527 = vadd.f32 %v1462, 1.0
        %v1528 = vadd.f32 %v1464, 1.0
        %v1529 = vmul.f32 %v1465, %v1465
        %v1530 = vmul.f32 %v1466, %v1466
        %v1531 = vmul.f32 %v1467, %v1467
        %v1532 = vmul.f32 %v1468, %v1468
        %v1533 = vmul.f32 %v1469, %v1469
        %v1534 = vmul.f32 %v1470, %v1470
        %v1535 = vmul.f32 %v1471, %v1471
        %v1536 = vmul.f32 %v1472, %v1472
        %v1537 = vmul.f32 %v1473, %v1473
        %v1538 = vmul.f32 %v1474, %v1474
        %v1539 = vmul.f32 %v1475, %v1475
        %v1540 = vmul.f32 %v1476, %v1476
        %v1541 = vmul.f32 %v1477, %v1477
        %v1542 = vmul.f32 %v1478, %v1478
        %v1543 = vmul.f32 %v1479, %v1479
        %v1544 = vmul.f32 %v1480, %v1480
        %v1545 = vmul.f32 %v1481, %v1481
        %v1546 = vmul.f32 %v1482, %v1482
        %v1547 = vmul.f32 %v1483, %v1483
        %v1548 = vmul.f32 %v1484, %v1484
        %v1549 = vmul.f32 %v1485, %v1485
        %v1550 = vmul.f32 %v1486, %v1486
        %v1551 = vmul.f32 %v1487, %v1487
        %v1552 = vmul.f32 %v1488, %v1488
        %v1553 = vmul.f32 %v1489, %v1489
        %v1554 = vmul.f32 %v1490, %v1490
        %v1555 = vmul.f32 %v1491, %v1491
        %v1556 = vmul.f32 %v1492, %v1492
        %v1557 = vmul.f32 %v1493, %v1493
        %v1558 = vmul.f32 %v1494, %v1494
        %v1559 = vmul.f32 %v1495, %v1495
        %v1560 = vmul.f32 %v1496, %v1496
        %v1561 = vmul.f32 %v1497, %v1497
        %v1562 = vmul.f32 %v1498, %v1498
        %v1563 = vmul.f32 %v1499, %v1499
        %v1564 = vmul.f32 %v1500, %v1500
        %v1565 = vmul.f32 %v1501, %v1501
        %v1566 = vmul.f32 %v1502, %v1502
        %v1567 = vmul.f32 %v1503, %v1503
        %v1568 = vmul.f32 %v1504, %v1504
        %v1569 = vmul.f32 %v1505, %v1505
        %v1570 = vmul.f32 %v1506, %v1506
        %v1571 = vmul.f32 %v1507, %v1507
        %v1572 = vmul.f32 %v1508, %v1508
        %v1573 = vmul.f32 %v1509, %v1509
        %v1574 = vmul.f32 %v1510, %v1510
        %v1575 = vmul.f32 %v1511, %v1511
        %v1576 = vmul.f32 %v1512, %v1512
        %v1577 = vmul.f32 %v1513, %v1513
        %v1578 = vmul.f32 %v1514, %v1514
        %v1579 = vmul.f32 %v1515, %v1515
        %v1580 = vmul.f32 %v1516, %v1516
        %v1581 = vmul.f32 %v1517, %v1517
        %v1582 = vmul.f32 %v1518, %v1518
        %v1583 = vmul.f32 %v1519, %v1519
        %v1584 = vmul.f32 %v1520, %v1520
        %v1585 = vmul.f32 %v1521, %v1521
        %v1586 = vmul.f32 %v1522, %v1522
        %v1587 = vmul.f32 %v1523, %v1523
        %v1588 = vmul.f32 %v1524, %v1524
        %v1589 = vmul.f32 %v1525, %v1525
        %v1590 = vmul.f32 %v1526, %v1526
        %v1591 = vmul.f32 %v1527, %v1527
        %v1592 = vmul.f32 %v1528, %v1528
        %v1593 = vsub.f32 %v1529, 1.0
        %v1594 = vsub.f32 %v1530, 1.0
        %v1595 = vsub.f32 %v1531, 1.0
        %v1596 = vsub.f32 %v1532, 1.0
        %v1597 = vsub.f32 %v1533, 1.0
        %v1598 = vsub.f32 %v1534, 1.0
        %v1599 = vsub.f32 %v1535, 1.0
        %v1600 = vsub.f32 %v1536, 1.0
        %v1601 = vsub.f32 %v1537, 1.0
        %v1602 = vsub.f32 %v1538, 1.0
        %v1603 = vsub.f32 %v1539, 1.0
        %v1604 = vsub.f32 %v1540, 1.0
        %v1605 = vsub.f32 %v1541, 1.0
        %v1606 = vsub.f32 %v1542, 1.0
        %v1607 = vsub.f32 %v1543, 1.0
        %v1608 = vsub.f32 %v1544, 1.0
        %v1609 = vsub.f32 %v1545, 1.0
        %v1610 = vsub.f32 %v1546, 1.0
        %v1611 = vsub.f32 %v1547, 1.0
        %v1612 = vsub.f32 %v1548, 1.0
        %v1613 = vsub.f32 %v1549, 1.0
        %v1614 = vsub.f32 %v1550, 1.0
        %v1615 = vsub.f32 %v1551, 1.0
        %v1616 = vsub.f32 %v1552, 1.0
        %v1617 = vsub.f32 %v1553, 1.0
        %v1618 = vsub.f32 %v1554, 1.0
        %v1619 = vsub.f32 %v1555, 1.0
        %v1620 = vsub.f32 %v1556, 1.0
        %v1621 = vsub.f32 %v1557, 1.0
        %v1622 = vsub.f32 %v1558, 1.0
        %v1623 = vsub.f32 %v1559, 1.0
        %v1624 = vsub.f32 %v1560, 1.0
        %v1625 = vsub.f32 %v1561, 1.0
        %v1626 = vsub.f32 %v1562, 1.0
        %v1627 = vsub.f32 %v1563, 1.0
        %v1628 = vsub.f32 %v1564, 1.0
        %v1629 = vsub.f32 %v1565, 1.0
        %v1630 = vsub.f32 %v1566, 1.0
        %v1631 = vsub.f32 %v1567, 1.0
        %v1632 = vsub.f32 %v1568, 1.0
        %v1633 = vsub.f32 %v1569, 1.0
        %v1634 = vsub.f32 %v1570, 1.0
        %v1635 = vsub.f32 %v1571, 1.0
        %v1636 = vsub.f32 %v1572, 1.0
        %v1637 = vsub.f32 %v1573, 1.0
        %v1638 = vsub.f32 %v1574, 1.0
        %v1639 = vsub.f32 %v1575, 1.0
        %v1640 = vsub.f32 %v1576, 1.0
        %v1641 = vsub.f32 %v1577, 1.0
        %v1642 = vsub.f32 %v1578, 1.0
        %v1643 = vsub.f32 %v1579, 1.0
        %v1644 = vsub.f32 %v1580, 1.0
        %v1645 = vsub.f32 %v1581, 1.0
        %v1646 = vsub.f32 %v1582, 1.0
        %v1647 = vsub.f32 %v1583, 1.0
        %v1648 = vsub.f32 %v1584, 1.0
        %v1649 = vsub.f32 %v1585, 1.0
        %v1650 = vsub.f32 %v1586, 1.0
        %v1651 = vsub.f32 %v1587, 1.0
        %v1652 = vsub.f32 %v1588, 1.0
        %v1653 = vsub.f32 %v1589, 1.0
        %v1654 = vsub.f32 %v1590, 1.0
        %v1655 = vsub.f32 %v1591, 1.0
        %v1656 = vsub.f32 %v1592, 1.0
        %v1657 = vmul.f32 %v1209, %v1593
        %v1658 = vmul.f32 %v1210, %v1594
        %v1659 = vmul.f32 %v1211, %v1595
        %v1660 = vmul.f32 %v1212, %v1596
        %v1661 = vmul.f32 %v1213, %v1597
        %v1662 = vmul.f32 %v1214, %v1598
        %v1663 = vmul.f32 %v1215, %v1599
        %v1664 = vmul.f32 %v1216, %v1600
        %v1665 = vmul.f32 %v1217, %v1601
        %v1666 = vmul.f32 %v1218, %v1602
        %v1667 = vmul.f32 %v1219, %v1603
        %v1668 = vmul.f32 %v1220, %v1604
        %v1669 = vmul.f32 %v1221, %v1605
        %v1670 = vmul.f32 %v1222, %v1606
        %v1671 = vmul.f32 %v1223, %v1607
        %v1672 = vmul.f32 %v1224, %v1608
        %v1673 = vmul.f32 %v1225, %v1609
        %v1674 = vmul.f32 %v1226, %v1610
        %v1675 = vmul.f32 %v1227, %v1611
        %v1676 = vmul.f32 %v1228, %v1612
        %v1677 = vmul.f32 %v1229, %v1613
        %v1678 = vmul.f32 %v1230, %v1614
        %v1679 = vmul.f32 %v1231, %v1615
        %v1680 = vmul.f32 %v1232, %v1616
        %v1681 = vmul.f32 %v1233, %v1617
        %v1682 = vmul.f32 %v1234, %v1618
        %v1683 = vmul.f32 %v1235, %v1619
        %v1684 = vmul.f32 %v1236, %v1620
        %v1685 = vmul.f32 %v1237, %v1621
        %v1686 = vmul.f32 %v1238, %v1622
        %v1687 = vmul.f32 %v1239, %v1623
        %v1688 = vmul.f32 %v1240, %v1624
        %v1689 = vmul.f32 %v1241, %v1625
        %v1690 = vmul.f32 %v1242, %v1626
        %v1691 = vmul.f32 %v1243, %v1627
        %v1692 = vmul.f32 %v1244, %v1628
        %v1693 = vmul.f32 %v1245, %v1629
        %v1694 = vmul.f32 %v1246, %v1630
        %v1695 = vmul.f32 %v1247, %v1631
        %v1696 = vmul.f32 %v1248, %v1632
        %v1697 = vmul.f32 %v1249, %v1633
        %v1698 = vmul.f32 %v1250, %v1634
        %v1699 = vmul.f32 %v1251, %v1635
        %v1700 = vmul.f32 %v1252, %v1636
        %v1701 = vmul.f32 %v1253, %v1637
        %v1702 = vmul.f32 %v1254, %v1638
        %v1703 = vmul.f32 %v1255, %v1639
        %v1704 = vmul.f32 %v1256, %v1640
        %v1705 = vmul.f32 %v1257, %v1641
        %v1706 = vmul.f32 %v1258, %v1642
        %v1707 = vmul.f32 %v1259, %v1643
        %v1708 = vmul.f32 %v1260, %v1644
        %v1709 = vmul.f32 %v1261, %v1645
        %v1710 = vmul.f32 %v1262, %v1646
        %v1711 = vmul.f32 %v1263, %v1647
        %v1712 = vmul.f32 %v1264, %v1648
        %v1713 = vmul.f32 %v1265, %v1649
        %v1714 = vmul.f32 %v1266, %v1650
        %v1715 = vmul.f32 %v1267, %v1651
        %v1716 = vmul.f32 %v1268, %v1652
        %v1717 = vmul.f32 %v1269, %v1653
        %v1718 = vmul.f32 %v1270, %v1654
        %v1719 = vmul.f32 %v1271, %v1655
        %v1720 = vmul.f32 %v1272, %v1656
        %v1721 = vadd.f32 %v1529, 1.0
        %v1722 = vadd.f32 %v1530, 1.0
        %v1723 = vadd.f32 %v1531, 1.0
        %v1724 = vadd.f32 %v1532, 1.0
        %v1725 = vadd.f32 %v1533, 1.0
        %v1726 = vadd.f32 %v1534, 1.0
        %v1727 = vadd.f32 %v1535, 1.0
        %v1728 = vadd.f32 %v1536, 1.0
        %v1729 = vadd.f32 %v1537, 1.0
        %v1730 = vadd.f32 %v1538, 1.0
        %v1731 = vadd.f32 %v1539, 1.0
        %v1732 = vadd.f32 %v1540, 1.0
        %v1733 = vadd.f32 %v1541, 1.0
        %v1734 = vadd.f32 %v1542, 1.0
        %v1735 = vadd.f32 %v1543, 1.0
        %v1736 = vadd.f32 %v1544, 1.0
        %v1737 = vadd.f32 %v1545, 1.0
        %v1738 = vadd.f32 %v1546, 1.0
        %v1739 = vadd.f32 %v1547, 1.0
        %v1740 = vadd.f32 %v1548, 1.0
        %v1741 = vadd.f32 %v1549, 1.0
        %v1742 = vadd.f32 %v1550, 1.0
        %v1743 = vadd.f32 %v1551, 1.0
        %v1744 = vadd.f32 %v1552, 1.0
        %v1745 = vadd.f32 %v1553, 1.0
        %v1746 = vadd.f32 %v1554, 1.0
        %v1747 = vadd.f32 %v1555, 1.0
        %v1748 = vadd.f32 %v1556, 1.0
        %v1749 = vadd.f32 %v1557, 1.0
        %v1750 = vadd.f32 %v1558, 1.0
        %v1751 = vadd.f32 %v1559, 1.0
        %v1752 = vadd.f32 %v1560, 1.0
        %v1753 = vadd.f32 %v1561, 1.0
        %v1754 = vadd.f32 %v1562, 1.0
        %v1755 = vadd.f32 %v1563, 1.0
        %v1756 = vadd.f32 %v1564, 1.0
        %v1757 = vadd.f32 %v1565, 1.0
        %v1758 = vadd.f32 %v1566, 1.0
        %v1759 = vadd.f32 %v1567, 1.0
        %v1760 = vadd.f32 %v1568, 1.0
        %v1761 = vadd.f32 %v1569, 1.0
        %v1762 = vadd.f32 %v1570, 1.0
        %v1763 = vadd.f32 %v1571, 1.0
        %v1764 = vadd.f32 %v1572, 1.0
        %v1765 = vadd.f32 %v1573, 1.0
        %v1766 = vadd.f32 %v1574, 1.0
        %v1767 = vadd.f32 %v1575, 1.0
        %v1768 = vadd.f32 %v1576, 1.0
        %v1769 = vadd.f32 %v1577, 1.0
        %v1770 = vadd.f32 %v1578, 1.0
        %v1771 = vadd.f32 %v1579, 1.0
        %v1772 = vadd.f32 %v1580, 1.0
        %v1773 = vadd.f32 %v1581, 1.0
        %v1774 = vadd.f32 %v1582, 1.0
        %v1775 = vadd.f32 %v1583, 1.0
        %v1776 = vadd.f32 %v1584, 1.0
        %v1777 = vadd.f32 %v1585, 1.0
        %v1778 = vadd.f32 %v1586, 1.0
        %v1779 = vadd.f32 %v1587, 1.0
        %v1780 = vadd.f32 %v1588, 1.0
        %v1781 = vadd.f32 %v1589, 1.0
        %v1782 = vadd.f32 %v1590, 1.0
        %v1783 = vadd.f32 %v1591, 1.0
        %v1784 = vadd.f32 %v1592, 1.0
        %v1785 = vrcp.pop %v1721
        %v1786 = vrcp.pop %v1722
        %v1787 = vrcp.pop %v1723
        %v1788 = vrcp.pop %v1724
        %v1789 = vrcp.pop %v1725
        %v1790 = vrcp.pop %v1726
        %v1791 = vrcp.pop %v1727
        %v1792 = vrcp.pop %v1728
        %v1793 = vrcp.pop %v1729
        %v1794 = vrcp.pop %v1730
        %v1795 = vrcp.pop %v1731
        %v1796 = vrcp.pop %v1732
        %v1797 = vrcp.pop %v1733
        %v1798 = vrcp.pop %v1734
        %v1799 = vrcp.pop %v1735
        %v1800 = vrcp.pop %v1736
        %v1801 = vrcp.pop %v1737
        %v1802 = vrcp.pop %v1738
        %v1803 = vrcp.pop %v1739
        %v1804 = vrcp.pop %v1740
        %v1805 = vrcp.pop %v1741
        %v1806 = vrcp.pop %v1742
        %v1807 = vrcp.pop %v1743
        %v1808 = vrcp.pop %v1744
        %v1809 = vrcp.pop %v1745
        %v1810 = vrcp.pop %v1746
        %v1811 = vrcp.pop %v1747
        %v1812 = vrcp.pop %v1748
        %v1813 = vrcp.pop %v1749
        %v1814 = vrcp.pop %v1750
        %v1815 = vrcp.pop %v1751
        %v1816 = vrcp.pop %v1752
        %v1817 = vrcp.pop %v1753
        %v1818 = vrcp.pop %v1754
        %v1819 = vrcp.pop %v1755
        %v1820 = vrcp.pop %v1756
        %v1821 = vrcp.pop %v1757
        %v1822 = vrcp.pop %v1758
        %v1823 = vrcp.pop %v1759
        %v1824 = vrcp.pop %v1760
        %v1825 = vrcp.pop %v1761
        %v1826 = vrcp.pop %v1762
        %v1827 = vrcp.pop %v1763
        %v1828 = vrcp.pop %v1764
        %v1829 = vrcp.pop %v1765
        %v1830 = vrcp.pop %v1766
        %v1831 = vrcp.pop %v1767
        %v1832 = vrcp.pop %v1768
        %v1833 = vrcp.pop %v1769
        %v1834 = vrcp.pop %v1770
        %v1835 = vrcp.pop %v1771
        %v1836 = vrcp.pop %v1772
        %v1837 = vrcp.pop %v1773
        %v1838 = vrcp.pop %v1774
        %v1839 = vrcp.pop %v1775
        %v1840 = vrcp.pop %v1776
        %v1841 = vrcp.pop %v1777
        %v1842 = vrcp.pop %v1778
        %v1843 = vrcp.pop %v1779
        %v1844 = vrcp.pop %v1780
        %v1845 = vrcp.pop %v1781
        %v1846 = vrcp.pop %v1782
        %v1847 = vrcp.pop %v1783
        %v1848 = vrcp.pop %v1784
        %v1849 = vmul.f32 %v1657, %v1785
        %v1850 = vmul.f32 %v1658, %v1786
        %v1851 = vmul.f32 %v1659, %v1787
        %v1852 = vmul.f32 %v1660, %v1788
        %v1853 = vmul.f32 %v1661, %v1789
        %v1854 = vmul.f32 %v1662, %v1790
        %v1855 = vmul.f32 %v1663, %v1791
        %v1856 = vmul.f32 %v1664, %v1792
        %v1857 = vmul.f32 %v1665, %v1793
        %v1858 = vmul.f32 %v1666, %v1794
        %v1859 = vmul.f32 %v1667, %v1795
        %v1860 = vmul.f32 %v1668, %v1796
        %v1861 = vmul.f32 %v1669, %v1797
        %v1862 = vmul.f32 %v1670, %v1798
        %v1863 = vmul.f32 %v1671, %v1799
        %v1864 = vmul.f32 %v1672, %v1800
        %v1865 = vmul.f32 %v1673, %v1801
        %v1866 = vmul.f32 %v1674, %v1802
        %v1867 = vmul.f32 %v1675, %v1803
        %v1868 = vmul.f32 %v1676, %v1804
        %v1869 = vmul.f32 %v1677, %v1805
        %v1870 = vmul.f32 %v1678, %v1806
        %v1871 = vmul.f32 %v1679, %v1807
        %v1872 = vmul.f32 %v1680, %v1808
        %v1873 = vmul.f32 %v1681, %v1809
        %v1874 = vmul.f32 %v1682, %v1810
        %v1875 = vmul.f32 %v1683, %v1811
        %v1876 = vmul.f32 %v1684, %v1812
        %v1877 = vmul.f32 %v1685, %v1813
        %v1878 = vmul.f32 %v1686, %v1814
        %v1879 = vmul.f32 %v1687, %v1815
        %v1880 = vmul.f32 %v1688, %v1816
        %v1881 = vmul.f32 %v1689, %v1817
        %v1882 = vmul.f32 %v1690, %v1818
        %v1883 = vmul.f32 %v1691, %v1819
        %v1884 = vmul.f32 %v1692, %v1820
        %v1885 = vmul.f32 %v1693, %v1821
        %v1886 = vmul.f32 %v1694, %v1822
        %v1887 = vmul.f32 %v1695, %v1823
        %v1888 = vmul.f32 %v1696, %v1824
        %v1889 = vmul.f32 %v1697, %v1825
        %v1890 = vmul.f32 %v1698, %v1826
        %v1891 = vmul.f32 %v1699, %v1827
        %v1892 = vmul.f32 %v1700, %v1828
        %v1893 = vmul.f32 %v1701, %v1829
        %v1894 = vmul.f32 %v1702, %v1830
        %v1895 = vmul.f32 %v1703, %v1831
        %v1896 = vmul.f32 %v1704, %v1832
        %v1897 = vmul.f32 %v1705, %v1833
        %v1898 = vmul.f32 %v1706, %v1834
        %v1899 = vmul.f32 %v1707, %v1835
        %v1900 = vmul.f32 %v1708, %v1836
        %v1901 = vmul.f32 %v1709, %v1837
        %v1902 = vmul.f32 %v1710, %v1838
        %v1903 = vmul.f32 %v1711, %v1839
        %v1904 = vmul.f32 %v1712, %v1840
        %v1905 = vmul.f32 %v1713, %v1841
        %v1906 = vmul.f32 %v1714, %v1842
        %v1907 = vmul.f32 %v1715, %v1843
        %v1908 = vmul.f32 %v1716, %v1844
        %v1909 = vmul.f32 %v1717, %v1845
        %v1910 = vmul.f32 %v1718, %v1846
        %v1911 = vmul.f32 %v1719, %v1847
        %v1912 = vmul.f32 %v1720, %v1848
        %v1913 = vld [vmem:[%s2] sm:$0xff]
        %v1914 = vld [vmem:[%s2 + $0x8] sm:$0xff]
        %v1915 = vld [vmem:[%s2 + $0x10] sm:$0xff]
        %v1916 = vld [vmem:[%s2 + $0x18] sm:$0xff]
        %v1917 = vld [vmem:[%s2 + $0x20] sm:$0xff]
        %v1918 = vld [vmem:[%s2 + $0x28] sm:$0xff]
        %v1919 = vld [vmem:[%s2 + $0x30] sm:$0xff]
        %v1920 = vld [vmem:[%s2 + $0x38] sm:$0xff]
        %v1921 = vld [vmem:[%s2 + $0x40] sm:$0xff]
        %v1922 = vld [vmem:[%s2 + $0x48] sm:$0xff]
        %v1923 = vld [vmem:[%s2 + $0x50] sm:$0xff]
        %v1924 = vld [vmem:[%s2 + $0x58] sm:$0xff]
        %v1925 = vld [vmem:[%s2 + $0x60] sm:$0xff]
        %v1926 = vld [vmem:[%s2 + $0x68] sm:$0xff]
        %v1927 = vld [vmem:[%s2 + $0x70] sm:$0xff]
        %v1928 = vld [vmem:[%s2 + $0x78] sm:$0xff]
        %v1929 = vld [vmem:[%s2 + $0x80] sm:$0xff]
        %v1930 = vld [vmem:[%s2 + $0x88] sm:$0xff]
        %v1931 = vld [vmem:[%s2 + $0x90] sm:$0xff]
        %v1932 = vld [vmem:[%s2 + $0x98] sm:$0xff]
        %v1933 = vld [vmem:[%s2 + $0xa0] sm:$0xff]
        %v1934 = vld [vmem:[%s2 + $0xa8] sm:$0xff]
        %v1935 = vld [vmem:[%s2 + $0xb0] sm:$0xff]
        %v1936 = vld [vmem:[%s2 + $0xb8] sm:$0xff]
        %v1937 = vld [vmem:[%s2 + $0xc0] sm:$0xff]
        %v1938 = vld [vmem:[%s2 + $0xc8] sm:$0xff]
        %v1939 = vld [vmem:[%s2 + $0xd0] sm:$0xff]
        %v1940 = vld [vmem:[%s2 + $0xd8] sm:$0xff]
        %v1941 = vld [vmem:[%s2 + $0xe0] sm:$0xff]
        %v1942 = vld [vmem:[%s2 + $0xe8] sm:$0xff]
        %v1943 = vld [vmem:[%s2 + $0xf0] sm:$0xff]
        %v1944 = vld [vmem:[%s2 + $0xf8] sm:$0xff]
        %v1945 = vld [vmem:[%s2 + $0x100] sm:$0xff]
        %v1946 = vld [vmem:[%s2 + $0x108] sm:$0xff]
        %v1947 = vld [vmem:[%s2 + $0x110] sm:$0xff]
        %v1948 = vld [vmem:[%s2 + $0x118] sm:$0xff]
        %v1949 = vld [vmem:[%s2 + $0x120] sm:$0xff]
        %v1950 = vld [vmem:[%s2 + $0x128] sm:$0xff]
        %v1951 = vld [vmem:[%s2 + $0x130] sm:$0xff]
        %v1952 = vld [vmem:[%s2 + $0x138] sm:$0xff]
        %v1953 = vld [vmem:[%s2 + $0x140] sm:$0xff]
        %v1954 = vld [vmem:[%s2 + $0x148] sm:$0xff]
        %v1955 = vld [vmem:[%s2 + $0x150] sm:$0xff]
        %v1956 = vld [vmem:[%s2 + $0x158] sm:$0xff]
        %v1957 = vld [vmem:[%s2 + $0x160] sm:$0xff]
        %v1958 = vld [vmem:[%s2 + $0x168] sm:$0xff]
        %v1959 = vld [vmem:[%s2 + $0x170] sm:$0xff]
        %v1960 = vld [vmem:[%s2 + $0x178] sm:$0xff]
        %v1961 = vld [vmem:[%s2 + $0x180] sm:$0xff]
        %v1962 = vld [vmem:[%s2 + $0x188] sm:$0xff]
        %v1963 = vld [vmem:[%s2 + $0x190] sm:$0xff]
        %v1964 = vld [vmem:[%s2 + $0x198] sm:$0xff]
        %v1965 = vld [vmem:[%s2 + $0x1a0] sm:$0xff]
        %v1966 = vld [vmem:[%s2 + $0x1a8] sm:$0xff]
        %v1967 = vld [vmem:[%s2 + $0x1b0] sm:$0xff]
        %v1968 = vld [vmem:[%s2 + $0x1b8] sm:$0xff]
        %v1969 = vld [vmem:[%s2 + $0x1c0] sm:$0xff]
        %v1970 = vld [vmem:[%s2 + $0x1c8] sm:$0xff]
        %v1971 = vld [vmem:[%s2 + $0x1d0] sm:$0xff]
        %v1972 = vld [vmem:[%s2 + $0x1d8] sm:$0xff]
        %v1973 = vld [vmem:[%s2 + $0x1e0] sm:$0xff]
        %v1974 = vld [vmem:[%s2 + $0x1e8] sm:$0xff]
        %v1975 = vld [vmem:[%s2 + $0x1f0] sm:$0xff]
        %v1976 = vld [vmem:[%s2 + $0x1f8] sm:$0xff]
        %vm1977 = vcmp.gt.f32.partialorder %v1913, 0.0
        %vm1978 = vcmp.gt.f32.partialorder %v1914, 0.0
        %vm1979 = vcmp.gt.f32.partialorder %v1915, 0.0
        %vm1980 = vcmp.gt.f32.partialorder %v1916, 0.0
        %vm1981 = vcmp.gt.f32.partialorder %v1917, 0.0
        %vm1982 = vcmp.gt.f32.partialorder %v1918, 0.0
        %vm1983 = vcmp.gt.f32.partialorder %v1919, 0.0
        %vm1984 = vcmp.gt.f32.partialorder %v1920, 0.0
        %vm1985 = vcmp.gt.f32.partialorder %v1921, 0.0
        %vm1986 = vcmp.gt.f32.partialorder %v1922, 0.0
        %vm1987 = vcmp.gt.f32.partialorder %v1923, 0.0
        %vm1988 = vcmp.gt.f32.partialorder %v1924, 0.0
        %vm1989 = vcmp.gt.f32.partialorder %v1925, 0.0
        %vm1990 = vcmp.gt.f32.partialorder %v1926, 0.0
        %vm1991 = vcmp.gt.f32.partialorder %v1927, 0.0
        %vm1992 = vcmp.gt.f32.partialorder %v1928, 0.0
        %vm1993 = vcmp.gt.f32.partialorder %v1929, 0.0
        %vm1994 = vcmp.gt.f32.partialorder %v1930, 0.0
        %vm1995 = vcmp.gt.f32.partialorder %v1931, 0.0
        %vm1996 = vcmp.gt.f32.partialorder %v1932, 0.0
        %vm1997 = vcmp.gt.f32.partialorder %v1933, 0.0
        %vm1998 = vcmp.gt.f32.partialorder %v1934, 0.0
        %vm1999 = vcmp.gt.f32.partialorder %v1935, 0.0
        %vm2000 = vcmp.gt.f32.partialorder %v1936, 0.0
        %vm2001 = vcmp.gt.f32.partialorder %v1937, 0.0
        %vm2002 = vcmp.gt.f32.partialorder %v1938, 0.0
        %vm2003 = vcmp.gt.f32.partialorder %v1939, 0.0
        %vm2004 = vcmp.gt.f32.partialorder %v1940, 0.0
        %vm2005 = vcmp.gt.f32.partialorder %v1941, 0.0
        %vm2006 = vcmp.gt.f32.partialorder %v1942, 0.0
        %vm2007 = vcmp.gt.f32.partialorder %v1943, 0.0
        %vm2008 = vcmp.gt.f32.partialorder %v1944, 0.0
        %vm2009 = vcmp.gt.f32.partialorder %v1945, 0.0
        %vm2010 = vcmp.gt.f32.partialorder %v1946, 0.0
        %vm2011 = vcmp.gt.f32.partialorder %v1947, 0.0
        %vm2012 = vcmp.gt.f32.partialorder %v1948, 0.0
        %vm2013 = vcmp.gt.f32.partialorder %v1949, 0.0
        %vm2014 = vcmp.gt.f32.partialorder %v1950, 0.0
        %vm2015 = vcmp.gt.f32.partialorder %v1951, 0.0
        %vm2016 = vcmp.gt.f32.partialorder %v1952, 0.0
        %vm2017 = vcmp.gt.f32.partialorder %v1953, 0.0
        %vm2018 = vcmp.gt.f32.partialorder %v1954, 0.0
        %vm2019 = vcmp.gt.f32.partialorder %v1955, 0.0
        %vm2020 = vcmp.gt.f32.partialorder %v1956, 0.0
        %vm2021 = vcmp.gt.f32.partialorder %v1957, 0.0
        %vm2022 = vcmp.gt.f32.partialorder %v1958, 0.0
        %vm2023 = vcmp.gt.f32.partialorder %v1959, 0.0
        %vm2024 = vcmp.gt.f32.partialorder %v1960, 0.0
        %vm2025 = vcmp.gt.f32.partialorder %v1961, 0.0
        %vm2026 = vcmp.gt.f32.partialorder %v1962, 0.0
        %vm2027 = vcmp.gt.f32.partialorder %v1963, 0.0
        %vm2028 = vcmp.gt.f32.partialorder %v1964, 0.0
        %vm2029 = vcmp.gt.f32.partialorder %v1965, 0.0
        %vm2030 = vcmp.gt.f32.partialorder %v1966, 0.0
        %vm2031 = vcmp.gt.f32.partialorder %v1967, 0.0
        %vm2032 = vcmp.gt.f32.partialorder %v1968, 0.0
        %vm2033 = vcmp.gt.f32.partialorder %v1969, 0.0
        %vm2034 = vcmp.gt.f32.partialorder %v1970, 0.0
        %vm2035 = vcmp.gt.f32.partialorder %v1971, 0.0
        %vm2036 = vcmp.gt.f32.partialorder %v1972, 0.0
        %vm2037 = vcmp.gt.f32.partialorder %v1973, 0.0
        %vm2038 = vcmp.gt.f32.partialorder %v1974, 0.0
        %vm2039 = vcmp.gt.f32.partialorder %v1975, 0.0
        %vm2040 = vcmp.gt.f32.partialorder %v1976, 0.0
        %v2041 = vrot.slane %v1849, 7
        %v2042 = vrot.slane %v1850, 7
        %v2043 = vrot.slane %v1851, 7
        %v2044 = vrot.slane %v1852, 7
        %v2045 = vrot.slane %v1853, 7
        %v2046 = vrot.slane %v1854, 7
        %v2047 = vrot.slane %v1855, 7
        %v2048 = vrot.slane %v1856, 7
        %v2049 = vrot.slane %v1857, 7
        %v2050 = vrot.slane %v1858, 7
        %v2051 = vrot.slane %v1859, 7
        %v2052 = vrot.slane %v1860, 7
        %v2053 = vrot.slane %v1861, 7
        %v2054 = vrot.slane %v1862, 7
        %v2055 = vrot.slane %v1863, 7
        %v2056 = vrot.slane %v1864, 7
        %v2057 = vrot.slane %v1865, 7
        %v2058 = vrot.slane %v1866, 7
        %v2059 = vrot.slane %v1867, 7
        %v2060 = vrot.slane %v1868, 7
        %v2061 = vrot.slane %v1869, 7
        %v2062 = vrot.slane %v1870, 7
        %v2063 = vrot.slane %v1871, 7
        %v2064 = vrot.slane %v1872, 7
        %v2065 = vrot.slane %v1873, 7
        %v2066 = vrot.slane %v1874, 7
        %v2067 = vrot.slane %v1875, 7
        %v2068 = vrot.slane %v1876, 7
        %v2069 = vrot.slane %v1877, 7
        %v2070 = vrot.slane %v1878, 7
        %v2071 = vrot.slane %v1879, 7
        %v2072 = vrot.slane %v1880, 7
        %v2073 = vrot.slane %v1881, 7
        %v2074 = vrot.slane %v1882, 7
        %v2075 = vrot.slane %v1883, 7
        %v2076 = vrot.slane %v1884, 7
        %v2077 = vrot.slane %v1885, 7
        %v2078 = vrot.slane %v1886, 7
        %v2079 = vrot.slane %v1887, 7
        %v2080 = vrot.slane %v1888, 7
        %v2081 = vrot.slane %v1889, 7
        %v2082 = vrot.slane %v1890, 7
        %v2083 = vrot.slane %v1891, 7
        %v2084 = vrot.slane %v1892, 7
        %v2085 = vrot.slane %v1893, 7
        %v2086 = vrot.slane %v1894, 7
        %v2087 = vrot.slane %v1895, 7
        %v2088 = vrot.slane %v1896, 7
        %v2089 = vrot.slane %v1897, 7
        %v2090 = vrot.slane %v1898, 7
        %v2091 = vrot.slane %v1899, 7
        %v2092 = vrot.slane %v1900, 7
        %v2093 = vrot.slane %v1901, 7
        %v2094 = vrot.slane %v1902, 7
        %v2095 = vrot.slane %v1903, 7
        %v2096 = vrot.slane %v1904, 7
        %v2097 = vrot.slane %v1905, 7
        %v2098 = vrot.slane %v1906, 7
        %v2099 = vrot.slane %v1907, 7
        %v2100 = vrot.slane %v1908, 7
        %v2101 = vrot.slane %v1909, 7
        %v2102 = vrot.slane %v1910, 7
        %v2103 = vrot.slane %v1911, 7
        %v2104 = vrot.slane %v1912, 7
        %v2105 = vlaneseq
        %v2106 = vshrl.u32 %v2105, 7
        %vm2107 = vcmp.lt.s32.totalorder %v2106, 1
        %v2108 = vsel %vm2107, %v2103, %v2104
        %v2109 = vsel %vm2107, %v2102, %v2103
        %v2110 = vsel %vm2107, %v2101, %v2102
        %v2111 = vsel %vm2107, %v2100, %v2101
        %v2112 = vsel %vm2107, %v2099, %v2100
        %v2113 = vsel %vm2107, %v2098, %v2099
        %v2114 = vsel %vm2107, %v2097, %v2098
        %v2115 = vsel %vm2107, %v2096, %v2097
        %v2116 = vsel %vm2107, %v2095, %v2096
        %v2117 = vsel %vm2107, %v2094, %v2095
        %v2118 = vsel %vm2107, %v2093, %v2094
        %v2119 = vsel %vm2107, %v2092, %v2093
        %v2120 = vsel %vm2107, %v2091, %v2092
        %v2121 = vsel %vm2107, %v2090, %v2091
        %v2122 = vsel %vm2107, %v2089, %v2090
        %v2123 = vsel %vm2107, %v2088, %v2089
        %v2124 = vsel %vm2107, %v2087, %v2088
        %v2125 = vsel %vm2107, %v2086, %v2087
        %v2126 = vsel %vm2107, %v2085, %v2086
        %v2127 = vsel %vm2107, %v2084, %v2085
        %v2128 = vsel %vm2107, %v2083, %v2084
        %v2129 = vsel %vm2107, %v2082, %v2083
        %v2130 = vsel %vm2107, %v2081, %v2082
        %v2131 = vsel %vm2107, %v2080, %v2081
        %v2132 = vsel %vm2107, %v2079, %v2080
        %v2133 = vsel %vm2107, %v2078, %v2079
        %v2134 = vsel %vm2107, %v2077, %v2078
        %v2135 = vsel %vm2107, %v2076, %v2077
        %v2136 = vsel %vm2107, %v2075, %v2076
        %v2137 = vsel %vm2107, %v2074, %v2075
        %v2138 = vsel %vm2107, %v2073, %v2074
        %v2139 = vsel %vm2107, %v2072, %v2073
        %v2140 = vsel %vm2107, %v2071, %v2072
        %v2141 = vsel %vm2107, %v2070, %v2071
        %v2142 = vsel %vm2107, %v2069, %v2070
        %v2143 = vsel %vm2107, %v2068, %v2069
        %v2144 = vsel %vm2107, %v2067, %v2068
        %v2145 = vsel %vm2107, %v2066, %v2067
        %v2146 = vsel %vm2107, %v2065, %v2066
        %v2147 = vsel %vm2107, %v2064, %v2065
        %v2148 = vsel %vm2107, %v2063, %v2064
        %v2149 = vsel %vm2107, %v2062, %v2063
        %v2150 = vsel %vm2107, %v2061, %v2062
        %v2151 = vsel %vm2107, %v2060, %v2061
        %v2152 = vsel %vm2107, %v2059, %v2060
        %v2153 = vsel %vm2107, %v2058, %v2059
        %v2154 = vsel %vm2107, %v2057, %v2058
        %v2155 = vsel %vm2107, %v2056, %v2057
        %v2156 = vsel %vm2107, %v2055, %v2056
        %v2157 = vsel %vm2107, %v2054, %v2055
        %v2158 = vsel %vm2107, %v2053, %v2054
        %v2159 = vsel %vm2107, %v2052, %v2053
        %v2160 = vsel %vm2107, %v2051, %v2052
        %v2161 = vsel %vm2107, %v2050, %v2051
        %v2162 = vsel %vm2107, %v2049, %v2050
        %v2163 = vsel %vm2107, %v2048, %v2049
        %v2164 = vsel %vm2107, %v2047, %v2048
        %v2165 = vsel %vm2107, %v2046, %v2047
        %v2166 = vsel %vm2107, %v2045, %v2046
        %v2167 = vsel %vm2107, %v2044, %v2045
        %v2168 = vsel %vm2107, %v2043, %v2044
        %v2169 = vsel %vm2107, %v2042, %v2043
        %v2170 = vsel %vm2107, %v2041, %v2042
        %v2171 = vsel %vm2107, %v2104, %v2041
        %v2172 = vsel %vm1977, 1, 0
        %v2173 = vsel %vm1978, 1, 0
        %v2174 = vsel %vm1979, 1, 0
        %v2175 = vsel %vm1980, 1, 0
        %v2176 = vsel %vm1981, 1, 0
        %v2177 = vsel %vm1982, 1, 0
        %v2178 = vsel %vm1983, 1, 0
        %v2179 = vsel %vm1984, 1, 0
        %v2180 = vsel %vm1985, 1, 0
        %v2181 = vsel %vm1986, 1, 0
        %v2182 = vsel %vm1987, 1, 0
        %v2183 = vsel %vm1988, 1, 0
        %v2184 = vsel %vm1989, 1, 0
        %v2185 = vsel %vm1990, 1, 0
        %v2186 = vsel %vm1991, 1, 0
        %v2187 = vsel %vm1992, 1, 0
        %v2188 = vsel %vm1993, 1, 0
        %v2189 = vsel %vm1994, 1, 0
        %v2190 = vsel %vm1995, 1, 0
        %v2191 = vsel %vm1996, 1, 0
        %v2192 = vsel %vm1997, 1, 0
        %v2193 = vsel %vm1998, 1, 0
        %v2194 = vsel %vm1999, 1, 0
        %v2195 = vsel %vm2000, 1, 0
        %v2196 = vsel %vm2001, 1, 0
        %v2197 = vsel %vm2002, 1, 0
        %v2198 = vsel %vm2003, 1, 0
        %v2199 = vsel %vm2004, 1, 0
        %v2200 = vsel %vm2005, 1, 0
        %v2201 = vsel %vm2006, 1, 0
        %v2202 = vsel %vm2007, 1, 0
        %v2203 = vsel %vm2008, 1, 0
        %v2204 = vsel %vm2009, 1, 0
        %v2205 = vsel %vm2010, 1, 0
        %v2206 = vsel %vm2011, 1, 0
        %v2207 = vsel %vm2012, 1, 0
        %v2208 = vsel %vm2013, 1, 0
        %v2209 = vsel %vm2014, 1, 0
        %v2210 = vsel %vm2015, 1, 0
        %v2211 = vsel %vm2016, 1, 0
        %v2212 = vsel %vm2017, 1, 0
        %v2213 = vsel %vm2018, 1, 0
        %v2214 = vsel %vm2019, 1, 0
        %v2215 = vsel %vm2020, 1, 0
        %v2216 = vsel %vm2021, 1, 0
        %v2217 = vsel %vm2022, 1, 0
        %v2218 = vsel %vm2023, 1, 0
        %v2219 = vsel %vm2024, 1, 0
        %v2220 = vsel %vm2025, 1, 0
        %v2221 = vsel %vm2026, 1, 0
        %v2222 = vsel %vm2027, 1, 0
        %v2223 = vsel %vm2028, 1, 0
        %v2224 = vsel %vm2029, 1, 0
        %v2225 = vsel %vm2030, 1, 0
        %v2226 = vsel %vm2031, 1, 0
        %v2227 = vsel %vm2032, 1, 0
        %v2228 = vsel %vm2033, 1, 0
        %v2229 = vsel %vm2034, 1, 0
        %v2230 = vsel %vm2035, 1, 0
        %v2231 = vsel %vm2036, 1, 0
        %v2232 = vsel %vm2037, 1, 0
        %v2233 = vsel %vm2038, 1, 0
        %v2234 = vsel %vm2039, 1, 0
        %v2235 = vsel %vm2040, 1, 0
        %2236 = vset.pattern.permute.xlu0 0
        %2237 = vperm.xlu0 %2236, %v2172
        %v2238 = vpop.permute.xlu0 %2237
        %2239 = vset.pattern.permute.xlu0 0
        %2240 = vperm.xlu0 %2239, %v2173
        %v2241 = vpop.permute.xlu0 %2240
        %2242 = vset.pattern.permute.xlu0 0
        %2243 = vperm.xlu0 %2242, %v2174
        %v2244 = vpop.permute.xlu0 %2243
        %2245 = vset.pattern.permute.xlu0 0
        %2246 = vperm.xlu0 %2245, %v2175
        %v2247 = vpop.permute.xlu0 %2246
        %2248 = vset.pattern.permute.xlu0 0
        %2249 = vperm.xlu0 %2248, %v2176
        %v2250 = vpop.permute.xlu0 %2249
        %2251 = vset.pattern.permute.xlu0 0
        %2252 = vperm.xlu0 %2251, %v2177
        %v2253 = vpop.permute.xlu0 %2252
        %2254 = vset.pattern.permute.xlu0 0
        %2255 = vperm.xlu0 %2254, %v2178
        %v2256 = vpop.permute.xlu0 %2255
        %2257 = vset.pattern.permute.xlu0 0
        %2258 = vperm.xlu0 %2257, %v2179
        %v2259 = vpop.permute.xlu0 %2258
        %2260 = vset.pattern.permute.xlu0 0
        %2261 = vperm.xlu0 %2260, %v2180
        %v2262 = vpop.permute.xlu0 %2261
        %2263 = vset.pattern.permute.xlu0 0
        %2264 = vperm.xlu0 %2263, %v2181
        %v2265 = vpop.permute.xlu0 %2264
        %2266 = vset.pattern.permute.xlu0 0
        %2267 = vperm.xlu0 %2266, %v2182
        %v2268 = vpop.permute.xlu0 %2267
        %2269 = vset.pattern.permute.xlu0 0
        %2270 = vperm.xlu0 %2269, %v2183
        %v2271 = vpop.permute.xlu0 %2270
        %2272 = vset.pattern.permute.xlu0 0
        %2273 = vperm.xlu0 %2272, %v2184
        %v2274 = vpop.permute.xlu0 %2273
        %2275 = vset.pattern.permute.xlu0 0
        %2276 = vperm.xlu0 %2275, %v2185
        %v2277 = vpop.permute.xlu0 %2276
        %2278 = vset.pattern.permute.xlu0 0
        %2279 = vperm.xlu0 %2278, %v2186
        %v2280 = vpop.permute.xlu0 %2279
        %2281 = vset.pattern.permute.xlu0 0
        %2282 = vperm.xlu0 %2281, %v2187
        %v2283 = vpop.permute.xlu0 %2282
        %2284 = vset.pattern.permute.xlu0 0
        %2285 = vperm.xlu0 %2284, %v2188
        %v2286 = vpop.permute.xlu0 %2285
        %2287 = vset.pattern.permute.xlu0 0
        %2288 = vperm.xlu0 %2287, %v2189
        %v2289 = vpop.permute.xlu0 %2288
        %2290 = vset.pattern.permute.xlu0 0
        %2291 = vperm.xlu0 %2290, %v2190
        %v2292 = vpop.permute.xlu0 %2291
        %2293 = vset.pattern.permute.xlu0 0
        %2294 = vperm.xlu0 %2293, %v2191
        %v2295 = vpop.permute.xlu0 %2294
        %2296 = vset.pattern.permute.xlu0 0
        %2297 = vperm.xlu0 %2296, %v2192
        %v2298 = vpop.permute.xlu0 %2297
        %2299 = vset.pattern.permute.xlu0 0
        %2300 = vperm.xlu0 %2299, %v2193
        %v2301 = vpop.permute.xlu0 %2300
        %2302 = vset.pattern.permute.xlu0 0
        %2303 = vperm.xlu0 %2302, %v2194
        %v2304 = vpop.permute.xlu0 %2303
        %2305 = vset.pattern.permute.xlu0 0
        %2306 = vperm.xlu0 %2305, %v2195
        %v2307 = vpop.permute.xlu0 %2306
        %2308 = vset.pattern.permute.xlu0 0
        %2309 = vperm.xlu0 %2308, %v2196
        %v2310 = vpop.permute.xlu0 %2309
        %2311 = vset.pattern.permute.xlu0 0
        %2312 = vperm.xlu0 %2311, %v2197
        %v2313 = vpop.permute.xlu0 %2312
        %2314 = vset.pattern.permute.xlu0 0
        %2315 = vperm.xlu0 %2314, %v2198
        %v2316 = vpop.permute.xlu0 %2315
        %2317 = vset.pattern.permute.xlu0 0
        %2318 = vperm.xlu0 %2317, %v2199
        %v2319 = vpop.permute.xlu0 %2318
        %2320 = vset.pattern.permute.xlu0 0
        %2321 = vperm.xlu0 %2320, %v2200
        %v2322 = vpop.permute.xlu0 %2321
        %2323 = vset.pattern.permute.xlu0 0
        %2324 = vperm.xlu0 %2323, %v2201
        %v2325 = vpop.permute.xlu0 %2324
        %2326 = vset.pattern.permute.xlu0 0
        %2327 = vperm.xlu0 %2326, %v2202
        %v2328 = vpop.permute.xlu0 %2327
        %2329 = vset.pattern.permute.xlu0 0
        %2330 = vperm.xlu0 %2329, %v2203
        %v2331 = vpop.permute.xlu0 %2330
        %2332 = vset.pattern.permute.xlu0 0
        %2333 = vperm.xlu0 %2332, %v2204
        %v2334 = vpop.permute.xlu0 %2333
        %2335 = vset.pattern.permute.xlu0 0
        %2336 = vperm.xlu0 %2335, %v2205
        %v2337 = vpop.permute.xlu0 %2336
        %2338 = vset.pattern.permute.xlu0 0
        %2339 = vperm.xlu0 %2338, %v2206
        %v2340 = vpop.permute.xlu0 %2339
        %2341 = vset.pattern.permute.xlu0 0
        %2342 = vperm.xlu0 %2341, %v2207
        %v2343 = vpop.permute.xlu0 %2342
        %2344 = vset.pattern.permute.xlu0 0
        %2345 = vperm.xlu0 %2344, %v2208
        %v2346 = vpop.permute.xlu0 %2345
        %2347 = vset.pattern.permute.xlu0 0
        %2348 = vperm.xlu0 %2347, %v2209
        %v2349 = vpop.permute.xlu0 %2348
        %2350 = vset.pattern.permute.xlu0 0
        %2351 = vperm.xlu0 %2350, %v2210
        %v2352 = vpop.permute.xlu0 %2351
        %2353 = vset.pattern.permute.xlu0 0
        %2354 = vperm.xlu0 %2353, %v2211
        %v2355 = vpop.permute.xlu0 %2354
        %2356 = vset.pattern.permute.xlu0 0
        %2357 = vperm.xlu0 %2356, %v2212
        %v2358 = vpop.permute.xlu0 %2357
        %2359 = vset.pattern.permute.xlu0 0
        %2360 = vperm.xlu0 %2359, %v2213
        %v2361 = vpop.permute.xlu0 %2360
        %2362 = vset.pattern.permute.xlu0 0
        %2363 = vperm.xlu0 %2362, %v2214
        %v2364 = vpop.permute.xlu0 %2363
        %2365 = vset.pattern.permute.xlu0 0
        %2366 = vperm.xlu0 %2365, %v2215
        %v2367 = vpop.permute.xlu0 %2366
        %2368 = vset.pattern.permute.xlu0 0
        %2369 = vperm.xlu0 %2368, %v2216
        %v2370 = vpop.permute.xlu0 %2369
        %2371 = vset.pattern.permute.xlu0 0
        %2372 = vperm.xlu0 %2371, %v2217
        %v2373 = vpop.permute.xlu0 %2372
        %2374 = vset.pattern.permute.xlu0 0
        %2375 = vperm.xlu0 %2374, %v2218
        %v2376 = vpop.permute.xlu0 %2375
        %2377 = vset.pattern.permute.xlu0 0
        %2378 = vperm.xlu0 %2377, %v2219
        %v2379 = vpop.permute.xlu0 %2378
        %2380 = vset.pattern.permute.xlu0 0
        %2381 = vperm.xlu0 %2380, %v2220
        %v2382 = vpop.permute.xlu0 %2381
        %2383 = vset.pattern.permute.xlu0 0
        %2384 = vperm.xlu0 %2383, %v2221
        %v2385 = vpop.permute.xlu0 %2384
        %2386 = vset.pattern.permute.xlu0 0
        %2387 = vperm.xlu0 %2386, %v2222
        %v2388 = vpop.permute.xlu0 %2387
        %2389 = vset.pattern.permute.xlu0 0
        %2390 = vperm.xlu0 %2389, %v2223
        %v2391 = vpop.permute.xlu0 %2390
        %2392 = vset.pattern.permute.xlu0 0
        %2393 = vperm.xlu0 %2392, %v2224
        %v2394 = vpop.permute.xlu0 %2393
        %2395 = vset.pattern.permute.xlu0 0
        %2396 = vperm.xlu0 %2395, %v2225
        %v2397 = vpop.permute.xlu0 %2396
        %2398 = vset.pattern.permute.xlu0 0
        %2399 = vperm.xlu0 %2398, %v2226
        %v2400 = vpop.permute.xlu0 %2399
        %2401 = vset.pattern.permute.xlu0 0
        %2402 = vperm.xlu0 %2401, %v2227
        %v2403 = vpop.permute.xlu0 %2402
        %2404 = vset.pattern.permute.xlu0 0
        %2405 = vperm.xlu0 %2404, %v2228
        %v2406 = vpop.permute.xlu0 %2405
        %2407 = vset.pattern.permute.xlu0 0
        %2408 = vperm.xlu0 %2407, %v2229
        %v2409 = vpop.permute.xlu0 %2408
        %2410 = vset.pattern.permute.xlu0 0
        %2411 = vperm.xlu0 %2410, %v2230
        %v2412 = vpop.permute.xlu0 %2411
        %2413 = vset.pattern.permute.xlu0 0
        %2414 = vperm.xlu0 %2413, %v2231
        %v2415 = vpop.permute.xlu0 %2414
        %2416 = vset.pattern.permute.xlu0 0
        %2417 = vperm.xlu0 %2416, %v2232
        %v2418 = vpop.permute.xlu0 %2417
        %2419 = vset.pattern.permute.xlu0 0
        %2420 = vperm.xlu0 %2419, %v2233
        %v2421 = vpop.permute.xlu0 %2420
        %2422 = vset.pattern.permute.xlu0 0
        %2423 = vperm.xlu0 %2422, %v2234
        %v2424 = vpop.permute.xlu0 %2423
        %2425 = vset.pattern.permute.xlu0 0
        %2426 = vperm.xlu0 %2425, %v2235
        %v2427 = vpop.permute.xlu0 %2426
        %vm2428 = vcmp.eq.s32.totalorder %v2238, 1
        %vm2429 = vcmp.eq.s32.totalorder %v2241, 1
        %vm2430 = vcmp.eq.s32.totalorder %v2244, 1
        %vm2431 = vcmp.eq.s32.totalorder %v2247, 1
        %vm2432 = vcmp.eq.s32.totalorder %v2250, 1
        %vm2433 = vcmp.eq.s32.totalorder %v2253, 1
        %vm2434 = vcmp.eq.s32.totalorder %v2256, 1
        %vm2435 = vcmp.eq.s32.totalorder %v2259, 1
        %vm2436 = vcmp.eq.s32.totalorder %v2262, 1
        %vm2437 = vcmp.eq.s32.totalorder %v2265, 1
        %vm2438 = vcmp.eq.s32.totalorder %v2268, 1
        %vm2439 = vcmp.eq.s32.totalorder %v2271, 1
        %vm2440 = vcmp.eq.s32.totalorder %v2274, 1
        %vm2441 = vcmp.eq.s32.totalorder %v2277, 1
        %vm2442 = vcmp.eq.s32.totalorder %v2280, 1
        %vm2443 = vcmp.eq.s32.totalorder %v2283, 1
        %vm2444 = vcmp.eq.s32.totalorder %v2286, 1
        %vm2445 = vcmp.eq.s32.totalorder %v2289, 1
        %vm2446 = vcmp.eq.s32.totalorder %v2292, 1
        %vm2447 = vcmp.eq.s32.totalorder %v2295, 1
        %vm2448 = vcmp.eq.s32.totalorder %v2298, 1
        %vm2449 = vcmp.eq.s32.totalorder %v2301, 1
        %vm2450 = vcmp.eq.s32.totalorder %v2304, 1
        %vm2451 = vcmp.eq.s32.totalorder %v2307, 1
        %vm2452 = vcmp.eq.s32.totalorder %v2310, 1
        %vm2453 = vcmp.eq.s32.totalorder %v2313, 1
        %vm2454 = vcmp.eq.s32.totalorder %v2316, 1
        %vm2455 = vcmp.eq.s32.totalorder %v2319, 1
        %vm2456 = vcmp.eq.s32.totalorder %v2322, 1
        %vm2457 = vcmp.eq.s32.totalorder %v2325, 1
        %vm2458 = vcmp.eq.s32.totalorder %v2328, 1
        %vm2459 = vcmp.eq.s32.totalorder %v2331, 1
        %vm2460 = vcmp.eq.s32.totalorder %v2334, 1
        %vm2461 = vcmp.eq.s32.totalorder %v2337, 1
        %vm2462 = vcmp.eq.s32.totalorder %v2340, 1
        %vm2463 = vcmp.eq.s32.totalorder %v2343, 1
        %vm2464 = vcmp.eq.s32.totalorder %v2346, 1
        %vm2465 = vcmp.eq.s32.totalorder %v2349, 1
        %vm2466 = vcmp.eq.s32.totalorder %v2352, 1
        %vm2467 = vcmp.eq.s32.totalorder %v2355, 1
        %vm2468 = vcmp.eq.s32.totalorder %v2358, 1
        %vm2469 = vcmp.eq.s32.totalorder %v2361, 1
        %vm2470 = vcmp.eq.s32.totalorder %v2364, 1
        %vm2471 = vcmp.eq.s32.totalorder %v2367, 1
        %vm2472 = vcmp.eq.s32.totalorder %v2370, 1
        %vm2473 = vcmp.eq.s32.totalorder %v2373, 1
        %vm2474 = vcmp.eq.s32.totalorder %v2376, 1
        %vm2475 = vcmp.eq.s32.totalorder %v2379, 1
        %vm2476 = vcmp.eq.s32.totalorder %v2382, 1
        %vm2477 = vcmp.eq.s32.totalorder %v2385, 1
        %vm2478 = vcmp.eq.s32.totalorder %v2388, 1
        %vm2479 = vcmp.eq.s32.totalorder %v2391, 1
        %vm2480 = vcmp.eq.s32.totalorder %v2394, 1
        %vm2481 = vcmp.eq.s32.totalorder %v2397, 1
        %vm2482 = vcmp.eq.s32.totalorder %v2400, 1
        %vm2483 = vcmp.eq.s32.totalorder %v2403, 1
        %vm2484 = vcmp.eq.s32.totalorder %v2406, 1
        %vm2485 = vcmp.eq.s32.totalorder %v2409, 1
        %vm2486 = vcmp.eq.s32.totalorder %v2412, 1
        %vm2487 = vcmp.eq.s32.totalorder %v2415, 1
        %vm2488 = vcmp.eq.s32.totalorder %v2418, 1
        %vm2489 = vcmp.eq.s32.totalorder %v2421, 1
        %vm2490 = vcmp.eq.s32.totalorder %v2424, 1
        %vm2491 = vcmp.eq.s32.totalorder %v2427, 1
        %v2492 = vsel %vm2428, %v2109, -1e+30
        %v2493 = vsel %vm2429, %v2108, -1e+30
        %v2494 = vsel %vm2430, %v2171, -1e+30
        %v2495 = vsel %vm2431, %v2170, -1e+30
        %v2496 = vsel %vm2432, %v2169, -1e+30
        %v2497 = vsel %vm2433, %v2168, -1e+30
        %v2498 = vsel %vm2434, %v2167, -1e+30
        %v2499 = vsel %vm2435, %v2166, -1e+30
        %v2500 = vsel %vm2436, %v2165, -1e+30
        %v2501 = vsel %vm2437, %v2164, -1e+30
        %v2502 = vsel %vm2438, %v2163, -1e+30
        %v2503 = vsel %vm2439, %v2162, -1e+30
        %v2504 = vsel %vm2440, %v2161, -1e+30
        %v2505 = vsel %vm2441, %v2160, -1e+30
        %v2506 = vsel %vm2442, %v2159, -1e+30
        %v2507 = vsel %vm2443, %v2158, -1e+30
        %v2508 = vsel %vm2444, %v2157, -1e+30
        %v2509 = vsel %vm2445, %v2156, -1e+30
        %v2510 = vsel %vm2446, %v2155, -1e+30
        %v2511 = vsel %vm2447, %v2154, -1e+30
        %v2512 = vsel %vm2448, %v2153, -1e+30
        %v2513 = vsel %vm2449, %v2152, -1e+30
        %v2514 = vsel %vm2450, %v2151, -1e+30
        %v2515 = vsel %vm2451, %v2150, -1e+30
        %v2516 = vsel %vm2452, %v2149, -1e+30
        %v2517 = vsel %vm2453, %v2148, -1e+30
        %v2518 = vsel %vm2454, %v2147, -1e+30
        %v2519 = vsel %vm2455, %v2146, -1e+30
        %v2520 = vsel %vm2456, %v2145, -1e+30
        %v2521 = vsel %vm2457, %v2144, -1e+30
        %v2522 = vsel %vm2458, %v2143, -1e+30
        %v2523 = vsel %vm2459, %v2142, -1e+30
        %v2524 = vsel %vm2460, %v2141, -1e+30
        %v2525 = vsel %vm2461, %v2140, -1e+30
        %v2526 = vsel %vm2462, %v2139, -1e+30
        %v2527 = vsel %vm2463, %v2138, -1e+30
        %v2528 = vsel %vm2464, %v2137, -1e+30
        %v2529 = vsel %vm2465, %v2136, -1e+30
        %v2530 = vsel %vm2466, %v2135, -1e+30
        %v2531 = vsel %vm2467, %v2134, -1e+30
        %v2532 = vsel %vm2468, %v2133, -1e+30
        %v2533 = vsel %vm2469, %v2132, -1e+30
        %v2534 = vsel %vm2470, %v2131, -1e+30
        %v2535 = vsel %vm2471, %v2130, -1e+30
        %v2536 = vsel %vm2472, %v2129, -1e+30
        %v2537 = vsel %vm2473, %v2128, -1e+30
        %v2538 = vsel %vm2474, %v2127, -1e+30
        %v2539 = vsel %vm2475, %v2126, -1e+30
        %v2540 = vsel %vm2476, %v2125, -1e+30
        %v2541 = vsel %vm2477, %v2124, -1e+30
        %v2542 = vsel %vm2478, %v2123, -1e+30
        %v2543 = vsel %vm2479, %v2122, -1e+30
        %v2544 = vsel %vm2480, %v2121, -1e+30
        %v2545 = vsel %vm2481, %v2120, -1e+30
        %v2546 = vsel %vm2482, %v2119, -1e+30
        %v2547 = vsel %vm2483, %v2118, -1e+30
        %v2548 = vsel %vm2484, %v2117, -1e+30
        %v2549 = vsel %vm2485, %v2116, -1e+30
        %v2550 = vsel %vm2486, %v2115, -1e+30
        %v2551 = vsel %vm2487, %v2114, -1e+30
        %v2552 = vsel %vm2488, %v2113, -1e+30
        %v2553 = vsel %vm2489, %v2112, -1e+30
        %v2554 = vsel %vm2490, %v2111, -1e+30
        %v2555 = vsel %vm2491, %v2110, -1e+30
        %2556 = vset.pattern.permute.xlu0 1
        %2557 = vperm.xlu0 %2556, %v2172
        %v2558 = vpop.permute.xlu0 %2557
        %2559 = vset.pattern.permute.xlu0 1
        %2560 = vperm.xlu0 %2559, %v2173
        %v2561 = vpop.permute.xlu0 %2560
        %2562 = vset.pattern.permute.xlu0 1
        %2563 = vperm.xlu0 %2562, %v2174
        %v2564 = vpop.permute.xlu0 %2563
        %2565 = vset.pattern.permute.xlu0 1
        %2566 = vperm.xlu0 %2565, %v2175
        %v2567 = vpop.permute.xlu0 %2566
        %2568 = vset.pattern.permute.xlu0 1
        %2569 = vperm.xlu0 %2568, %v2176
        %v2570 = vpop.permute.xlu0 %2569
        %2571 = vset.pattern.permute.xlu0 1
        %2572 = vperm.xlu0 %2571, %v2177
        %v2573 = vpop.permute.xlu0 %2572
        %2574 = vset.pattern.permute.xlu0 1
        %2575 = vperm.xlu0 %2574, %v2178
        %v2576 = vpop.permute.xlu0 %2575
        %2577 = vset.pattern.permute.xlu0 1
        %2578 = vperm.xlu0 %2577, %v2179
        %v2579 = vpop.permute.xlu0 %2578
        %2580 = vset.pattern.permute.xlu0 1
        %2581 = vperm.xlu0 %2580, %v2180
        %v2582 = vpop.permute.xlu0 %2581
        %2583 = vset.pattern.permute.xlu0 1
        %2584 = vperm.xlu0 %2583, %v2181
        %v2585 = vpop.permute.xlu0 %2584
        %2586 = vset.pattern.permute.xlu0 1
        %2587 = vperm.xlu0 %2586, %v2182
        %v2588 = vpop.permute.xlu0 %2587
        %2589 = vset.pattern.permute.xlu0 1
        %2590 = vperm.xlu0 %2589, %v2183
        %v2591 = vpop.permute.xlu0 %2590
        %2592 = vset.pattern.permute.xlu0 1
        %2593 = vperm.xlu0 %2592, %v2184
        %v2594 = vpop.permute.xlu0 %2593
        %2595 = vset.pattern.permute.xlu0 1
        %2596 = vperm.xlu0 %2595, %v2185
        %v2597 = vpop.permute.xlu0 %2596
        %2598 = vset.pattern.permute.xlu0 1
        %2599 = vperm.xlu0 %2598, %v2186
        %v2600 = vpop.permute.xlu0 %2599
        %2601 = vset.pattern.permute.xlu0 1
        %2602 = vperm.xlu0 %2601, %v2187
        %v2603 = vpop.permute.xlu0 %2602
        %2604 = vset.pattern.permute.xlu0 1
        %2605 = vperm.xlu0 %2604, %v2188
        %v2606 = vpop.permute.xlu0 %2605
        %2607 = vset.pattern.permute.xlu0 1
        %2608 = vperm.xlu0 %2607, %v2189
        %v2609 = vpop.permute.xlu0 %2608
        %2610 = vset.pattern.permute.xlu0 1
        %2611 = vperm.xlu0 %2610, %v2190
        %v2612 = vpop.permute.xlu0 %2611
        %2613 = vset.pattern.permute.xlu0 1
        %2614 = vperm.xlu0 %2613, %v2191
        %v2615 = vpop.permute.xlu0 %2614
        %2616 = vset.pattern.permute.xlu0 1
        %2617 = vperm.xlu0 %2616, %v2192
        %v2618 = vpop.permute.xlu0 %2617
        %2619 = vset.pattern.permute.xlu0 1
        %2620 = vperm.xlu0 %2619, %v2193
        %v2621 = vpop.permute.xlu0 %2620
        %2622 = vset.pattern.permute.xlu0 1
        %2623 = vperm.xlu0 %2622, %v2194
        %v2624 = vpop.permute.xlu0 %2623
        %2625 = vset.pattern.permute.xlu0 1
        %2626 = vperm.xlu0 %2625, %v2195
        %v2627 = vpop.permute.xlu0 %2626
        %2628 = vset.pattern.permute.xlu0 1
        %2629 = vperm.xlu0 %2628, %v2196
        %v2630 = vpop.permute.xlu0 %2629
        %2631 = vset.pattern.permute.xlu0 1
        %2632 = vperm.xlu0 %2631, %v2197
        %v2633 = vpop.permute.xlu0 %2632
        %2634 = vset.pattern.permute.xlu0 1
        %2635 = vperm.xlu0 %2634, %v2198
        %v2636 = vpop.permute.xlu0 %2635
        %2637 = vset.pattern.permute.xlu0 1
        %2638 = vperm.xlu0 %2637, %v2199
        %v2639 = vpop.permute.xlu0 %2638
        %2640 = vset.pattern.permute.xlu0 1
        %2641 = vperm.xlu0 %2640, %v2200
        %v2642 = vpop.permute.xlu0 %2641
        %2643 = vset.pattern.permute.xlu0 1
        %2644 = vperm.xlu0 %2643, %v2201
        %v2645 = vpop.permute.xlu0 %2644
        %2646 = vset.pattern.permute.xlu0 1
        %2647 = vperm.xlu0 %2646, %v2202
        %v2648 = vpop.permute.xlu0 %2647
        %2649 = vset.pattern.permute.xlu0 1
        %2650 = vperm.xlu0 %2649, %v2203
        %v2651 = vpop.permute.xlu0 %2650
        %2652 = vset.pattern.permute.xlu0 1
        %2653 = vperm.xlu0 %2652, %v2204
        %v2654 = vpop.permute.xlu0 %2653
        %2655 = vset.pattern.permute.xlu0 1
        %2656 = vperm.xlu0 %2655, %v2205
        %v2657 = vpop.permute.xlu0 %2656
        %2658 = vset.pattern.permute.xlu0 1
        %2659 = vperm.xlu0 %2658, %v2206
        %v2660 = vpop.permute.xlu0 %2659
        %2661 = vset.pattern.permute.xlu0 1
        %2662 = vperm.xlu0 %2661, %v2207
        %v2663 = vpop.permute.xlu0 %2662
        %2664 = vset.pattern.permute.xlu0 1
        %2665 = vperm.xlu0 %2664, %v2208
        %v2666 = vpop.permute.xlu0 %2665
        %2667 = vset.pattern.permute.xlu0 1
        %2668 = vperm.xlu0 %2667, %v2209
        %v2669 = vpop.permute.xlu0 %2668
        %2670 = vset.pattern.permute.xlu0 1
        %2671 = vperm.xlu0 %2670, %v2210
        %v2672 = vpop.permute.xlu0 %2671
        %2673 = vset.pattern.permute.xlu0 1
        %2674 = vperm.xlu0 %2673, %v2211
        %v2675 = vpop.permute.xlu0 %2674
        %2676 = vset.pattern.permute.xlu0 1
        %2677 = vperm.xlu0 %2676, %v2212
        %v2678 = vpop.permute.xlu0 %2677
        %2679 = vset.pattern.permute.xlu0 1
        %2680 = vperm.xlu0 %2679, %v2213
        %v2681 = vpop.permute.xlu0 %2680
        %2682 = vset.pattern.permute.xlu0 1
        %2683 = vperm.xlu0 %2682, %v2214
        %v2684 = vpop.permute.xlu0 %2683
        %2685 = vset.pattern.permute.xlu0 1
        %2686 = vperm.xlu0 %2685, %v2215
        %v2687 = vpop.permute.xlu0 %2686
        %2688 = vset.pattern.permute.xlu0 1
        %2689 = vperm.xlu0 %2688, %v2216
        %v2690 = vpop.permute.xlu0 %2689
        %2691 = vset.pattern.permute.xlu0 1
        %2692 = vperm.xlu0 %2691, %v2217
        %v2693 = vpop.permute.xlu0 %2692
        %2694 = vset.pattern.permute.xlu0 1
        %2695 = vperm.xlu0 %2694, %v2218
        %v2696 = vpop.permute.xlu0 %2695
        %2697 = vset.pattern.permute.xlu0 1
        %2698 = vperm.xlu0 %2697, %v2219
        %v2699 = vpop.permute.xlu0 %2698
        %2700 = vset.pattern.permute.xlu0 1
        %2701 = vperm.xlu0 %2700, %v2220
        %v2702 = vpop.permute.xlu0 %2701
        %2703 = vset.pattern.permute.xlu0 1
        %2704 = vperm.xlu0 %2703, %v2221
        %v2705 = vpop.permute.xlu0 %2704
        %2706 = vset.pattern.permute.xlu0 1
        %2707 = vperm.xlu0 %2706, %v2222
        %v2708 = vpop.permute.xlu0 %2707
        %2709 = vset.pattern.permute.xlu0 1
        %2710 = vperm.xlu0 %2709, %v2223
        %v2711 = vpop.permute.xlu0 %2710
        %2712 = vset.pattern.permute.xlu0 1
        %2713 = vperm.xlu0 %2712, %v2224
        %v2714 = vpop.permute.xlu0 %2713
        %2715 = vset.pattern.permute.xlu0 1
        %2716 = vperm.xlu0 %2715, %v2225
        %v2717 = vpop.permute.xlu0 %2716
        %2718 = vset.pattern.permute.xlu0 1
        %2719 = vperm.xlu0 %2718, %v2226
        %v2720 = vpop.permute.xlu0 %2719
        %2721 = vset.pattern.permute.xlu0 1
        %2722 = vperm.xlu0 %2721, %v2227
        %v2723 = vpop.permute.xlu0 %2722
        %2724 = vset.pattern.permute.xlu0 1
        %2725 = vperm.xlu0 %2724, %v2228
        %v2726 = vpop.permute.xlu0 %2725
        %2727 = vset.pattern.permute.xlu0 1
        %2728 = vperm.xlu0 %2727, %v2229
        %v2729 = vpop.permute.xlu0 %2728
        %2730 = vset.pattern.permute.xlu0 1
        %2731 = vperm.xlu0 %2730, %v2230
        %v2732 = vpop.permute.xlu0 %2731
        %2733 = vset.pattern.permute.xlu0 1
        %2734 = vperm.xlu0 %2733, %v2231
        %v2735 = vpop.permute.xlu0 %2734
        %2736 = vset.pattern.permute.xlu0 1
        %2737 = vperm.xlu0 %2736, %v2232
        %v2738 = vpop.permute.xlu0 %2737
        %2739 = vset.pattern.permute.xlu0 1
        %2740 = vperm.xlu0 %2739, %v2233
        %v2741 = vpop.permute.xlu0 %2740
        %2742 = vset.pattern.permute.xlu0 1
        %2743 = vperm.xlu0 %2742, %v2234
        %v2744 = vpop.permute.xlu0 %2743
        %2745 = vset.pattern.permute.xlu0 1
        %2746 = vperm.xlu0 %2745, %v2235
        %v2747 = vpop.permute.xlu0 %2746
        %vm2748 = vcmp.eq.s32.totalorder %v2558, 1
        %vm2749 = vcmp.eq.s32.totalorder %v2561, 1
        %vm2750 = vcmp.eq.s32.totalorder %v2564, 1
        %vm2751 = vcmp.eq.s32.totalorder %v2567, 1
        %vm2752 = vcmp.eq.s32.totalorder %v2570, 1
        %vm2753 = vcmp.eq.s32.totalorder %v2573, 1
        %vm2754 = vcmp.eq.s32.totalorder %v2576, 1
        %vm2755 = vcmp.eq.s32.totalorder %v2579, 1
        %vm2756 = vcmp.eq.s32.totalorder %v2582, 1
        %vm2757 = vcmp.eq.s32.totalorder %v2585, 1
        %vm2758 = vcmp.eq.s32.totalorder %v2588, 1
        %vm2759 = vcmp.eq.s32.totalorder %v2591, 1
        %vm2760 = vcmp.eq.s32.totalorder %v2594, 1
        %vm2761 = vcmp.eq.s32.totalorder %v2597, 1
        %vm2762 = vcmp.eq.s32.totalorder %v2600, 1
        %vm2763 = vcmp.eq.s32.totalorder %v2603, 1
        %vm2764 = vcmp.eq.s32.totalorder %v2606, 1
        %vm2765 = vcmp.eq.s32.totalorder %v2609, 1
        %vm2766 = vcmp.eq.s32.totalorder %v2612, 1
        %vm2767 = vcmp.eq.s32.totalorder %v2615, 1
        %vm2768 = vcmp.eq.s32.totalorder %v2618, 1
        %vm2769 = vcmp.eq.s32.totalorder %v2621, 1
        %vm2770 = vcmp.eq.s32.totalorder %v2624, 1
        %vm2771 = vcmp.eq.s32.totalorder %v2627, 1
        %vm2772 = vcmp.eq.s32.totalorder %v2630, 1
        %vm2773 = vcmp.eq.s32.totalorder %v2633, 1
        %vm2774 = vcmp.eq.s32.totalorder %v2636, 1
        %vm2775 = vcmp.eq.s32.totalorder %v2639, 1
        %vm2776 = vcmp.eq.s32.totalorder %v2642, 1
        %vm2777 = vcmp.eq.s32.totalorder %v2645, 1
        %vm2778 = vcmp.eq.s32.totalorder %v2648, 1
        %vm2779 = vcmp.eq.s32.totalorder %v2651, 1
        %vm2780 = vcmp.eq.s32.totalorder %v2654, 1
        %vm2781 = vcmp.eq.s32.totalorder %v2657, 1
        %vm2782 = vcmp.eq.s32.totalorder %v2660, 1
        %vm2783 = vcmp.eq.s32.totalorder %v2663, 1
        %vm2784 = vcmp.eq.s32.totalorder %v2666, 1
        %vm2785 = vcmp.eq.s32.totalorder %v2669, 1
        %vm2786 = vcmp.eq.s32.totalorder %v2672, 1
        %vm2787 = vcmp.eq.s32.totalorder %v2675, 1
        %vm2788 = vcmp.eq.s32.totalorder %v2678, 1
        %vm2789 = vcmp.eq.s32.totalorder %v2681, 1
        %vm2790 = vcmp.eq.s32.totalorder %v2684, 1
        %vm2791 = vcmp.eq.s32.totalorder %v2687, 1
        %vm2792 = vcmp.eq.s32.totalorder %v2690, 1
        %vm2793 = vcmp.eq.s32.totalorder %v2693, 1
        %vm2794 = vcmp.eq.s32.totalorder %v2696, 1
        %vm2795 = vcmp.eq.s32.totalorder %v2699, 1
        %vm2796 = vcmp.eq.s32.totalorder %v2702, 1
        %vm2797 = vcmp.eq.s32.totalorder %v2705, 1
        %vm2798 = vcmp.eq.s32.totalorder %v2708, 1
        %vm2799 = vcmp.eq.s32.totalorder %v2711, 1
        %vm2800 = vcmp.eq.s32.totalorder %v2714, 1
        %vm2801 = vcmp.eq.s32.totalorder %v2717, 1
        %vm2802 = vcmp.eq.s32.totalorder %v2720, 1
        %vm2803 = vcmp.eq.s32.totalorder %v2723, 1
        %vm2804 = vcmp.eq.s32.totalorder %v2726, 1
        %vm2805 = vcmp.eq.s32.totalorder %v2729, 1
        %vm2806 = vcmp.eq.s32.totalorder %v2732, 1
        %vm2807 = vcmp.eq.s32.totalorder %v2735, 1
        %vm2808 = vcmp.eq.s32.totalorder %v2738, 1
        %vm2809 = vcmp.eq.s32.totalorder %v2741, 1
        %vm2810 = vcmp.eq.s32.totalorder %v2744, 1
        %vm2811 = vcmp.eq.s32.totalorder %v2747, 1
        %v2812 = vsel %vm2748, %v1911, -1e+30
        %v2813 = vsel %vm2749, %v1912, -1e+30
        %v2814 = vsel %vm2750, %v1849, -1e+30
        %v2815 = vsel %vm2751, %v1850, -1e+30
        %v2816 = vsel %vm2752, %v1851, -1e+30
        %v2817 = vsel %vm2753, %v1852, -1e+30
        %v2818 = vsel %vm2754, %v1853, -1e+30
        %v2819 = vsel %vm2755, %v1854, -1e+30
        %v2820 = vsel %vm2756, %v1855, -1e+30
        %v2821 = vsel %vm2757, %v1856, -1e+30
        %v2822 = vsel %vm2758, %v1857, -1e+30
        %v2823 = vsel %vm2759, %v1858, -1e+30
        %v2824 = vsel %vm2760, %v1859, -1e+30
        %v2825 = vsel %vm2761, %v1860, -1e+30
        %v2826 = vsel %vm2762, %v1861, -1e+30
        %v2827 = vsel %vm2763, %v1862, -1e+30
        %v2828 = vsel %vm2764, %v1863, -1e+30
        %v2829 = vsel %vm2765, %v1864, -1e+30
        %v2830 = vsel %vm2766, %v1865, -1e+30
        %v2831 = vsel %vm2767, %v1866, -1e+30
        %v2832 = vsel %vm2768, %v1867, -1e+30
        %v2833 = vsel %vm2769, %v1868, -1e+30
        %v2834 = vsel %vm2770, %v1869, -1e+30
        %v2835 = vsel %vm2771, %v1870, -1e+30
        %v2836 = vsel %vm2772, %v1871, -1e+30
        %v2837 = vsel %vm2773, %v1872, -1e+30
        %v2838 = vsel %vm2774, %v1873, -1e+30
        %v2839 = vsel %vm2775, %v1874, -1e+30
        %v2840 = vsel %vm2776, %v1875, -1e+30
        %v2841 = vsel %vm2777, %v1876, -1e+30
        %v2842 = vsel %vm2778, %v1877, -1e+30
        %v2843 = vsel %vm2779, %v1878, -1e+30
        %v2844 = vsel %vm2780, %v1879, -1e+30
        %v2845 = vsel %vm2781, %v1880, -1e+30
        %v2846 = vsel %vm2782, %v1881, -1e+30
        %v2847 = vsel %vm2783, %v1882, -1e+30
        %v2848 = vsel %vm2784, %v1883, -1e+30
        %v2849 = vsel %vm2785, %v1884, -1e+30
        %v2850 = vsel %vm2786, %v1885, -1e+30
        %v2851 = vsel %vm2787, %v1886, -1e+30
        %v2852 = vsel %vm2788, %v1887, -1e+30
        %v2853 = vsel %vm2789, %v1888, -1e+30
        %v2854 = vsel %vm2790, %v1889, -1e+30
        %v2855 = vsel %vm2791, %v1890, -1e+30
        %v2856 = vsel %vm2792, %v1891, -1e+30
        %v2857 = vsel %vm2793, %v1892, -1e+30
        %v2858 = vsel %vm2794, %v1893, -1e+30
        %v2859 = vsel %vm2795, %v1894, -1e+30
        %v2860 = vsel %vm2796, %v1895, -1e+30
        %v2861 = vsel %vm2797, %v1896, -1e+30
        %v2862 = vsel %vm2798, %v1897, -1e+30
        %v2863 = vsel %vm2799, %v1898, -1e+30
        %v2864 = vsel %vm2800, %v1899, -1e+30
        %v2865 = vsel %vm2801, %v1900, -1e+30
        %v2866 = vsel %vm2802, %v1901, -1e+30
        %v2867 = vsel %vm2803, %v1902, -1e+30
        %v2868 = vsel %vm2804, %v1903, -1e+30
        %v2869 = vsel %vm2805, %v1904, -1e+30
        %v2870 = vsel %vm2806, %v1905, -1e+30
        %v2871 = vsel %vm2807, %v1906, -1e+30
        %v2872 = vsel %vm2808, %v1907, -1e+30
        %v2873 = vsel %vm2809, %v1908, -1e+30
        %v2874 = vsel %vm2810, %v1909, -1e+30
        %v2875 = vsel %vm2811, %v1910, -1e+30
        %v2876 = vmax.f32 %v2492, %v2812
        %v2877 = vmax.f32 %v2493, %v2813
        %v2878 = vmax.f32 %v2494, %v2814
        %v2879 = vmax.f32 %v2495, %v2815
        %v2880 = vmax.f32 %v2496, %v2816
        %v2881 = vmax.f32 %v2497, %v2817
        %v2882 = vmax.f32 %v2498, %v2818
        %v2883 = vmax.f32 %v2499, %v2819
        %v2884 = vmax.f32 %v2500, %v2820
        %v2885 = vmax.f32 %v2501, %v2821
        %v2886 = vmax.f32 %v2502, %v2822
        %v2887 = vmax.f32 %v2503, %v2823
        %v2888 = vmax.f32 %v2504, %v2824
        %v2889 = vmax.f32 %v2505, %v2825
        %v2890 = vmax.f32 %v2506, %v2826
        %v2891 = vmax.f32 %v2507, %v2827
        %v2892 = vmax.f32 %v2508, %v2828
        %v2893 = vmax.f32 %v2509, %v2829
        %v2894 = vmax.f32 %v2510, %v2830
        %v2895 = vmax.f32 %v2511, %v2831
        %v2896 = vmax.f32 %v2512, %v2832
        %v2897 = vmax.f32 %v2513, %v2833
        %v2898 = vmax.f32 %v2514, %v2834
        %v2899 = vmax.f32 %v2515, %v2835
        %v2900 = vmax.f32 %v2516, %v2836
        %v2901 = vmax.f32 %v2517, %v2837
        %v2902 = vmax.f32 %v2518, %v2838
        %v2903 = vmax.f32 %v2519, %v2839
        %v2904 = vmax.f32 %v2520, %v2840
        %v2905 = vmax.f32 %v2521, %v2841
        %v2906 = vmax.f32 %v2522, %v2842
        %v2907 = vmax.f32 %v2523, %v2843
        %v2908 = vmax.f32 %v2524, %v2844
        %v2909 = vmax.f32 %v2525, %v2845
        %v2910 = vmax.f32 %v2526, %v2846
        %v2911 = vmax.f32 %v2527, %v2847
        %v2912 = vmax.f32 %v2528, %v2848
        %v2913 = vmax.f32 %v2529, %v2849
        %v2914 = vmax.f32 %v2530, %v2850
        %v2915 = vmax.f32 %v2531, %v2851
        %v2916 = vmax.f32 %v2532, %v2852
        %v2917 = vmax.f32 %v2533, %v2853
        %v2918 = vmax.f32 %v2534, %v2854
        %v2919 = vmax.f32 %v2535, %v2855
        %v2920 = vmax.f32 %v2536, %v2856
        %v2921 = vmax.f32 %v2537, %v2857
        %v2922 = vmax.f32 %v2538, %v2858
        %v2923 = vmax.f32 %v2539, %v2859
        %v2924 = vmax.f32 %v2540, %v2860
        %v2925 = vmax.f32 %v2541, %v2861
        %v2926 = vmax.f32 %v2542, %v2862
        %v2927 = vmax.f32 %v2543, %v2863
        %v2928 = vmax.f32 %v2544, %v2864
        %v2929 = vmax.f32 %v2545, %v2865
        %v2930 = vmax.f32 %v2546, %v2866
        %v2931 = vmax.f32 %v2547, %v2867
        %v2932 = vmax.f32 %v2548, %v2868
        %v2933 = vmax.f32 %v2549, %v2869
        %v2934 = vmax.f32 %v2550, %v2870
        %v2935 = vmax.f32 %v2551, %v2871
        %v2936 = vmax.f32 %v2552, %v2872
        %v2937 = vmax.f32 %v2553, %v2873
        %v2938 = vmax.f32 %v2554, %v2874
        %v2939 = vmax.f32 %v2555, %v2875
        %v2940 = vrot.slane %v1849, 1
        %v2941 = vrot.slane %v1850, 1
        %v2942 = vrot.slane %v1851, 1
        %v2943 = vrot.slane %v1852, 1
        %v2944 = vrot.slane %v1853, 1
        %v2945 = vrot.slane %v1854, 1
        %v2946 = vrot.slane %v1855, 1
        %v2947 = vrot.slane %v1856, 1
        %v2948 = vrot.slane %v1857, 1
        %v2949 = vrot.slane %v1858, 1
        %v2950 = vrot.slane %v1859, 1
        %v2951 = vrot.slane %v1860, 1
        %v2952 = vrot.slane %v1861, 1
        %v2953 = vrot.slane %v1862, 1
        %v2954 = vrot.slane %v1863, 1
        %v2955 = vrot.slane %v1864, 1
        %v2956 = vrot.slane %v1865, 1
        %v2957 = vrot.slane %v1866, 1
        %v2958 = vrot.slane %v1867, 1
        %v2959 = vrot.slane %v1868, 1
        %v2960 = vrot.slane %v1869, 1
        %v2961 = vrot.slane %v1870, 1
        %v2962 = vrot.slane %v1871, 1
        %v2963 = vrot.slane %v1872, 1
        %v2964 = vrot.slane %v1873, 1
        %v2965 = vrot.slane %v1874, 1
        %v2966 = vrot.slane %v1875, 1
        %v2967 = vrot.slane %v1876, 1
        %v2968 = vrot.slane %v1877, 1
        %v2969 = vrot.slane %v1878, 1
        %v2970 = vrot.slane %v1879, 1
        %v2971 = vrot.slane %v1880, 1
        %v2972 = vrot.slane %v1881, 1
        %v2973 = vrot.slane %v1882, 1
        %v2974 = vrot.slane %v1883, 1
        %v2975 = vrot.slane %v1884, 1
        %v2976 = vrot.slane %v1885, 1
        %v2977 = vrot.slane %v1886, 1
        %v2978 = vrot.slane %v1887, 1
        %v2979 = vrot.slane %v1888, 1
        %v2980 = vrot.slane %v1889, 1
        %v2981 = vrot.slane %v1890, 1
        %v2982 = vrot.slane %v1891, 1
        %v2983 = vrot.slane %v1892, 1
        %v2984 = vrot.slane %v1893, 1
        %v2985 = vrot.slane %v1894, 1
        %v2986 = vrot.slane %v1895, 1
        %v2987 = vrot.slane %v1896, 1
        %v2988 = vrot.slane %v1897, 1
        %v2989 = vrot.slane %v1898, 1
        %v2990 = vrot.slane %v1899, 1
        %v2991 = vrot.slane %v1900, 1
        %v2992 = vrot.slane %v1901, 1
        %v2993 = vrot.slane %v1902, 1
        %v2994 = vrot.slane %v1903, 1
        %v2995 = vrot.slane %v1904, 1
        %v2996 = vrot.slane %v1905, 1
        %v2997 = vrot.slane %v1906, 1
        %v2998 = vrot.slane %v1907, 1
        %v2999 = vrot.slane %v1908, 1
        %v3000 = vrot.slane %v1909, 1
        %v3001 = vrot.slane %v1910, 1
        %v3002 = vrot.slane %v1911, 1
        %v3003 = vrot.slane %v1912, 1
        %vm3004 = vcmp.lt.s32.totalorder %v2106, 7
        %v3005 = vsel %vm3004, %v3002, %v3003
        %v3006 = vsel %vm3004, %v3001, %v3002
        %v3007 = vsel %vm3004, %v3000, %v3001
        %v3008 = vsel %vm3004, %v2999, %v3000
        %v3009 = vsel %vm3004, %v2998, %v2999
        %v3010 = vsel %vm3004, %v2997, %v2998
        %v3011 = vsel %vm3004, %v2996, %v2997
        %v3012 = vsel %vm3004, %v2995, %v2996
        %v3013 = vsel %vm3004, %v2994, %v2995
        %v3014 = vsel %vm3004, %v2993, %v2994
        %v3015 = vsel %vm3004, %v2992, %v2993
        %v3016 = vsel %vm3004, %v2991, %v2992
        %v3017 = vsel %vm3004, %v2990, %v2991
        %v3018 = vsel %vm3004, %v2989, %v2990
        %v3019 = vsel %vm3004, %v2988, %v2989
        %v3020 = vsel %vm3004, %v2987, %v2988
        %v3021 = vsel %vm3004, %v2986, %v2987
        %v3022 = vsel %vm3004, %v2985, %v2986
        %v3023 = vsel %vm3004, %v2984, %v2985
        %v3024 = vsel %vm3004, %v2983, %v2984
        %v3025 = vsel %vm3004, %v2982, %v2983
        %v3026 = vsel %vm3004, %v2981, %v2982
        %v3027 = vsel %vm3004, %v2980, %v2981
        %v3028 = vsel %vm3004, %v2979, %v2980
        %v3029 = vsel %vm3004, %v2978, %v2979
        %v3030 = vsel %vm3004, %v2977, %v2978
        %v3031 = vsel %vm3004, %v2976, %v2977
        %v3032 = vsel %vm3004, %v2975, %v2976
        %v3033 = vsel %vm3004, %v2974, %v2975
        %v3034 = vsel %vm3004, %v2973, %v2974
        %v3035 = vsel %vm3004, %v2972, %v2973
        %v3036 = vsel %vm3004, %v2971, %v2972
        %v3037 = vsel %vm3004, %v2970, %v2971
        %v3038 = vsel %vm3004, %v2969, %v2970
        %v3039 = vsel %vm3004, %v2968, %v2969
        %v3040 = vsel %vm3004, %v2967, %v2968
        %v3041 = vsel %vm3004, %v2966, %v2967
        %v3042 = vsel %vm3004, %v2965, %v2966
        %v3043 = vsel %vm3004, %v2964, %v2965
        %v3044 = vsel %vm3004, %v2963, %v2964
        %v3045 = vsel %vm3004, %v2962, %v2963
        %v3046 = vsel %vm3004, %v2961, %v2962
        %v3047 = vsel %vm3004, %v2960, %v2961
        %v3048 = vsel %vm3004, %v2959, %v2960
        %v3049 = vsel %vm3004, %v2958, %v2959
        %v3050 = vsel %vm3004, %v2957, %v2958
        %v3051 = vsel %vm3004, %v2956, %v2957
        %v3052 = vsel %vm3004, %v2955, %v2956
        %v3053 = vsel %vm3004, %v2954, %v2955
        %v3054 = vsel %vm3004, %v2953, %v2954
        %v3055 = vsel %vm3004, %v2952, %v2953
        %v3056 = vsel %vm3004, %v2951, %v2952
        %v3057 = vsel %vm3004, %v2950, %v2951
        %v3058 = vsel %vm3004, %v2949, %v2950
        %v3059 = vsel %vm3004, %v2948, %v2949
        %v3060 = vsel %vm3004, %v2947, %v2948
        %v3061 = vsel %vm3004, %v2946, %v2947
        %v3062 = vsel %vm3004, %v2945, %v2946
        %v3063 = vsel %vm3004, %v2944, %v2945
        %v3064 = vsel %vm3004, %v2943, %v2944
        %v3065 = vsel %vm3004, %v2942, %v2943
        %v3066 = vsel %vm3004, %v2941, %v2942
        %v3067 = vsel %vm3004, %v2940, %v2941
        %v3068 = vsel %vm3004, %v3003, %v2940
        %3069 = vset.pattern.permute.xlu0 2
        %3070 = vperm.xlu0 %3069, %v2172
        %v3071 = vpop.permute.xlu0 %3070
        %3072 = vset.pattern.permute.xlu0 2
        %3073 = vperm.xlu0 %3072, %v2173
        %v3074 = vpop.permute.xlu0 %3073
        %3075 = vset.pattern.permute.xlu0 2
        %3076 = vperm.xlu0 %3075, %v2174
        %v3077 = vpop.permute.xlu0 %3076
        %3078 = vset.pattern.permute.xlu0 2
        %3079 = vperm.xlu0 %3078, %v2175
        %v3080 = vpop.permute.xlu0 %3079
        %3081 = vset.pattern.permute.xlu0 2
        %3082 = vperm.xlu0 %3081, %v2176
        %v3083 = vpop.permute.xlu0 %3082
        %3084 = vset.pattern.permute.xlu0 2
        %3085 = vperm.xlu0 %3084, %v2177
        %v3086 = vpop.permute.xlu0 %3085
        %3087 = vset.pattern.permute.xlu0 2
        %3088 = vperm.xlu0 %3087, %v2178
        %v3089 = vpop.permute.xlu0 %3088
        %3090 = vset.pattern.permute.xlu0 2
        %3091 = vperm.xlu0 %3090, %v2179
        %v3092 = vpop.permute.xlu0 %3091
        %3093 = vset.pattern.permute.xlu0 2
        %3094 = vperm.xlu0 %3093, %v2180
        %v3095 = vpop.permute.xlu0 %3094
        %3096 = vset.pattern.permute.xlu0 2
        %3097 = vperm.xlu0 %3096, %v2181
        %v3098 = vpop.permute.xlu0 %3097
        %3099 = vset.pattern.permute.xlu0 2
        %3100 = vperm.xlu0 %3099, %v2182
        %v3101 = vpop.permute.xlu0 %3100
        %3102 = vset.pattern.permute.xlu0 2
        %3103 = vperm.xlu0 %3102, %v2183
        %v3104 = vpop.permute.xlu0 %3103
        %3105 = vset.pattern.permute.xlu0 2
        %3106 = vperm.xlu0 %3105, %v2184
        %v3107 = vpop.permute.xlu0 %3106
        %3108 = vset.pattern.permute.xlu0 2
        %3109 = vperm.xlu0 %3108, %v2185
        %v3110 = vpop.permute.xlu0 %3109
        %3111 = vset.pattern.permute.xlu0 2
        %3112 = vperm.xlu0 %3111, %v2186
        %v3113 = vpop.permute.xlu0 %3112
        %3114 = vset.pattern.permute.xlu0 2
        %3115 = vperm.xlu0 %3114, %v2187
        %v3116 = vpop.permute.xlu0 %3115
        %3117 = vset.pattern.permute.xlu0 2
        %3118 = vperm.xlu0 %3117, %v2188
        %v3119 = vpop.permute.xlu0 %3118
        %3120 = vset.pattern.permute.xlu0 2
        %3121 = vperm.xlu0 %3120, %v2189
        %v3122 = vpop.permute.xlu0 %3121
        %3123 = vset.pattern.permute.xlu0 2
        %3124 = vperm.xlu0 %3123, %v2190
        %v3125 = vpop.permute.xlu0 %3124
        %3126 = vset.pattern.permute.xlu0 2
        %3127 = vperm.xlu0 %3126, %v2191
        %v3128 = vpop.permute.xlu0 %3127
        %3129 = vset.pattern.permute.xlu0 2
        %3130 = vperm.xlu0 %3129, %v2192
        %v3131 = vpop.permute.xlu0 %3130
        %3132 = vset.pattern.permute.xlu0 2
        %3133 = vperm.xlu0 %3132, %v2193
        %v3134 = vpop.permute.xlu0 %3133
        %3135 = vset.pattern.permute.xlu0 2
        %3136 = vperm.xlu0 %3135, %v2194
        %v3137 = vpop.permute.xlu0 %3136
        %3138 = vset.pattern.permute.xlu0 2
        %3139 = vperm.xlu0 %3138, %v2195
        %v3140 = vpop.permute.xlu0 %3139
        %3141 = vset.pattern.permute.xlu0 2
        %3142 = vperm.xlu0 %3141, %v2196
        %v3143 = vpop.permute.xlu0 %3142
        %3144 = vset.pattern.permute.xlu0 2
        %3145 = vperm.xlu0 %3144, %v2197
        %v3146 = vpop.permute.xlu0 %3145
        %3147 = vset.pattern.permute.xlu0 2
        %3148 = vperm.xlu0 %3147, %v2198
        %v3149 = vpop.permute.xlu0 %3148
        %3150 = vset.pattern.permute.xlu0 2
        %3151 = vperm.xlu0 %3150, %v2199
        %v3152 = vpop.permute.xlu0 %3151
        %3153 = vset.pattern.permute.xlu0 2
        %3154 = vperm.xlu0 %3153, %v2200
        %v3155 = vpop.permute.xlu0 %3154
        %3156 = vset.pattern.permute.xlu0 2
        %3157 = vperm.xlu0 %3156, %v2201
        %v3158 = vpop.permute.xlu0 %3157
        %3159 = vset.pattern.permute.xlu0 2
        %3160 = vperm.xlu0 %3159, %v2202
        %v3161 = vpop.permute.xlu0 %3160
        %3162 = vset.pattern.permute.xlu0 2
        %3163 = vperm.xlu0 %3162, %v2203
        %v3164 = vpop.permute.xlu0 %3163
        %3165 = vset.pattern.permute.xlu0 2
        %3166 = vperm.xlu0 %3165, %v2204
        %v3167 = vpop.permute.xlu0 %3166
        %3168 = vset.pattern.permute.xlu0 2
        %3169 = vperm.xlu0 %3168, %v2205
        %v3170 = vpop.permute.xlu0 %3169
        %3171 = vset.pattern.permute.xlu0 2
        %3172 = vperm.xlu0 %3171, %v2206
        %v3173 = vpop.permute.xlu0 %3172
        %3174 = vset.pattern.permute.xlu0 2
        %3175 = vperm.xlu0 %3174, %v2207
        %v3176 = vpop.permute.xlu0 %3175
        %3177 = vset.pattern.permute.xlu0 2
        %3178 = vperm.xlu0 %3177, %v2208
        %v3179 = vpop.permute.xlu0 %3178
        %3180 = vset.pattern.permute.xlu0 2
        %3181 = vperm.xlu0 %3180, %v2209
        %v3182 = vpop.permute.xlu0 %3181
        %3183 = vset.pattern.permute.xlu0 2
        %3184 = vperm.xlu0 %3183, %v2210
        %v3185 = vpop.permute.xlu0 %3184
        %3186 = vset.pattern.permute.xlu0 2
        %3187 = vperm.xlu0 %3186, %v2211
        %v3188 = vpop.permute.xlu0 %3187
        %3189 = vset.pattern.permute.xlu0 2
        %3190 = vperm.xlu0 %3189, %v2212
        %v3191 = vpop.permute.xlu0 %3190
        %3192 = vset.pattern.permute.xlu0 2
        %3193 = vperm.xlu0 %3192, %v2213
        %v3194 = vpop.permute.xlu0 %3193
        %3195 = vset.pattern.permute.xlu0 2
        %3196 = vperm.xlu0 %3195, %v2214
        %v3197 = vpop.permute.xlu0 %3196
        %3198 = vset.pattern.permute.xlu0 2
        %3199 = vperm.xlu0 %3198, %v2215
        %v3200 = vpop.permute.xlu0 %3199
        %3201 = vset.pattern.permute.xlu0 2
        %3202 = vperm.xlu0 %3201, %v2216
        %v3203 = vpop.permute.xlu0 %3202
        %3204 = vset.pattern.permute.xlu0 2
        %3205 = vperm.xlu0 %3204, %v2217
        %v3206 = vpop.permute.xlu0 %3205
        %3207 = vset.pattern.permute.xlu0 2
        %3208 = vperm.xlu0 %3207, %v2218
        %v3209 = vpop.permute.xlu0 %3208
        %3210 = vset.pattern.permute.xlu0 2
        %3211 = vperm.xlu0 %3210, %v2219
        %v3212 = vpop.permute.xlu0 %3211
        %3213 = vset.pattern.permute.xlu0 2
        %3214 = vperm.xlu0 %3213, %v2220
        %v3215 = vpop.permute.xlu0 %3214
        %3216 = vset.pattern.permute.xlu0 2
        %3217 = vperm.xlu0 %3216, %v2221
        %v3218 = vpop.permute.xlu0 %3217
        %3219 = vset.pattern.permute.xlu0 2
        %3220 = vperm.xlu0 %3219, %v2222
        %v3221 = vpop.permute.xlu0 %3220
        %3222 = vset.pattern.permute.xlu0 2
        %3223 = vperm.xlu0 %3222, %v2223
        %v3224 = vpop.permute.xlu0 %3223
        %3225 = vset.pattern.permute.xlu0 2
        %3226 = vperm.xlu0 %3225, %v2224
        %v3227 = vpop.permute.xlu0 %3226
        %3228 = vset.pattern.permute.xlu0 2
        %3229 = vperm.xlu0 %3228, %v2225
        %v3230 = vpop.permute.xlu0 %3229
        %3231 = vset.pattern.permute.xlu0 2
        %3232 = vperm.xlu0 %3231, %v2226
        %v3233 = vpop.permute.xlu0 %3232
        %3234 = vset.pattern.permute.xlu0 2
        %3235 = vperm.xlu0 %3234, %v2227
        %v3236 = vpop.permute.xlu0 %3235
        %3237 = vset.pattern.permute.xlu0 2
        %3238 = vperm.xlu0 %3237, %v2228
        %v3239 = vpop.permute.xlu0 %3238
        %3240 = vset.pattern.permute.xlu0 2
        %3241 = vperm.xlu0 %3240, %v2229
        %v3242 = vpop.permute.xlu0 %3241
        %3243 = vset.pattern.permute.xlu0 2
        %3244 = vperm.xlu0 %3243, %v2230
        %v3245 = vpop.permute.xlu0 %3244
        %3246 = vset.pattern.permute.xlu0 2
        %3247 = vperm.xlu0 %3246, %v2231
        %v3248 = vpop.permute.xlu0 %3247
        %3249 = vset.pattern.permute.xlu0 2
        %3250 = vperm.xlu0 %3249, %v2232
        %v3251 = vpop.permute.xlu0 %3250
        %3252 = vset.pattern.permute.xlu0 2
        %3253 = vperm.xlu0 %3252, %v2233
        %v3254 = vpop.permute.xlu0 %3253
        %3255 = vset.pattern.permute.xlu0 2
        %3256 = vperm.xlu0 %3255, %v2234
        %v3257 = vpop.permute.xlu0 %3256
        %3258 = vset.pattern.permute.xlu0 2
        %3259 = vperm.xlu0 %3258, %v2235
        %v3260 = vpop.permute.xlu0 %3259
        %vm3261 = vcmp.eq.s32.totalorder %v3071, 1
        %vm3262 = vcmp.eq.s32.totalorder %v3074, 1
        %vm3263 = vcmp.eq.s32.totalorder %v3077, 1
        %vm3264 = vcmp.eq.s32.totalorder %v3080, 1
        %vm3265 = vcmp.eq.s32.totalorder %v3083, 1
        %vm3266 = vcmp.eq.s32.totalorder %v3086, 1
        %vm3267 = vcmp.eq.s32.totalorder %v3089, 1
        %vm3268 = vcmp.eq.s32.totalorder %v3092, 1
        %vm3269 = vcmp.eq.s32.totalorder %v3095, 1
        %vm3270 = vcmp.eq.s32.totalorder %v3098, 1
        %vm3271 = vcmp.eq.s32.totalorder %v3101, 1
        %vm3272 = vcmp.eq.s32.totalorder %v3104, 1
        %vm3273 = vcmp.eq.s32.totalorder %v3107, 1
        %vm3274 = vcmp.eq.s32.totalorder %v3110, 1
        %vm3275 = vcmp.eq.s32.totalorder %v3113, 1
        %vm3276 = vcmp.eq.s32.totalorder %v3116, 1
        %vm3277 = vcmp.eq.s32.totalorder %v3119, 1
        %vm3278 = vcmp.eq.s32.totalorder %v3122, 1
        %vm3279 = vcmp.eq.s32.totalorder %v3125, 1
        %vm3280 = vcmp.eq.s32.totalorder %v3128, 1
        %vm3281 = vcmp.eq.s32.totalorder %v3131, 1
        %vm3282 = vcmp.eq.s32.totalorder %v3134, 1
        %vm3283 = vcmp.eq.s32.totalorder %v3137, 1
        %vm3284 = vcmp.eq.s32.totalorder %v3140, 1
        %vm3285 = vcmp.eq.s32.totalorder %v3143, 1
        %vm3286 = vcmp.eq.s32.totalorder %v3146, 1
        %vm3287 = vcmp.eq.s32.totalorder %v3149, 1
        %vm3288 = vcmp.eq.s32.totalorder %v3152, 1
        %vm3289 = vcmp.eq.s32.totalorder %v3155, 1
        %vm3290 = vcmp.eq.s32.totalorder %v3158, 1
        %vm3291 = vcmp.eq.s32.totalorder %v3161, 1
        %vm3292 = vcmp.eq.s32.totalorder %v3164, 1
        %vm3293 = vcmp.eq.s32.totalorder %v3167, 1
        %vm3294 = vcmp.eq.s32.totalorder %v3170, 1
        %vm3295 = vcmp.eq.s32.totalorder %v3173, 1
        %vm3296 = vcmp.eq.s32.totalorder %v3176, 1
        %vm3297 = vcmp.eq.s32.totalorder %v3179, 1
        %vm3298 = vcmp.eq.s32.totalorder %v3182, 1
        %vm3299 = vcmp.eq.s32.totalorder %v3185, 1
        %vm3300 = vcmp.eq.s32.totalorder %v3188, 1
        %vm3301 = vcmp.eq.s32.totalorder %v3191, 1
        %vm3302 = vcmp.eq.s32.totalorder %v3194, 1
        %vm3303 = vcmp.eq.s32.totalorder %v3197, 1
        %vm3304 = vcmp.eq.s32.totalorder %v3200, 1
        %vm3305 = vcmp.eq.s32.totalorder %v3203, 1
        %vm3306 = vcmp.eq.s32.totalorder %v3206, 1
        %vm3307 = vcmp.eq.s32.totalorder %v3209, 1
        %vm3308 = vcmp.eq.s32.totalorder %v3212, 1
        %vm3309 = vcmp.eq.s32.totalorder %v3215, 1
        %vm3310 = vcmp.eq.s32.totalorder %v3218, 1
        %vm3311 = vcmp.eq.s32.totalorder %v3221, 1
        %vm3312 = vcmp.eq.s32.totalorder %v3224, 1
        %vm3313 = vcmp.eq.s32.totalorder %v3227, 1
        %vm3314 = vcmp.eq.s32.totalorder %v3230, 1
        %vm3315 = vcmp.eq.s32.totalorder %v3233, 1
        %vm3316 = vcmp.eq.s32.totalorder %v3236, 1
        %vm3317 = vcmp.eq.s32.totalorder %v3239, 1
        %vm3318 = vcmp.eq.s32.totalorder %v3242, 1
        %vm3319 = vcmp.eq.s32.totalorder %v3245, 1
        %vm3320 = vcmp.eq.s32.totalorder %v3248, 1
        %vm3321 = vcmp.eq.s32.totalorder %v3251, 1
        %vm3322 = vcmp.eq.s32.totalorder %v3254, 1
        %vm3323 = vcmp.eq.s32.totalorder %v3257, 1
        %vm3324 = vcmp.eq.s32.totalorder %v3260, 1
        %v3325 = vsel %vm3261, %v3005, -1e+30
        %v3326 = vsel %vm3262, %v3068, -1e+30
        %v3327 = vsel %vm3263, %v3067, -1e+30
        %v3328 = vsel %vm3264, %v3066, -1e+30
        %v3329 = vsel %vm3265, %v3065, -1e+30
        %v3330 = vsel %vm3266, %v3064, -1e+30
        %v3331 = vsel %vm3267, %v3063, -1e+30
        %v3332 = vsel %vm3268, %v3062, -1e+30
        %v3333 = vsel %vm3269, %v3061, -1e+30
        %v3334 = vsel %vm3270, %v3060, -1e+30
        %v3335 = vsel %vm3271, %v3059, -1e+30
        %v3336 = vsel %vm3272, %v3058, -1e+30
        %v3337 = vsel %vm3273, %v3057, -1e+30
        %v3338 = vsel %vm3274, %v3056, -1e+30
        %v3339 = vsel %vm3275, %v3055, -1e+30
        %v3340 = vsel %vm3276, %v3054, -1e+30
        %v3341 = vsel %vm3277, %v3053, -1e+30
        %v3342 = vsel %vm3278, %v3052, -1e+30
        %v3343 = vsel %vm3279, %v3051, -1e+30
        %v3344 = vsel %vm3280, %v3050, -1e+30
        %v3345 = vsel %vm3281, %v3049, -1e+30
        %v3346 = vsel %vm3282, %v3048, -1e+30
        %v3347 = vsel %vm3283, %v3047, -1e+30
        %v3348 = vsel %vm3284, %v3046, -1e+30
        %v3349 = vsel %vm3285, %v3045, -1e+30
        %v3350 = vsel %vm3286, %v3044, -1e+30
        %v3351 = vsel %vm3287, %v3043, -1e+30
        %v3352 = vsel %vm3288, %v3042, -1e+30
        %v3353 = vsel %vm3289, %v3041, -1e+30
        %v3354 = vsel %vm3290, %v3040, -1e+30
        %v3355 = vsel %vm3291, %v3039, -1e+30
        %v3356 = vsel %vm3292, %v3038, -1e+30
        %v3357 = vsel %vm3293, %v3037, -1e+30
        %v3358 = vsel %vm3294, %v3036, -1e+30
        %v3359 = vsel %vm3295, %v3035, -1e+30
        %v3360 = vsel %vm3296, %v3034, -1e+30
        %v3361 = vsel %vm3297, %v3033, -1e+30
        %v3362 = vsel %vm3298, %v3032, -1e+30
        %v3363 = vsel %vm3299, %v3031, -1e+30
        %v3364 = vsel %vm3300, %v3030, -1e+30
        %v3365 = vsel %vm3301, %v3029, -1e+30
        %v3366 = vsel %vm3302, %v3028, -1e+30
        %v3367 = vsel %vm3303, %v3027, -1e+30
        %v3368 = vsel %vm3304, %v3026, -1e+30
        %v3369 = vsel %vm3305, %v3025, -1e+30
        %v3370 = vsel %vm3306, %v3024, -1e+30
        %v3371 = vsel %vm3307, %v3023, -1e+30
        %v3372 = vsel %vm3308, %v3022, -1e+30
        %v3373 = vsel %vm3309, %v3021, -1e+30
        %v3374 = vsel %vm3310, %v3020, -1e+30
        %v3375 = vsel %vm3311, %v3019, -1e+30
        %v3376 = vsel %vm3312, %v3018, -1e+30
        %v3377 = vsel %vm3313, %v3017, -1e+30
        %v3378 = vsel %vm3314, %v3016, -1e+30
        %v3379 = vsel %vm3315, %v3015, -1e+30
        %v3380 = vsel %vm3316, %v3014, -1e+30
        %v3381 = vsel %vm3317, %v3013, -1e+30
        %v3382 = vsel %vm3318, %v3012, -1e+30
        %v3383 = vsel %vm3319, %v3011, -1e+30
        %v3384 = vsel %vm3320, %v3010, -1e+30
        %v3385 = vsel %vm3321, %v3009, -1e+30
        %v3386 = vsel %vm3322, %v3008, -1e+30
        %v3387 = vsel %vm3323, %v3007, -1e+30
        %v3388 = vsel %vm3324, %v3006, -1e+30
        %v3389 = vmax.f32 %v2876, %v3325
        %v3390 = vmax.f32 %v2877, %v3326
        %v3391 = vmax.f32 %v2878, %v3327
        %v3392 = vmax.f32 %v2879, %v3328
        %v3393 = vmax.f32 %v2880, %v3329
        %v3394 = vmax.f32 %v2881, %v3330
        %v3395 = vmax.f32 %v2882, %v3331
        %v3396 = vmax.f32 %v2883, %v3332
        %v3397 = vmax.f32 %v2884, %v3333
        %v3398 = vmax.f32 %v2885, %v3334
        %v3399 = vmax.f32 %v2886, %v3335
        %v3400 = vmax.f32 %v2887, %v3336
        %v3401 = vmax.f32 %v2888, %v3337
        %v3402 = vmax.f32 %v2889, %v3338
        %v3403 = vmax.f32 %v2890, %v3339
        %v3404 = vmax.f32 %v2891, %v3340
        %v3405 = vmax.f32 %v2892, %v3341
        %v3406 = vmax.f32 %v2893, %v3342
        %v3407 = vmax.f32 %v2894, %v3343
        %v3408 = vmax.f32 %v2895, %v3344
        %v3409 = vmax.f32 %v2896, %v3345
        %v3410 = vmax.f32 %v2897, %v3346
        %v3411 = vmax.f32 %v2898, %v3347
        %v3412 = vmax.f32 %v2899, %v3348
        %v3413 = vmax.f32 %v2900, %v3349
        %v3414 = vmax.f32 %v2901, %v3350
        %v3415 = vmax.f32 %v2902, %v3351
        %v3416 = vmax.f32 %v2903, %v3352
        %v3417 = vmax.f32 %v2904, %v3353
        %v3418 = vmax.f32 %v2905, %v3354
        %v3419 = vmax.f32 %v2906, %v3355
        %v3420 = vmax.f32 %v2907, %v3356
        %v3421 = vmax.f32 %v2908, %v3357
        %v3422 = vmax.f32 %v2909, %v3358
        %v3423 = vmax.f32 %v2910, %v3359
        %v3424 = vmax.f32 %v2911, %v3360
        %v3425 = vmax.f32 %v2912, %v3361
        %v3426 = vmax.f32 %v2913, %v3362
        %v3427 = vmax.f32 %v2914, %v3363
        %v3428 = vmax.f32 %v2915, %v3364
        %v3429 = vmax.f32 %v2916, %v3365
        %v3430 = vmax.f32 %v2917, %v3366
        %v3431 = vmax.f32 %v2918, %v3367
        %v3432 = vmax.f32 %v2919, %v3368
        %v3433 = vmax.f32 %v2920, %v3369
        %v3434 = vmax.f32 %v2921, %v3370
        %v3435 = vmax.f32 %v2922, %v3371
        %v3436 = vmax.f32 %v2923, %v3372
        %v3437 = vmax.f32 %v2924, %v3373
        %v3438 = vmax.f32 %v2925, %v3374
        %v3439 = vmax.f32 %v2926, %v3375
        %v3440 = vmax.f32 %v2927, %v3376
        %v3441 = vmax.f32 %v2928, %v3377
        %v3442 = vmax.f32 %v2929, %v3378
        %v3443 = vmax.f32 %v2930, %v3379
        %v3444 = vmax.f32 %v2931, %v3380
        %v3445 = vmax.f32 %v2932, %v3381
        %v3446 = vmax.f32 %v2933, %v3382
        %v3447 = vmax.f32 %v2934, %v3383
        %v3448 = vmax.f32 %v2935, %v3384
        %v3449 = vmax.f32 %v2936, %v3385
        %v3450 = vmax.f32 %v2937, %v3386
        %v3451 = vmax.f32 %v2938, %v3387
        %v3452 = vmax.f32 %v2939, %v3388
        %3453 = vset.pattern.permute.xlu0 3
        %3454 = vperm.xlu0 %3453, %v2172
        %v3455 = vpop.permute.xlu0 %3454
        %3456 = vset.pattern.permute.xlu0 3
        %3457 = vperm.xlu0 %3456, %v2173
        %v3458 = vpop.permute.xlu0 %3457
        %3459 = vset.pattern.permute.xlu0 3
        %3460 = vperm.xlu0 %3459, %v2174
        %v3461 = vpop.permute.xlu0 %3460
        %3462 = vset.pattern.permute.xlu0 3
        %3463 = vperm.xlu0 %3462, %v2175
        %v3464 = vpop.permute.xlu0 %3463
        %3465 = vset.pattern.permute.xlu0 3
        %3466 = vperm.xlu0 %3465, %v2176
        %v3467 = vpop.permute.xlu0 %3466
        %3468 = vset.pattern.permute.xlu0 3
        %3469 = vperm.xlu0 %3468, %v2177
        %v3470 = vpop.permute.xlu0 %3469
        %3471 = vset.pattern.permute.xlu0 3
        %3472 = vperm.xlu0 %3471, %v2178
        %v3473 = vpop.permute.xlu0 %3472
        %3474 = vset.pattern.permute.xlu0 3
        %3475 = vperm.xlu0 %3474, %v2179
        %v3476 = vpop.permute.xlu0 %3475
        %3477 = vset.pattern.permute.xlu0 3
        %3478 = vperm.xlu0 %3477, %v2180
        %v3479 = vpop.permute.xlu0 %3478
        %3480 = vset.pattern.permute.xlu0 3
        %3481 = vperm.xlu0 %3480, %v2181
        %v3482 = vpop.permute.xlu0 %3481
        %3483 = vset.pattern.permute.xlu0 3
        %3484 = vperm.xlu0 %3483, %v2182
        %v3485 = vpop.permute.xlu0 %3484
        %3486 = vset.pattern.permute.xlu0 3
        %3487 = vperm.xlu0 %3486, %v2183
        %v3488 = vpop.permute.xlu0 %3487
        %3489 = vset.pattern.permute.xlu0 3
        %3490 = vperm.xlu0 %3489, %v2184
        %v3491 = vpop.permute.xlu0 %3490
        %3492 = vset.pattern.permute.xlu0 3
        %3493 = vperm.xlu0 %3492, %v2185
        %v3494 = vpop.permute.xlu0 %3493
        %3495 = vset.pattern.permute.xlu0 3
        %3496 = vperm.xlu0 %3495, %v2186
        %v3497 = vpop.permute.xlu0 %3496
        %3498 = vset.pattern.permute.xlu0 3
        %3499 = vperm.xlu0 %3498, %v2187
        %v3500 = vpop.permute.xlu0 %3499
        %3501 = vset.pattern.permute.xlu0 3
        %3502 = vperm.xlu0 %3501, %v2188
        %v3503 = vpop.permute.xlu0 %3502
        %3504 = vset.pattern.permute.xlu0 3
        %3505 = vperm.xlu0 %3504, %v2189
        %v3506 = vpop.permute.xlu0 %3505
        %3507 = vset.pattern.permute.xlu0 3
        %3508 = vperm.xlu0 %3507, %v2190
        %v3509 = vpop.permute.xlu0 %3508
        %3510 = vset.pattern.permute.xlu0 3
        %3511 = vperm.xlu0 %3510, %v2191
        %v3512 = vpop.permute.xlu0 %3511
        %3513 = vset.pattern.permute.xlu0 3
        %3514 = vperm.xlu0 %3513, %v2192
        %v3515 = vpop.permute.xlu0 %3514
        %3516 = vset.pattern.permute.xlu0 3
        %3517 = vperm.xlu0 %3516, %v2193
        %v3518 = vpop.permute.xlu0 %3517
        %3519 = vset.pattern.permute.xlu0 3
        %3520 = vperm.xlu0 %3519, %v2194
        %v3521 = vpop.permute.xlu0 %3520
        %3522 = vset.pattern.permute.xlu0 3
        %3523 = vperm.xlu0 %3522, %v2195
        %v3524 = vpop.permute.xlu0 %3523
        %3525 = vset.pattern.permute.xlu0 3
        %3526 = vperm.xlu0 %3525, %v2196
        %v3527 = vpop.permute.xlu0 %3526
        %3528 = vset.pattern.permute.xlu0 3
        %3529 = vperm.xlu0 %3528, %v2197
        %v3530 = vpop.permute.xlu0 %3529
        %3531 = vset.pattern.permute.xlu0 3
        %3532 = vperm.xlu0 %3531, %v2198
        %v3533 = vpop.permute.xlu0 %3532
        %3534 = vset.pattern.permute.xlu0 3
        %3535 = vperm.xlu0 %3534, %v2199
        %v3536 = vpop.permute.xlu0 %3535
        %3537 = vset.pattern.permute.xlu0 3
        %3538 = vperm.xlu0 %3537, %v2200
        %v3539 = vpop.permute.xlu0 %3538
        %3540 = vset.pattern.permute.xlu0 3
        %3541 = vperm.xlu0 %3540, %v2201
        %v3542 = vpop.permute.xlu0 %3541
        %3543 = vset.pattern.permute.xlu0 3
        %3544 = vperm.xlu0 %3543, %v2202
        %v3545 = vpop.permute.xlu0 %3544
        %3546 = vset.pattern.permute.xlu0 3
        %3547 = vperm.xlu0 %3546, %v2203
        %v3548 = vpop.permute.xlu0 %3547
        %3549 = vset.pattern.permute.xlu0 3
        %3550 = vperm.xlu0 %3549, %v2204
        %v3551 = vpop.permute.xlu0 %3550
        %3552 = vset.pattern.permute.xlu0 3
        %3553 = vperm.xlu0 %3552, %v2205
        %v3554 = vpop.permute.xlu0 %3553
        %3555 = vset.pattern.permute.xlu0 3
        %3556 = vperm.xlu0 %3555, %v2206
        %v3557 = vpop.permute.xlu0 %3556
        %3558 = vset.pattern.permute.xlu0 3
        %3559 = vperm.xlu0 %3558, %v2207
        %v3560 = vpop.permute.xlu0 %3559
        %3561 = vset.pattern.permute.xlu0 3
        %3562 = vperm.xlu0 %3561, %v2208
        %v3563 = vpop.permute.xlu0 %3562
        %3564 = vset.pattern.permute.xlu0 3
        %3565 = vperm.xlu0 %3564, %v2209
        %v3566 = vpop.permute.xlu0 %3565
        %3567 = vset.pattern.permute.xlu0 3
        %3568 = vperm.xlu0 %3567, %v2210
        %v3569 = vpop.permute.xlu0 %3568
        %3570 = vset.pattern.permute.xlu0 3
        %3571 = vperm.xlu0 %3570, %v2211
        %v3572 = vpop.permute.xlu0 %3571
        %3573 = vset.pattern.permute.xlu0 3
        %3574 = vperm.xlu0 %3573, %v2212
        %v3575 = vpop.permute.xlu0 %3574
        %3576 = vset.pattern.permute.xlu0 3
        %3577 = vperm.xlu0 %3576, %v2213
        %v3578 = vpop.permute.xlu0 %3577
        %3579 = vset.pattern.permute.xlu0 3
        %3580 = vperm.xlu0 %3579, %v2214
        %v3581 = vpop.permute.xlu0 %3580
        %3582 = vset.pattern.permute.xlu0 3
        %3583 = vperm.xlu0 %3582, %v2215
        %v3584 = vpop.permute.xlu0 %3583
        %3585 = vset.pattern.permute.xlu0 3
        %3586 = vperm.xlu0 %3585, %v2216
        %v3587 = vpop.permute.xlu0 %3586
        %3588 = vset.pattern.permute.xlu0 3
        %3589 = vperm.xlu0 %3588, %v2217
        %v3590 = vpop.permute.xlu0 %3589
        %3591 = vset.pattern.permute.xlu0 3
        %3592 = vperm.xlu0 %3591, %v2218
        %v3593 = vpop.permute.xlu0 %3592
        %3594 = vset.pattern.permute.xlu0 3
        %3595 = vperm.xlu0 %3594, %v2219
        %v3596 = vpop.permute.xlu0 %3595
        %3597 = vset.pattern.permute.xlu0 3
        %3598 = vperm.xlu0 %3597, %v2220
        %v3599 = vpop.permute.xlu0 %3598
        %3600 = vset.pattern.permute.xlu0 3
        %3601 = vperm.xlu0 %3600, %v2221
        %v3602 = vpop.permute.xlu0 %3601
        %3603 = vset.pattern.permute.xlu0 3
        %3604 = vperm.xlu0 %3603, %v2222
        %v3605 = vpop.permute.xlu0 %3604
        %3606 = vset.pattern.permute.xlu0 3
        %3607 = vperm.xlu0 %3606, %v2223
        %v3608 = vpop.permute.xlu0 %3607
        %3609 = vset.pattern.permute.xlu0 3
        %3610 = vperm.xlu0 %3609, %v2224
        %v3611 = vpop.permute.xlu0 %3610
        %3612 = vset.pattern.permute.xlu0 3
        %3613 = vperm.xlu0 %3612, %v2225
        %v3614 = vpop.permute.xlu0 %3613
        %3615 = vset.pattern.permute.xlu0 3
        %3616 = vperm.xlu0 %3615, %v2226
        %v3617 = vpop.permute.xlu0 %3616
        %3618 = vset.pattern.permute.xlu0 3
        %3619 = vperm.xlu0 %3618, %v2227
        %v3620 = vpop.permute.xlu0 %3619
        %3621 = vset.pattern.permute.xlu0 3
        %3622 = vperm.xlu0 %3621, %v2228
        %v3623 = vpop.permute.xlu0 %3622
        %3624 = vset.pattern.permute.xlu0 3
        %3625 = vperm.xlu0 %3624, %v2229
        %v3626 = vpop.permute.xlu0 %3625
        %3627 = vset.pattern.permute.xlu0 3
        %3628 = vperm.xlu0 %3627, %v2230
        %v3629 = vpop.permute.xlu0 %3628
        %3630 = vset.pattern.permute.xlu0 3
        %3631 = vperm.xlu0 %3630, %v2231
        %v3632 = vpop.permute.xlu0 %3631
        %3633 = vset.pattern.permute.xlu0 3
        %3634 = vperm.xlu0 %3633, %v2232
        %v3635 = vpop.permute.xlu0 %3634
        %3636 = vset.pattern.permute.xlu0 3
        %3637 = vperm.xlu0 %3636, %v2233
        %v3638 = vpop.permute.xlu0 %3637
        %3639 = vset.pattern.permute.xlu0 3
        %3640 = vperm.xlu0 %3639, %v2234
        %v3641 = vpop.permute.xlu0 %3640
        %3642 = vset.pattern.permute.xlu0 3
        %3643 = vperm.xlu0 %3642, %v2235
        %v3644 = vpop.permute.xlu0 %3643
        %vm3645 = vcmp.eq.s32.totalorder %v3455, 1
        %vm3646 = vcmp.eq.s32.totalorder %v3458, 1
        %vm3647 = vcmp.eq.s32.totalorder %v3461, 1
        %vm3648 = vcmp.eq.s32.totalorder %v3464, 1
        %vm3649 = vcmp.eq.s32.totalorder %v3467, 1
        %vm3650 = vcmp.eq.s32.totalorder %v3470, 1
        %vm3651 = vcmp.eq.s32.totalorder %v3473, 1
        %vm3652 = vcmp.eq.s32.totalorder %v3476, 1
        %vm3653 = vcmp.eq.s32.totalorder %v3479, 1
        %vm3654 = vcmp.eq.s32.totalorder %v3482, 1
        %vm3655 = vcmp.eq.s32.totalorder %v3485, 1
        %vm3656 = vcmp.eq.s32.totalorder %v3488, 1
        %vm3657 = vcmp.eq.s32.totalorder %v3491, 1
        %vm3658 = vcmp.eq.s32.totalorder %v3494, 1
        %vm3659 = vcmp.eq.s32.totalorder %v3497, 1
        %vm3660 = vcmp.eq.s32.totalorder %v3500, 1
        %vm3661 = vcmp.eq.s32.totalorder %v3503, 1
        %vm3662 = vcmp.eq.s32.totalorder %v3506, 1
        %vm3663 = vcmp.eq.s32.totalorder %v3509, 1
        %vm3664 = vcmp.eq.s32.totalorder %v3512, 1
        %vm3665 = vcmp.eq.s32.totalorder %v3515, 1
        %vm3666 = vcmp.eq.s32.totalorder %v3518, 1
        %vm3667 = vcmp.eq.s32.totalorder %v3521, 1
        %vm3668 = vcmp.eq.s32.totalorder %v3524, 1
        %vm3669 = vcmp.eq.s32.totalorder %v3527, 1
        %vm3670 = vcmp.eq.s32.totalorder %v3530, 1
        %vm3671 = vcmp.eq.s32.totalorder %v3533, 1
        %vm3672 = vcmp.eq.s32.totalorder %v3536, 1
        %vm3673 = vcmp.eq.s32.totalorder %v3539, 1
        %vm3674 = vcmp.eq.s32.totalorder %v3542, 1
        %vm3675 = vcmp.eq.s32.totalorder %v3545, 1
        %vm3676 = vcmp.eq.s32.totalorder %v3548, 1
        %vm3677 = vcmp.eq.s32.totalorder %v3551, 1
        %vm3678 = vcmp.eq.s32.totalorder %v3554, 1
        %vm3679 = vcmp.eq.s32.totalorder %v3557, 1
        %vm3680 = vcmp.eq.s32.totalorder %v3560, 1
        %vm3681 = vcmp.eq.s32.totalorder %v3563, 1
        %vm3682 = vcmp.eq.s32.totalorder %v3566, 1
        %vm3683 = vcmp.eq.s32.totalorder %v3569, 1
        %vm3684 = vcmp.eq.s32.totalorder %v3572, 1
        %vm3685 = vcmp.eq.s32.totalorder %v3575, 1
        %vm3686 = vcmp.eq.s32.totalorder %v3578, 1
        %vm3687 = vcmp.eq.s32.totalorder %v3581, 1
        %vm3688 = vcmp.eq.s32.totalorder %v3584, 1
        %vm3689 = vcmp.eq.s32.totalorder %v3587, 1
        %vm3690 = vcmp.eq.s32.totalorder %v3590, 1
        %vm3691 = vcmp.eq.s32.totalorder %v3593, 1
        %vm3692 = vcmp.eq.s32.totalorder %v3596, 1
        %vm3693 = vcmp.eq.s32.totalorder %v3599, 1
        %vm3694 = vcmp.eq.s32.totalorder %v3602, 1
        %vm3695 = vcmp.eq.s32.totalorder %v3605, 1
        %vm3696 = vcmp.eq.s32.totalorder %v3608, 1
        %vm3697 = vcmp.eq.s32.totalorder %v3611, 1
        %vm3698 = vcmp.eq.s32.totalorder %v3614, 1
        %vm3699 = vcmp.eq.s32.totalorder %v3617, 1
        %vm3700 = vcmp.eq.s32.totalorder %v3620, 1
        %vm3701 = vcmp.eq.s32.totalorder %v3623, 1
        %vm3702 = vcmp.eq.s32.totalorder %v3626, 1
        %vm3703 = vcmp.eq.s32.totalorder %v3629, 1
        %vm3704 = vcmp.eq.s32.totalorder %v3632, 1
        %vm3705 = vcmp.eq.s32.totalorder %v3635, 1
        %vm3706 = vcmp.eq.s32.totalorder %v3638, 1
        %vm3707 = vcmp.eq.s32.totalorder %v3641, 1
        %vm3708 = vcmp.eq.s32.totalorder %v3644, 1
        %v3709 = vsel %vm3645, %v2171, -1e+30
        %v3710 = vsel %vm3646, %v2170, -1e+30
        %v3711 = vsel %vm3647, %v2169, -1e+30
        %v3712 = vsel %vm3648, %v2168, -1e+30
        %v3713 = vsel %vm3649, %v2167, -1e+30
        %v3714 = vsel %vm3650, %v2166, -1e+30
        %v3715 = vsel %vm3651, %v2165, -1e+30
        %v3716 = vsel %vm3652, %v2164, -1e+30
        %v3717 = vsel %vm3653, %v2163, -1e+30
        %v3718 = vsel %vm3654, %v2162, -1e+30
        %v3719 = vsel %vm3655, %v2161, -1e+30
        %v3720 = vsel %vm3656, %v2160, -1e+30
        %v3721 = vsel %vm3657, %v2159, -1e+30
        %v3722 = vsel %vm3658, %v2158, -1e+30
        %v3723 = vsel %vm3659, %v2157, -1e+30
        %v3724 = vsel %vm3660, %v2156, -1e+30
        %v3725 = vsel %vm3661, %v2155, -1e+30
        %v3726 = vsel %vm3662, %v2154, -1e+30
        %v3727 = vsel %vm3663, %v2153, -1e+30
        %v3728 = vsel %vm3664, %v2152, -1e+30
        %v3729 = vsel %vm3665, %v2151, -1e+30
        %v3730 = vsel %vm3666, %v2150, -1e+30
        %v3731 = vsel %vm3667, %v2149, -1e+30
        %v3732 = vsel %vm3668, %v2148, -1e+30
        %v3733 = vsel %vm3669, %v2147, -1e+30
        %v3734 = vsel %vm3670, %v2146, -1e+30
        %v3735 = vsel %vm3671, %v2145, -1e+30
        %v3736 = vsel %vm3672, %v2144, -1e+30
        %v3737 = vsel %vm3673, %v2143, -1e+30
        %v3738 = vsel %vm3674, %v2142, -1e+30
        %v3739 = vsel %vm3675, %v2141, -1e+30
        %v3740 = vsel %vm3676, %v2140, -1e+30
        %v3741 = vsel %vm3677, %v2139, -1e+30
        %v3742 = vsel %vm3678, %v2138, -1e+30
        %v3743 = vsel %vm3679, %v2137, -1e+30
        %v3744 = vsel %vm3680, %v2136, -1e+30
        %v3745 = vsel %vm3681, %v2135, -1e+30
        %v3746 = vsel %vm3682, %v2134, -1e+30
        %v3747 = vsel %vm3683, %v2133, -1e+30
        %v3748 = vsel %vm3684, %v2132, -1e+30
        %v3749 = vsel %vm3685, %v2131, -1e+30
        %v3750 = vsel %vm3686, %v2130, -1e+30
        %v3751 = vsel %vm3687, %v2129, -1e+30
        %v3752 = vsel %vm3688, %v2128, -1e+30
        %v3753 = vsel %vm3689, %v2127, -1e+30
        %v3754 = vsel %vm3690, %v2126, -1e+30
        %v3755 = vsel %vm3691, %v2125, -1e+30
        %v3756 = vsel %vm3692, %v2124, -1e+30
        %v3757 = vsel %vm3693, %v2123, -1e+30
        %v3758 = vsel %vm3694, %v2122, -1e+30
        %v3759 = vsel %vm3695, %v2121, -1e+30
        %v3760 = vsel %vm3696, %v2120, -1e+30
        %v3761 = vsel %vm3697, %v2119, -1e+30
        %v3762 = vsel %vm3698, %v2118, -1e+30
        %v3763 = vsel %vm3699, %v2117, -1e+30
        %v3764 = vsel %vm3700, %v2116, -1e+30
        %v3765 = vsel %vm3701, %v2115, -1e+30
        %v3766 = vsel %vm3702, %v2114, -1e+30
        %v3767 = vsel %vm3703, %v2113, -1e+30
        %v3768 = vsel %vm3704, %v2112, -1e+30
        %v3769 = vsel %vm3705, %v2111, -1e+30
        %v3770 = vsel %vm3706, %v2110, -1e+30
        %v3771 = vsel %vm3707, %v2109, -1e+30
        %v3772 = vsel %vm3708, %v2108, -1e+30
        %v3773 = vmax.f32 %v3389, %v3709
        %v3774 = vmax.f32 %v3390, %v3710
        %v3775 = vmax.f32 %v3391, %v3711
        %v3776 = vmax.f32 %v3392, %v3712
        %v3777 = vmax.f32 %v3393, %v3713
        %v3778 = vmax.f32 %v3394, %v3714
        %v3779 = vmax.f32 %v3395, %v3715
        %v3780 = vmax.f32 %v3396, %v3716
        %v3781 = vmax.f32 %v3397, %v3717
        %v3782 = vmax.f32 %v3398, %v3718
        %v3783 = vmax.f32 %v3399, %v3719
        %v3784 = vmax.f32 %v3400, %v3720
        %v3785 = vmax.f32 %v3401, %v3721
        %v3786 = vmax.f32 %v3402, %v3722
        %v3787 = vmax.f32 %v3403, %v3723
        %v3788 = vmax.f32 %v3404, %v3724
        %v3789 = vmax.f32 %v3405, %v3725
        %v3790 = vmax.f32 %v3406, %v3726
        %v3791 = vmax.f32 %v3407, %v3727
        %v3792 = vmax.f32 %v3408, %v3728
        %v3793 = vmax.f32 %v3409, %v3729
        %v3794 = vmax.f32 %v3410, %v3730
        %v3795 = vmax.f32 %v3411, %v3731
        %v3796 = vmax.f32 %v3412, %v3732
        %v3797 = vmax.f32 %v3413, %v3733
        %v3798 = vmax.f32 %v3414, %v3734
        %v3799 = vmax.f32 %v3415, %v3735
        %v3800 = vmax.f32 %v3416, %v3736
        %v3801 = vmax.f32 %v3417, %v3737
        %v3802 = vmax.f32 %v3418, %v3738
        %v3803 = vmax.f32 %v3419, %v3739
        %v3804 = vmax.f32 %v3420, %v3740
        %v3805 = vmax.f32 %v3421, %v3741
        %v3806 = vmax.f32 %v3422, %v3742
        %v3807 = vmax.f32 %v3423, %v3743
        %v3808 = vmax.f32 %v3424, %v3744
        %v3809 = vmax.f32 %v3425, %v3745
        %v3810 = vmax.f32 %v3426, %v3746
        %v3811 = vmax.f32 %v3427, %v3747
        %v3812 = vmax.f32 %v3428, %v3748
        %v3813 = vmax.f32 %v3429, %v3749
        %v3814 = vmax.f32 %v3430, %v3750
        %v3815 = vmax.f32 %v3431, %v3751
        %v3816 = vmax.f32 %v3432, %v3752
        %v3817 = vmax.f32 %v3433, %v3753
        %v3818 = vmax.f32 %v3434, %v3754
        %v3819 = vmax.f32 %v3435, %v3755
        %v3820 = vmax.f32 %v3436, %v3756
        %v3821 = vmax.f32 %v3437, %v3757
        %v3822 = vmax.f32 %v3438, %v3758
        %v3823 = vmax.f32 %v3439, %v3759
        %v3824 = vmax.f32 %v3440, %v3760
        %v3825 = vmax.f32 %v3441, %v3761
        %v3826 = vmax.f32 %v3442, %v3762
        %v3827 = vmax.f32 %v3443, %v3763
        %v3828 = vmax.f32 %v3444, %v3764
        %v3829 = vmax.f32 %v3445, %v3765
        %v3830 = vmax.f32 %v3446, %v3766
        %v3831 = vmax.f32 %v3447, %v3767
        %v3832 = vmax.f32 %v3448, %v3768
        %v3833 = vmax.f32 %v3449, %v3769
        %v3834 = vmax.f32 %v3450, %v3770
        %v3835 = vmax.f32 %v3451, %v3771
        %v3836 = vmax.f32 %v3452, %v3772
        %3837 = vset.pattern.permute.xlu0 4
        %3838 = vperm.xlu0 %3837, %v2172
        %v3839 = vpop.permute.xlu0 %3838
        %3840 = vset.pattern.permute.xlu0 4
        %3841 = vperm.xlu0 %3840, %v2173
        %v3842 = vpop.permute.xlu0 %3841
        %3843 = vset.pattern.permute.xlu0 4
        %3844 = vperm.xlu0 %3843, %v2174
        %v3845 = vpop.permute.xlu0 %3844
        %3846 = vset.pattern.permute.xlu0 4
        %3847 = vperm.xlu0 %3846, %v2175
        %v3848 = vpop.permute.xlu0 %3847
        %3849 = vset.pattern.permute.xlu0 4
        %3850 = vperm.xlu0 %3849, %v2176
        %v3851 = vpop.permute.xlu0 %3850
        %3852 = vset.pattern.permute.xlu0 4
        %3853 = vperm.xlu0 %3852, %v2177
        %v3854 = vpop.permute.xlu0 %3853
        %3855 = vset.pattern.permute.xlu0 4
        %3856 = vperm.xlu0 %3855, %v2178
        %v3857 = vpop.permute.xlu0 %3856
        %3858 = vset.pattern.permute.xlu0 4
        %3859 = vperm.xlu0 %3858, %v2179
        %v3860 = vpop.permute.xlu0 %3859
        %3861 = vset.pattern.permute.xlu0 4
        %3862 = vperm.xlu0 %3861, %v2180
        %v3863 = vpop.permute.xlu0 %3862
        %3864 = vset.pattern.permute.xlu0 4
        %3865 = vperm.xlu0 %3864, %v2181
        %v3866 = vpop.permute.xlu0 %3865
        %3867 = vset.pattern.permute.xlu0 4
        %3868 = vperm.xlu0 %3867, %v2182
        %v3869 = vpop.permute.xlu0 %3868
        %3870 = vset.pattern.permute.xlu0 4
        %3871 = vperm.xlu0 %3870, %v2183
        %v3872 = vpop.permute.xlu0 %3871
        %3873 = vset.pattern.permute.xlu0 4
        %3874 = vperm.xlu0 %3873, %v2184
        %v3875 = vpop.permute.xlu0 %3874
        %3876 = vset.pattern.permute.xlu0 4
        %3877 = vperm.xlu0 %3876, %v2185
        %v3878 = vpop.permute.xlu0 %3877
        %3879 = vset.pattern.permute.xlu0 4
        %3880 = vperm.xlu0 %3879, %v2186
        %v3881 = vpop.permute.xlu0 %3880
        %3882 = vset.pattern.permute.xlu0 4
        %3883 = vperm.xlu0 %3882, %v2187
        %v3884 = vpop.permute.xlu0 %3883
        %3885 = vset.pattern.permute.xlu0 4
        %3886 = vperm.xlu0 %3885, %v2188
        %v3887 = vpop.permute.xlu0 %3886
        %3888 = vset.pattern.permute.xlu0 4
        %3889 = vperm.xlu0 %3888, %v2189
        %v3890 = vpop.permute.xlu0 %3889
        %3891 = vset.pattern.permute.xlu0 4
        %3892 = vperm.xlu0 %3891, %v2190
        %v3893 = vpop.permute.xlu0 %3892
        %3894 = vset.pattern.permute.xlu0 4
        %3895 = vperm.xlu0 %3894, %v2191
        %v3896 = vpop.permute.xlu0 %3895
        %3897 = vset.pattern.permute.xlu0 4
        %3898 = vperm.xlu0 %3897, %v2192
        %v3899 = vpop.permute.xlu0 %3898
        %3900 = vset.pattern.permute.xlu0 4
        %3901 = vperm.xlu0 %3900, %v2193
        %v3902 = vpop.permute.xlu0 %3901
        %3903 = vset.pattern.permute.xlu0 4
        %3904 = vperm.xlu0 %3903, %v2194
        %v3905 = vpop.permute.xlu0 %3904
        %3906 = vset.pattern.permute.xlu0 4
        %3907 = vperm.xlu0 %3906, %v2195
        %v3908 = vpop.permute.xlu0 %3907
        %3909 = vset.pattern.permute.xlu0 4
        %3910 = vperm.xlu0 %3909, %v2196
        %v3911 = vpop.permute.xlu0 %3910
        %3912 = vset.pattern.permute.xlu0 4
        %3913 = vperm.xlu0 %3912, %v2197
        %v3914 = vpop.permute.xlu0 %3913
        %3915 = vset.pattern.permute.xlu0 4
        %3916 = vperm.xlu0 %3915, %v2198
        %v3917 = vpop.permute.xlu0 %3916
        %3918 = vset.pattern.permute.xlu0 4
        %3919 = vperm.xlu0 %3918, %v2199
        %v3920 = vpop.permute.xlu0 %3919
        %3921 = vset.pattern.permute.xlu0 4
        %3922 = vperm.xlu0 %3921, %v2200
        %v3923 = vpop.permute.xlu0 %3922
        %3924 = vset.pattern.permute.xlu0 4
        %3925 = vperm.xlu0 %3924, %v2201
        %v3926 = vpop.permute.xlu0 %3925
        %3927 = vset.pattern.permute.xlu0 4
        %3928 = vperm.xlu0 %3927, %v2202
        %v3929 = vpop.permute.xlu0 %3928
        %3930 = vset.pattern.permute.xlu0 4
        %3931 = vperm.xlu0 %3930, %v2203
        %v3932 = vpop.permute.xlu0 %3931
        %3933 = vset.pattern.permute.xlu0 4
        %3934 = vperm.xlu0 %3933, %v2204
        %v3935 = vpop.permute.xlu0 %3934
        %3936 = vset.pattern.permute.xlu0 4
        %3937 = vperm.xlu0 %3936, %v2205
        %v3938 = vpop.permute.xlu0 %3937
        %3939 = vset.pattern.permute.xlu0 4
        %3940 = vperm.xlu0 %3939, %v2206
        %v3941 = vpop.permute.xlu0 %3940
        %3942 = vset.pattern.permute.xlu0 4
        %3943 = vperm.xlu0 %3942, %v2207
        %v3944 = vpop.permute.xlu0 %3943
        %3945 = vset.pattern.permute.xlu0 4
        %3946 = vperm.xlu0 %3945, %v2208
        %v3947 = vpop.permute.xlu0 %3946
        %3948 = vset.pattern.permute.xlu0 4
        %3949 = vperm.xlu0 %3948, %v2209
        %v3950 = vpop.permute.xlu0 %3949
        %3951 = vset.pattern.permute.xlu0 4
        %3952 = vperm.xlu0 %3951, %v2210
        %v3953 = vpop.permute.xlu0 %3952
        %3954 = vset.pattern.permute.xlu0 4
        %3955 = vperm.xlu0 %3954, %v2211
        %v3956 = vpop.permute.xlu0 %3955
        %3957 = vset.pattern.permute.xlu0 4
        %3958 = vperm.xlu0 %3957, %v2212
        %v3959 = vpop.permute.xlu0 %3958
        %3960 = vset.pattern.permute.xlu0 4
        %3961 = vperm.xlu0 %3960, %v2213
        %v3962 = vpop.permute.xlu0 %3961
        %3963 = vset.pattern.permute.xlu0 4
        %3964 = vperm.xlu0 %3963, %v2214
        %v3965 = vpop.permute.xlu0 %3964
        %3966 = vset.pattern.permute.xlu0 4
        %3967 = vperm.xlu0 %3966, %v2215
        %v3968 = vpop.permute.xlu0 %3967
        %3969 = vset.pattern.permute.xlu0 4
        %3970 = vperm.xlu0 %3969, %v2216
        %v3971 = vpop.permute.xlu0 %3970
        %3972 = vset.pattern.permute.xlu0 4
        %3973 = vperm.xlu0 %3972, %v2217
        %v3974 = vpop.permute.xlu0 %3973
        %3975 = vset.pattern.permute.xlu0 4
        %3976 = vperm.xlu0 %3975, %v2218
        %v3977 = vpop.permute.xlu0 %3976
        %3978 = vset.pattern.permute.xlu0 4
        %3979 = vperm.xlu0 %3978, %v2219
        %v3980 = vpop.permute.xlu0 %3979
        %3981 = vset.pattern.permute.xlu0 4
        %3982 = vperm.xlu0 %3981, %v2220
        %v3983 = vpop.permute.xlu0 %3982
        %3984 = vset.pattern.permute.xlu0 4
        %3985 = vperm.xlu0 %3984, %v2221
        %v3986 = vpop.permute.xlu0 %3985
        %3987 = vset.pattern.permute.xlu0 4
        %3988 = vperm.xlu0 %3987, %v2222
        %v3989 = vpop.permute.xlu0 %3988
        %3990 = vset.pattern.permute.xlu0 4
        %3991 = vperm.xlu0 %3990, %v2223
        %v3992 = vpop.permute.xlu0 %3991
        %3993 = vset.pattern.permute.xlu0 4
        %3994 = vperm.xlu0 %3993, %v2224
        %v3995 = vpop.permute.xlu0 %3994
        %3996 = vset.pattern.permute.xlu0 4
        %3997 = vperm.xlu0 %3996, %v2225
        %v3998 = vpop.permute.xlu0 %3997
        %3999 = vset.pattern.permute.xlu0 4
        %4000 = vperm.xlu0 %3999, %v2226
        %v4001 = vpop.permute.xlu0 %4000
        %4002 = vset.pattern.permute.xlu0 4
        %4003 = vperm.xlu0 %4002, %v2227
        %v4004 = vpop.permute.xlu0 %4003
        %4005 = vset.pattern.permute.xlu0 4
        %4006 = vperm.xlu0 %4005, %v2228
        %v4007 = vpop.permute.xlu0 %4006
        %4008 = vset.pattern.permute.xlu0 4
        %4009 = vperm.xlu0 %4008, %v2229
        %v4010 = vpop.permute.xlu0 %4009
        %4011 = vset.pattern.permute.xlu0 4
        %4012 = vperm.xlu0 %4011, %v2230
        %v4013 = vpop.permute.xlu0 %4012
        %4014 = vset.pattern.permute.xlu0 4
        %4015 = vperm.xlu0 %4014, %v2231
        %v4016 = vpop.permute.xlu0 %4015
        %4017 = vset.pattern.permute.xlu0 4
        %4018 = vperm.xlu0 %4017, %v2232
        %v4019 = vpop.permute.xlu0 %4018
        %4020 = vset.pattern.permute.xlu0 4
        %4021 = vperm.xlu0 %4020, %v2233
        %v4022 = vpop.permute.xlu0 %4021
        %4023 = vset.pattern.permute.xlu0 4
        %4024 = vperm.xlu0 %4023, %v2234
        %v4025 = vpop.permute.xlu0 %4024
        %4026 = vset.pattern.permute.xlu0 4
        %4027 = vperm.xlu0 %4026, %v2235
        %v4028 = vpop.permute.xlu0 %4027
        %vm4029 = vcmp.eq.s32.totalorder %v3839, 1
        %vm4030 = vcmp.eq.s32.totalorder %v3842, 1
        %vm4031 = vcmp.eq.s32.totalorder %v3845, 1
        %vm4032 = vcmp.eq.s32.totalorder %v3848, 1
        %vm4033 = vcmp.eq.s32.totalorder %v3851, 1
        %vm4034 = vcmp.eq.s32.totalorder %v3854, 1
        %vm4035 = vcmp.eq.s32.totalorder %v3857, 1
        %vm4036 = vcmp.eq.s32.totalorder %v3860, 1
        %vm4037 = vcmp.eq.s32.totalorder %v3863, 1
        %vm4038 = vcmp.eq.s32.totalorder %v3866, 1
        %vm4039 = vcmp.eq.s32.totalorder %v3869, 1
        %vm4040 = vcmp.eq.s32.totalorder %v3872, 1
        %vm4041 = vcmp.eq.s32.totalorder %v3875, 1
        %vm4042 = vcmp.eq.s32.totalorder %v3878, 1
        %vm4043 = vcmp.eq.s32.totalorder %v3881, 1
        %vm4044 = vcmp.eq.s32.totalorder %v3884, 1
        %vm4045 = vcmp.eq.s32.totalorder %v3887, 1
        %vm4046 = vcmp.eq.s32.totalorder %v3890, 1
        %vm4047 = vcmp.eq.s32.totalorder %v3893, 1
        %vm4048 = vcmp.eq.s32.totalorder %v3896, 1
        %vm4049 = vcmp.eq.s32.totalorder %v3899, 1
        %vm4050 = vcmp.eq.s32.totalorder %v3902, 1
        %vm4051 = vcmp.eq.s32.totalorder %v3905, 1
        %vm4052 = vcmp.eq.s32.totalorder %v3908, 1
        %vm4053 = vcmp.eq.s32.totalorder %v3911, 1
        %vm4054 = vcmp.eq.s32.totalorder %v3914, 1
        %vm4055 = vcmp.eq.s32.totalorder %v3917, 1
        %vm4056 = vcmp.eq.s32.totalorder %v3920, 1
        %vm4057 = vcmp.eq.s32.totalorder %v3923, 1
        %vm4058 = vcmp.eq.s32.totalorder %v3926, 1
        %vm4059 = vcmp.eq.s32.totalorder %v3929, 1
        %vm4060 = vcmp.eq.s32.totalorder %v3932, 1
        %vm4061 = vcmp.eq.s32.totalorder %v3935, 1
        %vm4062 = vcmp.eq.s32.totalorder %v3938, 1
        %vm4063 = vcmp.eq.s32.totalorder %v3941, 1
        %vm4064 = vcmp.eq.s32.totalorder %v3944, 1
        %vm4065 = vcmp.eq.s32.totalorder %v3947, 1
        %vm4066 = vcmp.eq.s32.totalorder %v3950, 1
        %vm4067 = vcmp.eq.s32.totalorder %v3953, 1
        %vm4068 = vcmp.eq.s32.totalorder %v3956, 1
        %vm4069 = vcmp.eq.s32.totalorder %v3959, 1
        %vm4070 = vcmp.eq.s32.totalorder %v3962, 1
        %vm4071 = vcmp.eq.s32.totalorder %v3965, 1
        %vm4072 = vcmp.eq.s32.totalorder %v3968, 1
        %vm4073 = vcmp.eq.s32.totalorder %v3971, 1
        %vm4074 = vcmp.eq.s32.totalorder %v3974, 1
        %vm4075 = vcmp.eq.s32.totalorder %v3977, 1
        %vm4076 = vcmp.eq.s32.totalorder %v3980, 1
        %vm4077 = vcmp.eq.s32.totalorder %v3983, 1
        %vm4078 = vcmp.eq.s32.totalorder %v3986, 1
        %vm4079 = vcmp.eq.s32.totalorder %v3989, 1
        %vm4080 = vcmp.eq.s32.totalorder %v3992, 1
        %vm4081 = vcmp.eq.s32.totalorder %v3995, 1
        %vm4082 = vcmp.eq.s32.totalorder %v3998, 1
        %vm4083 = vcmp.eq.s32.totalorder %v4001, 1
        %vm4084 = vcmp.eq.s32.totalorder %v4004, 1
        %vm4085 = vcmp.eq.s32.totalorder %v4007, 1
        %vm4086 = vcmp.eq.s32.totalorder %v4010, 1
        %vm4087 = vcmp.eq.s32.totalorder %v4013, 1
        %vm4088 = vcmp.eq.s32.totalorder %v4016, 1
        %vm4089 = vcmp.eq.s32.totalorder %v4019, 1
        %vm4090 = vcmp.eq.s32.totalorder %v4022, 1
        %vm4091 = vcmp.eq.s32.totalorder %v4025, 1
        %vm4092 = vcmp.eq.s32.totalorder %v4028, 1
        %v4093 = vsel %vm4029, %v1849, -1e+30
        %v4094 = vsel %vm4030, %v1850, -1e+30
        %v4095 = vsel %vm4031, %v1851, -1e+30
        %v4096 = vsel %vm4032, %v1852, -1e+30
        %v4097 = vsel %vm4033, %v1853, -1e+30
        %v4098 = vsel %vm4034, %v1854, -1e+30
        %v4099 = vsel %vm4035, %v1855, -1e+30
        %v4100 = vsel %vm4036, %v1856, -1e+30
        %v4101 = vsel %vm4037, %v1857, -1e+30
        %v4102 = vsel %vm4038, %v1858, -1e+30
        %v4103 = vsel %vm4039, %v1859, -1e+30
        %v4104 = vsel %vm4040, %v1860, -1e+30
        %v4105 = vsel %vm4041, %v1861, -1e+30
        %v4106 = vsel %vm4042, %v1862, -1e+30
        %v4107 = vsel %vm4043, %v1863, -1e+30
        %v4108 = vsel %vm4044, %v1864, -1e+30
        %v4109 = vsel %vm4045, %v1865, -1e+30
        %v4110 = vsel %vm4046, %v1866, -1e+30
        %v4111 = vsel %vm4047, %v1867, -1e+30
        %v4112 = vsel %vm4048, %v1868, -1e+30
        %v4113 = vsel %vm4049, %v1869, -1e+30
        %v4114 = vsel %vm4050, %v1870, -1e+30
        %v4115 = vsel %vm4051, %v1871, -1e+30
        %v4116 = vsel %vm4052, %v1872, -1e+30
        %v4117 = vsel %vm4053, %v1873, -1e+30
        %v4118 = vsel %vm4054, %v1874, -1e+30
        %v4119 = vsel %vm4055, %v1875, -1e+30
        %v4120 = vsel %vm4056, %v1876, -1e+30
        %v4121 = vsel %vm4057, %v1877, -1e+30
        %v4122 = vsel %vm4058, %v1878, -1e+30
        %v4123 = vsel %vm4059, %v1879, -1e+30
        %v4124 = vsel %vm4060, %v1880, -1e+30
        %v4125 = vsel %vm4061, %v1881, -1e+30
        %v4126 = vsel %vm4062, %v1882, -1e+30
        %v4127 = vsel %vm4063, %v1883, -1e+30
        %v4128 = vsel %vm4064, %v1884, -1e+30
        %v4129 = vsel %vm4065, %v1885, -1e+30
        %v4130 = vsel %vm4066, %v1886, -1e+30
        %v4131 = vsel %vm4067, %v1887, -1e+30
        %v4132 = vsel %vm4068, %v1888, -1e+30
        %v4133 = vsel %vm4069, %v1889, -1e+30
        %v4134 = vsel %vm4070, %v1890, -1e+30
        %v4135 = vsel %vm4071, %v1891, -1e+30
        %v4136 = vsel %vm4072, %v1892, -1e+30
        %v4137 = vsel %vm4073, %v1893, -1e+30
        %v4138 = vsel %vm4074, %v1894, -1e+30
        %v4139 = vsel %vm4075, %v1895, -1e+30
        %v4140 = vsel %vm4076, %v1896, -1e+30
        %v4141 = vsel %vm4077, %v1897, -1e+30
        %v4142 = vsel %vm4078, %v1898, -1e+30
        %v4143 = vsel %vm4079, %v1899, -1e+30
        %v4144 = vsel %vm4080, %v1900, -1e+30
        %v4145 = vsel %vm4081, %v1901, -1e+30
        %v4146 = vsel %vm4082, %v1902, -1e+30
        %v4147 = vsel %vm4083, %v1903, -1e+30
        %v4148 = vsel %vm4084, %v1904, -1e+30
        %v4149 = vsel %vm4085, %v1905, -1e+30
        %v4150 = vsel %vm4086, %v1906, -1e+30
        %v4151 = vsel %vm4087, %v1907, -1e+30
        %v4152 = vsel %vm4088, %v1908, -1e+30
        %v4153 = vsel %vm4089, %v1909, -1e+30
        %v4154 = vsel %vm4090, %v1910, -1e+30
        %v4155 = vsel %vm4091, %v1911, -1e+30
        %v4156 = vsel %vm4092, %v1912, -1e+30
        %v4157 = vmax.f32 %v3773, %v4093
        %v4158 = vmax.f32 %v3774, %v4094
        %v4159 = vmax.f32 %v3775, %v4095
        %v4160 = vmax.f32 %v3776, %v4096
        %v4161 = vmax.f32 %v3777, %v4097
        %v4162 = vmax.f32 %v3778, %v4098
        %v4163 = vmax.f32 %v3779, %v4099
        %v4164 = vmax.f32 %v3780, %v4100
        %v4165 = vmax.f32 %v3781, %v4101
        %v4166 = vmax.f32 %v3782, %v4102
        %v4167 = vmax.f32 %v3783, %v4103
        %v4168 = vmax.f32 %v3784, %v4104
        %v4169 = vmax.f32 %v3785, %v4105
        %v4170 = vmax.f32 %v3786, %v4106
        %v4171 = vmax.f32 %v3787, %v4107
        %v4172 = vmax.f32 %v3788, %v4108
        %v4173 = vmax.f32 %v3789, %v4109
        %v4174 = vmax.f32 %v3790, %v4110
        %v4175 = vmax.f32 %v3791, %v4111
        %v4176 = vmax.f32 %v3792, %v4112
        %v4177 = vmax.f32 %v3793, %v4113
        %v4178 = vmax.f32 %v3794, %v4114
        %v4179 = vmax.f32 %v3795, %v4115
        %v4180 = vmax.f32 %v3796, %v4116
        %v4181 = vmax.f32 %v3797, %v4117
        %v4182 = vmax.f32 %v3798, %v4118
        %v4183 = vmax.f32 %v3799, %v4119
        %v4184 = vmax.f32 %v3800, %v4120
        %v4185 = vmax.f32 %v3801, %v4121
        %v4186 = vmax.f32 %v3802, %v4122
        %v4187 = vmax.f32 %v3803, %v4123
        %v4188 = vmax.f32 %v3804, %v4124
        %v4189 = vmax.f32 %v3805, %v4125
        %v4190 = vmax.f32 %v3806, %v4126
        %v4191 = vmax.f32 %v3807, %v4127
        %v4192 = vmax.f32 %v3808, %v4128
        %v4193 = vmax.f32 %v3809, %v4129
        %v4194 = vmax.f32 %v3810, %v4130
        %v4195 = vmax.f32 %v3811, %v4131
        %v4196 = vmax.f32 %v3812, %v4132
        %v4197 = vmax.f32 %v3813, %v4133
        %v4198 = vmax.f32 %v3814, %v4134
        %v4199 = vmax.f32 %v3815, %v4135
        %v4200 = vmax.f32 %v3816, %v4136
        %v4201 = vmax.f32 %v3817, %v4137
        %v4202 = vmax.f32 %v3818, %v4138
        %v4203 = vmax.f32 %v3819, %v4139
        %v4204 = vmax.f32 %v3820, %v4140
        %v4205 = vmax.f32 %v3821, %v4141
        %v4206 = vmax.f32 %v3822, %v4142
        %v4207 = vmax.f32 %v3823, %v4143
        %v4208 = vmax.f32 %v3824, %v4144
        %v4209 = vmax.f32 %v3825, %v4145
        %v4210 = vmax.f32 %v3826, %v4146
        %v4211 = vmax.f32 %v3827, %v4147
        %v4212 = vmax.f32 %v3828, %v4148
        %v4213 = vmax.f32 %v3829, %v4149
        %v4214 = vmax.f32 %v3830, %v4150
        %v4215 = vmax.f32 %v3831, %v4151
        %v4216 = vmax.f32 %v3832, %v4152
        %v4217 = vmax.f32 %v3833, %v4153
        %v4218 = vmax.f32 %v3834, %v4154
        %v4219 = vmax.f32 %v3835, %v4155
        %v4220 = vmax.f32 %v3836, %v4156
        %4221 = vset.pattern.permute.xlu0 5
        %4222 = vperm.xlu0 %4221, %v2172
        %v4223 = vpop.permute.xlu0 %4222
        %4224 = vset.pattern.permute.xlu0 5
        %4225 = vperm.xlu0 %4224, %v2173
        %v4226 = vpop.permute.xlu0 %4225
        %4227 = vset.pattern.permute.xlu0 5
        %4228 = vperm.xlu0 %4227, %v2174
        %v4229 = vpop.permute.xlu0 %4228
        %4230 = vset.pattern.permute.xlu0 5
        %4231 = vperm.xlu0 %4230, %v2175
        %v4232 = vpop.permute.xlu0 %4231
        %4233 = vset.pattern.permute.xlu0 5
        %4234 = vperm.xlu0 %4233, %v2176
        %v4235 = vpop.permute.xlu0 %4234
        %4236 = vset.pattern.permute.xlu0 5
        %4237 = vperm.xlu0 %4236, %v2177
        %v4238 = vpop.permute.xlu0 %4237
        %4239 = vset.pattern.permute.xlu0 5
        %4240 = vperm.xlu0 %4239, %v2178
        %v4241 = vpop.permute.xlu0 %4240
        %4242 = vset.pattern.permute.xlu0 5
        %4243 = vperm.xlu0 %4242, %v2179
        %v4244 = vpop.permute.xlu0 %4243
        %4245 = vset.pattern.permute.xlu0 5
        %4246 = vperm.xlu0 %4245, %v2180
        %v4247 = vpop.permute.xlu0 %4246
        %4248 = vset.pattern.permute.xlu0 5
        %4249 = vperm.xlu0 %4248, %v2181
        %v4250 = vpop.permute.xlu0 %4249
        %4251 = vset.pattern.permute.xlu0 5
        %4252 = vperm.xlu0 %4251, %v2182
        %v4253 = vpop.permute.xlu0 %4252
        %4254 = vset.pattern.permute.xlu0 5
        %4255 = vperm.xlu0 %4254, %v2183
        %v4256 = vpop.permute.xlu0 %4255
        %4257 = vset.pattern.permute.xlu0 5
        %4258 = vperm.xlu0 %4257, %v2184
        %v4259 = vpop.permute.xlu0 %4258
        %4260 = vset.pattern.permute.xlu0 5
        %4261 = vperm.xlu0 %4260, %v2185
        %v4262 = vpop.permute.xlu0 %4261
        %4263 = vset.pattern.permute.xlu0 5
        %4264 = vperm.xlu0 %4263, %v2186
        %v4265 = vpop.permute.xlu0 %4264
        %4266 = vset.pattern.permute.xlu0 5
        %4267 = vperm.xlu0 %4266, %v2187
        %v4268 = vpop.permute.xlu0 %4267
        %4269 = vset.pattern.permute.xlu0 5
        %4270 = vperm.xlu0 %4269, %v2188
        %v4271 = vpop.permute.xlu0 %4270
        %4272 = vset.pattern.permute.xlu0 5
        %4273 = vperm.xlu0 %4272, %v2189
        %v4274 = vpop.permute.xlu0 %4273
        %4275 = vset.pattern.permute.xlu0 5
        %4276 = vperm.xlu0 %4275, %v2190
        %v4277 = vpop.permute.xlu0 %4276
        %4278 = vset.pattern.permute.xlu0 5
        %4279 = vperm.xlu0 %4278, %v2191
        %v4280 = vpop.permute.xlu0 %4279
        %4281 = vset.pattern.permute.xlu0 5
        %4282 = vperm.xlu0 %4281, %v2192
        %v4283 = vpop.permute.xlu0 %4282
        %4284 = vset.pattern.permute.xlu0 5
        %4285 = vperm.xlu0 %4284, %v2193
        %v4286 = vpop.permute.xlu0 %4285
        %4287 = vset.pattern.permute.xlu0 5
        %4288 = vperm.xlu0 %4287, %v2194
        %v4289 = vpop.permute.xlu0 %4288
        %4290 = vset.pattern.permute.xlu0 5
        %4291 = vperm.xlu0 %4290, %v2195
        %v4292 = vpop.permute.xlu0 %4291
        %4293 = vset.pattern.permute.xlu0 5
        %4294 = vperm.xlu0 %4293, %v2196
        %v4295 = vpop.permute.xlu0 %4294
        %4296 = vset.pattern.permute.xlu0 5
        %4297 = vperm.xlu0 %4296, %v2197
        %v4298 = vpop.permute.xlu0 %4297
        %4299 = vset.pattern.permute.xlu0 5
        %4300 = vperm.xlu0 %4299, %v2198
        %v4301 = vpop.permute.xlu0 %4300
        %4302 = vset.pattern.permute.xlu0 5
        %4303 = vperm.xlu0 %4302, %v2199
        %v4304 = vpop.permute.xlu0 %4303
        %4305 = vset.pattern.permute.xlu0 5
        %4306 = vperm.xlu0 %4305, %v2200
        %v4307 = vpop.permute.xlu0 %4306
        %4308 = vset.pattern.permute.xlu0 5
        %4309 = vperm.xlu0 %4308, %v2201
        %v4310 = vpop.permute.xlu0 %4309
        %4311 = vset.pattern.permute.xlu0 5
        %4312 = vperm.xlu0 %4311, %v2202
        %v4313 = vpop.permute.xlu0 %4312
        %4314 = vset.pattern.permute.xlu0 5
        %4315 = vperm.xlu0 %4314, %v2203
        %v4316 = vpop.permute.xlu0 %4315
        %4317 = vset.pattern.permute.xlu0 5
        %4318 = vperm.xlu0 %4317, %v2204
        %v4319 = vpop.permute.xlu0 %4318
        %4320 = vset.pattern.permute.xlu0 5
        %4321 = vperm.xlu0 %4320, %v2205
        %v4322 = vpop.permute.xlu0 %4321
        %4323 = vset.pattern.permute.xlu0 5
        %4324 = vperm.xlu0 %4323, %v2206
        %v4325 = vpop.permute.xlu0 %4324
        %4326 = vset.pattern.permute.xlu0 5
        %4327 = vperm.xlu0 %4326, %v2207
        %v4328 = vpop.permute.xlu0 %4327
        %4329 = vset.pattern.permute.xlu0 5
        %4330 = vperm.xlu0 %4329, %v2208
        %v4331 = vpop.permute.xlu0 %4330
        %4332 = vset.pattern.permute.xlu0 5
        %4333 = vperm.xlu0 %4332, %v2209
        %v4334 = vpop.permute.xlu0 %4333
        %4335 = vset.pattern.permute.xlu0 5
        %4336 = vperm.xlu0 %4335, %v2210
        %v4337 = vpop.permute.xlu0 %4336
        %4338 = vset.pattern.permute.xlu0 5
        %4339 = vperm.xlu0 %4338, %v2211
        %v4340 = vpop.permute.xlu0 %4339
        %4341 = vset.pattern.permute.xlu0 5
        %4342 = vperm.xlu0 %4341, %v2212
        %v4343 = vpop.permute.xlu0 %4342
        %4344 = vset.pattern.permute.xlu0 5
        %4345 = vperm.xlu0 %4344, %v2213
        %v4346 = vpop.permute.xlu0 %4345
        %4347 = vset.pattern.permute.xlu0 5
        %4348 = vperm.xlu0 %4347, %v2214
        %v4349 = vpop.permute.xlu0 %4348
        %4350 = vset.pattern.permute.xlu0 5
        %4351 = vperm.xlu0 %4350, %v2215
        %v4352 = vpop.permute.xlu0 %4351
        %4353 = vset.pattern.permute.xlu0 5
        %4354 = vperm.xlu0 %4353, %v2216
        %v4355 = vpop.permute.xlu0 %4354
        %4356 = vset.pattern.permute.xlu0 5
        %4357 = vperm.xlu0 %4356, %v2217
        %v4358 = vpop.permute.xlu0 %4357
        %4359 = vset.pattern.permute.xlu0 5
        %4360 = vperm.xlu0 %4359, %v2218
        %v4361 = vpop.permute.xlu0 %4360
        %4362 = vset.pattern.permute.xlu0 5
        %4363 = vperm.xlu0 %4362, %v2219
        %v4364 = vpop.permute.xlu0 %4363
        %4365 = vset.pattern.permute.xlu0 5
        %4366 = vperm.xlu0 %4365, %v2220
        %v4367 = vpop.permute.xlu0 %4366
        %4368 = vset.pattern.permute.xlu0 5
        %4369 = vperm.xlu0 %4368, %v2221
        %v4370 = vpop.permute.xlu0 %4369
        %4371 = vset.pattern.permute.xlu0 5
        %4372 = vperm.xlu0 %4371, %v2222
        %v4373 = vpop.permute.xlu0 %4372
        %4374 = vset.pattern.permute.xlu0 5
        %4375 = vperm.xlu0 %4374, %v2223
        %v4376 = vpop.permute.xlu0 %4375
        %4377 = vset.pattern.permute.xlu0 5
        %4378 = vperm.xlu0 %4377, %v2224
        %v4379 = vpop.permute.xlu0 %4378
        %4380 = vset.pattern.permute.xlu0 5
        %4381 = vperm.xlu0 %4380, %v2225
        %v4382 = vpop.permute.xlu0 %4381
        %4383 = vset.pattern.permute.xlu0 5
        %4384 = vperm.xlu0 %4383, %v2226
        %v4385 = vpop.permute.xlu0 %4384
        %4386 = vset.pattern.permute.xlu0 5
        %4387 = vperm.xlu0 %4386, %v2227
        %v4388 = vpop.permute.xlu0 %4387
        %4389 = vset.pattern.permute.xlu0 5
        %4390 = vperm.xlu0 %4389, %v2228
        %v4391 = vpop.permute.xlu0 %4390
        %4392 = vset.pattern.permute.xlu0 5
        %4393 = vperm.xlu0 %4392, %v2229
        %v4394 = vpop.permute.xlu0 %4393
        %4395 = vset.pattern.permute.xlu0 5
        %4396 = vperm.xlu0 %4395, %v2230
        %v4397 = vpop.permute.xlu0 %4396
        %4398 = vset.pattern.permute.xlu0 5
        %4399 = vperm.xlu0 %4398, %v2231
        %v4400 = vpop.permute.xlu0 %4399
        %4401 = vset.pattern.permute.xlu0 5
        %4402 = vperm.xlu0 %4401, %v2232
        %v4403 = vpop.permute.xlu0 %4402
        %4404 = vset.pattern.permute.xlu0 5
        %4405 = vperm.xlu0 %4404, %v2233
        %v4406 = vpop.permute.xlu0 %4405
        %4407 = vset.pattern.permute.xlu0 5
        %4408 = vperm.xlu0 %4407, %v2234
        %v4409 = vpop.permute.xlu0 %4408
        %4410 = vset.pattern.permute.xlu0 5
        %4411 = vperm.xlu0 %4410, %v2235
        %v4412 = vpop.permute.xlu0 %4411
        %vm4413 = vcmp.eq.s32.totalorder %v4223, 1
        %vm4414 = vcmp.eq.s32.totalorder %v4226, 1
        %vm4415 = vcmp.eq.s32.totalorder %v4229, 1
        %vm4416 = vcmp.eq.s32.totalorder %v4232, 1
        %vm4417 = vcmp.eq.s32.totalorder %v4235, 1
        %vm4418 = vcmp.eq.s32.totalorder %v4238, 1
        %vm4419 = vcmp.eq.s32.totalorder %v4241, 1
        %vm4420 = vcmp.eq.s32.totalorder %v4244, 1
        %vm4421 = vcmp.eq.s32.totalorder %v4247, 1
        %vm4422 = vcmp.eq.s32.totalorder %v4250, 1
        %vm4423 = vcmp.eq.s32.totalorder %v4253, 1
        %vm4424 = vcmp.eq.s32.totalorder %v4256, 1
        %vm4425 = vcmp.eq.s32.totalorder %v4259, 1
        %vm4426 = vcmp.eq.s32.totalorder %v4262, 1
        %vm4427 = vcmp.eq.s32.totalorder %v4265, 1
        %vm4428 = vcmp.eq.s32.totalorder %v4268, 1
        %vm4429 = vcmp.eq.s32.totalorder %v4271, 1
        %vm4430 = vcmp.eq.s32.totalorder %v4274, 1
        %vm4431 = vcmp.eq.s32.totalorder %v4277, 1
        %vm4432 = vcmp.eq.s32.totalorder %v4280, 1
        %vm4433 = vcmp.eq.s32.totalorder %v4283, 1
        %vm4434 = vcmp.eq.s32.totalorder %v4286, 1
        %vm4435 = vcmp.eq.s32.totalorder %v4289, 1
        %vm4436 = vcmp.eq.s32.totalorder %v4292, 1
        %vm4437 = vcmp.eq.s32.totalorder %v4295, 1
        %vm4438 = vcmp.eq.s32.totalorder %v4298, 1
        %vm4439 = vcmp.eq.s32.totalorder %v4301, 1
        %vm4440 = vcmp.eq.s32.totalorder %v4304, 1
        %vm4441 = vcmp.eq.s32.totalorder %v4307, 1
        %vm4442 = vcmp.eq.s32.totalorder %v4310, 1
        %vm4443 = vcmp.eq.s32.totalorder %v4313, 1
        %vm4444 = vcmp.eq.s32.totalorder %v4316, 1
        %vm4445 = vcmp.eq.s32.totalorder %v4319, 1
        %vm4446 = vcmp.eq.s32.totalorder %v4322, 1
        %vm4447 = vcmp.eq.s32.totalorder %v4325, 1
        %vm4448 = vcmp.eq.s32.totalorder %v4328, 1
        %vm4449 = vcmp.eq.s32.totalorder %v4331, 1
        %vm4450 = vcmp.eq.s32.totalorder %v4334, 1
        %vm4451 = vcmp.eq.s32.totalorder %v4337, 1
        %vm4452 = vcmp.eq.s32.totalorder %v4340, 1
        %vm4453 = vcmp.eq.s32.totalorder %v4343, 1
        %vm4454 = vcmp.eq.s32.totalorder %v4346, 1
        %vm4455 = vcmp.eq.s32.totalorder %v4349, 1
        %vm4456 = vcmp.eq.s32.totalorder %v4352, 1
        %vm4457 = vcmp.eq.s32.totalorder %v4355, 1
        %vm4458 = vcmp.eq.s32.totalorder %v4358, 1
        %vm4459 = vcmp.eq.s32.totalorder %v4361, 1
        %vm4460 = vcmp.eq.s32.totalorder %v4364, 1
        %vm4461 = vcmp.eq.s32.totalorder %v4367, 1
        %vm4462 = vcmp.eq.s32.totalorder %v4370, 1
        %vm4463 = vcmp.eq.s32.totalorder %v4373, 1
        %vm4464 = vcmp.eq.s32.totalorder %v4376, 1
        %vm4465 = vcmp.eq.s32.totalorder %v4379, 1
        %vm4466 = vcmp.eq.s32.totalorder %v4382, 1
        %vm4467 = vcmp.eq.s32.totalorder %v4385, 1
        %vm4468 = vcmp.eq.s32.totalorder %v4388, 1
        %vm4469 = vcmp.eq.s32.totalorder %v4391, 1
        %vm4470 = vcmp.eq.s32.totalorder %v4394, 1
        %vm4471 = vcmp.eq.s32.totalorder %v4397, 1
        %vm4472 = vcmp.eq.s32.totalorder %v4400, 1
        %vm4473 = vcmp.eq.s32.totalorder %v4403, 1
        %vm4474 = vcmp.eq.s32.totalorder %v4406, 1
        %vm4475 = vcmp.eq.s32.totalorder %v4409, 1
        %vm4476 = vcmp.eq.s32.totalorder %v4412, 1
        %v4477 = vsel %vm4413, %v3067, -1e+30
        %v4478 = vsel %vm4414, %v3066, -1e+30
        %v4479 = vsel %vm4415, %v3065, -1e+30
        %v4480 = vsel %vm4416, %v3064, -1e+30
        %v4481 = vsel %vm4417, %v3063, -1e+30
        %v4482 = vsel %vm4418, %v3062, -1e+30
        %v4483 = vsel %vm4419, %v3061, -1e+30
        %v4484 = vsel %vm4420, %v3060, -1e+30
        %v4485 = vsel %vm4421, %v3059, -1e+30
        %v4486 = vsel %vm4422, %v3058, -1e+30
        %v4487 = vsel %vm4423, %v3057, -1e+30
        %v4488 = vsel %vm4424, %v3056, -1e+30
        %v4489 = vsel %vm4425, %v3055, -1e+30
        %v4490 = vsel %vm4426, %v3054, -1e+30
        %v4491 = vsel %vm4427, %v3053, -1e+30
        %v4492 = vsel %vm4428, %v3052, -1e+30
        %v4493 = vsel %vm4429, %v3051, -1e+30
        %v4494 = vsel %vm4430, %v3050, -1e+30
        %v4495 = vsel %vm4431, %v3049, -1e+30
        %v4496 = vsel %vm4432, %v3048, -1e+30
        %v4497 = vsel %vm4433, %v3047, -1e+30
        %v4498 = vsel %vm4434, %v3046, -1e+30
        %v4499 = vsel %vm4435, %v3045, -1e+30
        %v4500 = vsel %vm4436, %v3044, -1e+30
        %v4501 = vsel %vm4437, %v3043, -1e+30
        %v4502 = vsel %vm4438, %v3042, -1e+30
        %v4503 = vsel %vm4439, %v3041, -1e+30
        %v4504 = vsel %vm4440, %v3040, -1e+30
        %v4505 = vsel %vm4441, %v3039, -1e+30
        %v4506 = vsel %vm4442, %v3038, -1e+30
        %v4507 = vsel %vm4443, %v3037, -1e+30
        %v4508 = vsel %vm4444, %v3036, -1e+30
        %v4509 = vsel %vm4445, %v3035, -1e+30
        %v4510 = vsel %vm4446, %v3034, -1e+30
        %v4511 = vsel %vm4447, %v3033, -1e+30
        %v4512 = vsel %vm4448, %v3032, -1e+30
        %v4513 = vsel %vm4449, %v3031, -1e+30
        %v4514 = vsel %vm4450, %v3030, -1e+30
        %v4515 = vsel %vm4451, %v3029, -1e+30
        %v4516 = vsel %vm4452, %v3028, -1e+30
        %v4517 = vsel %vm4453, %v3027, -1e+30
        %v4518 = vsel %vm4454, %v3026, -1e+30
        %v4519 = vsel %vm4455, %v3025, -1e+30
        %v4520 = vsel %vm4456, %v3024, -1e+30
        %v4521 = vsel %vm4457, %v3023, -1e+30
        %v4522 = vsel %vm4458, %v3022, -1e+30
        %v4523 = vsel %vm4459, %v3021, -1e+30
        %v4524 = vsel %vm4460, %v3020, -1e+30
        %v4525 = vsel %vm4461, %v3019, -1e+30
        %v4526 = vsel %vm4462, %v3018, -1e+30
        %v4527 = vsel %vm4463, %v3017, -1e+30
        %v4528 = vsel %vm4464, %v3016, -1e+30
        %v4529 = vsel %vm4465, %v3015, -1e+30
        %v4530 = vsel %vm4466, %v3014, -1e+30
        %v4531 = vsel %vm4467, %v3013, -1e+30
        %v4532 = vsel %vm4468, %v3012, -1e+30
        %v4533 = vsel %vm4469, %v3011, -1e+30
        %v4534 = vsel %vm4470, %v3010, -1e+30
        %v4535 = vsel %vm4471, %v3009, -1e+30
        %v4536 = vsel %vm4472, %v3008, -1e+30
        %v4537 = vsel %vm4473, %v3007, -1e+30
        %v4538 = vsel %vm4474, %v3006, -1e+30
        %v4539 = vsel %vm4475, %v3005, -1e+30
        %v4540 = vsel %vm4476, %v3068, -1e+30
        %v4541 = vmax.f32 %v4157, %v4477
        %v4542 = vmax.f32 %v4158, %v4478
        %v4543 = vmax.f32 %v4159, %v4479
        %v4544 = vmax.f32 %v4160, %v4480
        %v4545 = vmax.f32 %v4161, %v4481
        %v4546 = vmax.f32 %v4162, %v4482
        %v4547 = vmax.f32 %v4163, %v4483
        %v4548 = vmax.f32 %v4164, %v4484
        %v4549 = vmax.f32 %v4165, %v4485
        %v4550 = vmax.f32 %v4166, %v4486
        %v4551 = vmax.f32 %v4167, %v4487
        %v4552 = vmax.f32 %v4168, %v4488
        %v4553 = vmax.f32 %v4169, %v4489
        %v4554 = vmax.f32 %v4170, %v4490
        %v4555 = vmax.f32 %v4171, %v4491
        %v4556 = vmax.f32 %v4172, %v4492
        %v4557 = vmax.f32 %v4173, %v4493
        %v4558 = vmax.f32 %v4174, %v4494
        %v4559 = vmax.f32 %v4175, %v4495
        %v4560 = vmax.f32 %v4176, %v4496
        %v4561 = vmax.f32 %v4177, %v4497
        %v4562 = vmax.f32 %v4178, %v4498
        %v4563 = vmax.f32 %v4179, %v4499
        %v4564 = vmax.f32 %v4180, %v4500
        %v4565 = vmax.f32 %v4181, %v4501
        %v4566 = vmax.f32 %v4182, %v4502
        %v4567 = vmax.f32 %v4183, %v4503
        %v4568 = vmax.f32 %v4184, %v4504
        %v4569 = vmax.f32 %v4185, %v4505
        %v4570 = vmax.f32 %v4186, %v4506
        %v4571 = vmax.f32 %v4187, %v4507
        %v4572 = vmax.f32 %v4188, %v4508
        %v4573 = vmax.f32 %v4189, %v4509
        %v4574 = vmax.f32 %v4190, %v4510
        %v4575 = vmax.f32 %v4191, %v4511
        %v4576 = vmax.f32 %v4192, %v4512
        %v4577 = vmax.f32 %v4193, %v4513
        %v4578 = vmax.f32 %v4194, %v4514
        %v4579 = vmax.f32 %v4195, %v4515
        %v4580 = vmax.f32 %v4196, %v4516
        %v4581 = vmax.f32 %v4197, %v4517
        %v4582 = vmax.f32 %v4198, %v4518
        %v4583 = vmax.f32 %v4199, %v4519
        %v4584 = vmax.f32 %v4200, %v4520
        %v4585 = vmax.f32 %v4201, %v4521
        %v4586 = vmax.f32 %v4202, %v4522
        %v4587 = vmax.f32 %v4203, %v4523
        %v4588 = vmax.f32 %v4204, %v4524
        %v4589 = vmax.f32 %v4205, %v4525
        %v4590 = vmax.f32 %v4206, %v4526
        %v4591 = vmax.f32 %v4207, %v4527
        %v4592 = vmax.f32 %v4208, %v4528
        %v4593 = vmax.f32 %v4209, %v4529
        %v4594 = vmax.f32 %v4210, %v4530
        %v4595 = vmax.f32 %v4211, %v4531
        %v4596 = vmax.f32 %v4212, %v4532
        %v4597 = vmax.f32 %v4213, %v4533
        %v4598 = vmax.f32 %v4214, %v4534
        %v4599 = vmax.f32 %v4215, %v4535
        %v4600 = vmax.f32 %v4216, %v4536
        %v4601 = vmax.f32 %v4217, %v4537
        %v4602 = vmax.f32 %v4218, %v4538
        %v4603 = vmax.f32 %v4219, %v4539
        %v4604 = vmax.f32 %v4220, %v4540
        %4605 = vset.pattern.permute.xlu0 6
        %4606 = vperm.xlu0 %4605, %v2172
        %v4607 = vpop.permute.xlu0 %4606
        %4608 = vset.pattern.permute.xlu0 6
        %4609 = vperm.xlu0 %4608, %v2173
        %v4610 = vpop.permute.xlu0 %4609
        %4611 = vset.pattern.permute.xlu0 6
        %4612 = vperm.xlu0 %4611, %v2174
        %v4613 = vpop.permute.xlu0 %4612
        %4614 = vset.pattern.permute.xlu0 6
        %4615 = vperm.xlu0 %4614, %v2175
        %v4616 = vpop.permute.xlu0 %4615
        %4617 = vset.pattern.permute.xlu0 6
        %4618 = vperm.xlu0 %4617, %v2176
        %v4619 = vpop.permute.xlu0 %4618
        %4620 = vset.pattern.permute.xlu0 6
        %4621 = vperm.xlu0 %4620, %v2177
        %v4622 = vpop.permute.xlu0 %4621
        %4623 = vset.pattern.permute.xlu0 6
        %4624 = vperm.xlu0 %4623, %v2178
        %v4625 = vpop.permute.xlu0 %4624
        %4626 = vset.pattern.permute.xlu0 6
        %4627 = vperm.xlu0 %4626, %v2179
        %v4628 = vpop.permute.xlu0 %4627
        %4629 = vset.pattern.permute.xlu0 6
        %4630 = vperm.xlu0 %4629, %v2180
        %v4631 = vpop.permute.xlu0 %4630
        %4632 = vset.pattern.permute.xlu0 6
        %4633 = vperm.xlu0 %4632, %v2181
        %v4634 = vpop.permute.xlu0 %4633
        %4635 = vset.pattern.permute.xlu0 6
        %4636 = vperm.xlu0 %4635, %v2182
        %v4637 = vpop.permute.xlu0 %4636
        %4638 = vset.pattern.permute.xlu0 6
        %4639 = vperm.xlu0 %4638, %v2183
        %v4640 = vpop.permute.xlu0 %4639
        %4641 = vset.pattern.permute.xlu0 6
        %4642 = vperm.xlu0 %4641, %v2184
        %v4643 = vpop.permute.xlu0 %4642
        %4644 = vset.pattern.permute.xlu0 6
        %4645 = vperm.xlu0 %4644, %v2185
        %v4646 = vpop.permute.xlu0 %4645
        %4647 = vset.pattern.permute.xlu0 6
        %4648 = vperm.xlu0 %4647, %v2186
        %v4649 = vpop.permute.xlu0 %4648
        %4650 = vset.pattern.permute.xlu0 6
        %4651 = vperm.xlu0 %4650, %v2187
        %v4652 = vpop.permute.xlu0 %4651
        %4653 = vset.pattern.permute.xlu0 6
        %4654 = vperm.xlu0 %4653, %v2188
        %v4655 = vpop.permute.xlu0 %4654
        %4656 = vset.pattern.permute.xlu0 6
        %4657 = vperm.xlu0 %4656, %v2189
        %v4658 = vpop.permute.xlu0 %4657
        %4659 = vset.pattern.permute.xlu0 6
        %4660 = vperm.xlu0 %4659, %v2190
        %v4661 = vpop.permute.xlu0 %4660
        %4662 = vset.pattern.permute.xlu0 6
        %4663 = vperm.xlu0 %4662, %v2191
        %v4664 = vpop.permute.xlu0 %4663
        %4665 = vset.pattern.permute.xlu0 6
        %4666 = vperm.xlu0 %4665, %v2192
        %v4667 = vpop.permute.xlu0 %4666
        %4668 = vset.pattern.permute.xlu0 6
        %4669 = vperm.xlu0 %4668, %v2193
        %v4670 = vpop.permute.xlu0 %4669
        %4671 = vset.pattern.permute.xlu0 6
        %4672 = vperm.xlu0 %4671, %v2194
        %v4673 = vpop.permute.xlu0 %4672
        %4674 = vset.pattern.permute.xlu0 6
        %4675 = vperm.xlu0 %4674, %v2195
        %v4676 = vpop.permute.xlu0 %4675
        %4677 = vset.pattern.permute.xlu0 6
        %4678 = vperm.xlu0 %4677, %v2196
        %v4679 = vpop.permute.xlu0 %4678
        %4680 = vset.pattern.permute.xlu0 6
        %4681 = vperm.xlu0 %4680, %v2197
        %v4682 = vpop.permute.xlu0 %4681
        %4683 = vset.pattern.permute.xlu0 6
        %4684 = vperm.xlu0 %4683, %v2198
        %v4685 = vpop.permute.xlu0 %4684
        %4686 = vset.pattern.permute.xlu0 6
        %4687 = vperm.xlu0 %4686, %v2199
        %v4688 = vpop.permute.xlu0 %4687
        %4689 = vset.pattern.permute.xlu0 6
        %4690 = vperm.xlu0 %4689, %v2200
        %v4691 = vpop.permute.xlu0 %4690
        %4692 = vset.pattern.permute.xlu0 6
        %4693 = vperm.xlu0 %4692, %v2201
        %v4694 = vpop.permute.xlu0 %4693
        %4695 = vset.pattern.permute.xlu0 6
        %4696 = vperm.xlu0 %4695, %v2202
        %v4697 = vpop.permute.xlu0 %4696
        %4698 = vset.pattern.permute.xlu0 6
        %4699 = vperm.xlu0 %4698, %v2203
        %v4700 = vpop.permute.xlu0 %4699
        %4701 = vset.pattern.permute.xlu0 6
        %4702 = vperm.xlu0 %4701, %v2204
        %v4703 = vpop.permute.xlu0 %4702
        %4704 = vset.pattern.permute.xlu0 6
        %4705 = vperm.xlu0 %4704, %v2205
        %v4706 = vpop.permute.xlu0 %4705
        %4707 = vset.pattern.permute.xlu0 6
        %4708 = vperm.xlu0 %4707, %v2206
        %v4709 = vpop.permute.xlu0 %4708
        %4710 = vset.pattern.permute.xlu0 6
        %4711 = vperm.xlu0 %4710, %v2207
        %v4712 = vpop.permute.xlu0 %4711
        %4713 = vset.pattern.permute.xlu0 6
        %4714 = vperm.xlu0 %4713, %v2208
        %v4715 = vpop.permute.xlu0 %4714
        %4716 = vset.pattern.permute.xlu0 6
        %4717 = vperm.xlu0 %4716, %v2209
        %v4718 = vpop.permute.xlu0 %4717
        %4719 = vset.pattern.permute.xlu0 6
        %4720 = vperm.xlu0 %4719, %v2210
        %v4721 = vpop.permute.xlu0 %4720
        %4722 = vset.pattern.permute.xlu0 6
        %4723 = vperm.xlu0 %4722, %v2211
        %v4724 = vpop.permute.xlu0 %4723
        %4725 = vset.pattern.permute.xlu0 6
        %4726 = vperm.xlu0 %4725, %v2212
        %v4727 = vpop.permute.xlu0 %4726
        %4728 = vset.pattern.permute.xlu0 6
        %4729 = vperm.xlu0 %4728, %v2213
        %v4730 = vpop.permute.xlu0 %4729
        %4731 = vset.pattern.permute.xlu0 6
        %4732 = vperm.xlu0 %4731, %v2214
        %v4733 = vpop.permute.xlu0 %4732
        %4734 = vset.pattern.permute.xlu0 6
        %4735 = vperm.xlu0 %4734, %v2215
        %v4736 = vpop.permute.xlu0 %4735
        %4737 = vset.pattern.permute.xlu0 6
        %4738 = vperm.xlu0 %4737, %v2216
        %v4739 = vpop.permute.xlu0 %4738
        %4740 = vset.pattern.permute.xlu0 6
        %4741 = vperm.xlu0 %4740, %v2217
        %v4742 = vpop.permute.xlu0 %4741
        %4743 = vset.pattern.permute.xlu0 6
        %4744 = vperm.xlu0 %4743, %v2218
        %v4745 = vpop.permute.xlu0 %4744
        %4746 = vset.pattern.permute.xlu0 6
        %4747 = vperm.xlu0 %4746, %v2219
        %v4748 = vpop.permute.xlu0 %4747
        %4749 = vset.pattern.permute.xlu0 6
        %4750 = vperm.xlu0 %4749, %v2220
        %v4751 = vpop.permute.xlu0 %4750
        %4752 = vset.pattern.permute.xlu0 6
        %4753 = vperm.xlu0 %4752, %v2221
        %v4754 = vpop.permute.xlu0 %4753
        %4755 = vset.pattern.permute.xlu0 6
        %4756 = vperm.xlu0 %4755, %v2222
        %v4757 = vpop.permute.xlu0 %4756
        %4758 = vset.pattern.permute.xlu0 6
        %4759 = vperm.xlu0 %4758, %v2223
        %v4760 = vpop.permute.xlu0 %4759
        %4761 = vset.pattern.permute.xlu0 6
        %4762 = vperm.xlu0 %4761, %v2224
        %v4763 = vpop.permute.xlu0 %4762
        %4764 = vset.pattern.permute.xlu0 6
        %4765 = vperm.xlu0 %4764, %v2225
        %v4766 = vpop.permute.xlu0 %4765
        %4767 = vset.pattern.permute.xlu0 6
        %4768 = vperm.xlu0 %4767, %v2226
        %v4769 = vpop.permute.xlu0 %4768
        %4770 = vset.pattern.permute.xlu0 6
        %4771 = vperm.xlu0 %4770, %v2227
        %v4772 = vpop.permute.xlu0 %4771
        %4773 = vset.pattern.permute.xlu0 6
        %4774 = vperm.xlu0 %4773, %v2228
        %v4775 = vpop.permute.xlu0 %4774
        %4776 = vset.pattern.permute.xlu0 6
        %4777 = vperm.xlu0 %4776, %v2229
        %v4778 = vpop.permute.xlu0 %4777
        %4779 = vset.pattern.permute.xlu0 6
        %4780 = vperm.xlu0 %4779, %v2230
        %v4781 = vpop.permute.xlu0 %4780
        %4782 = vset.pattern.permute.xlu0 6
        %4783 = vperm.xlu0 %4782, %v2231
        %v4784 = vpop.permute.xlu0 %4783
        %4785 = vset.pattern.permute.xlu0 6
        %4786 = vperm.xlu0 %4785, %v2232
        %v4787 = vpop.permute.xlu0 %4786
        %4788 = vset.pattern.permute.xlu0 6
        %4789 = vperm.xlu0 %4788, %v2233
        %v4790 = vpop.permute.xlu0 %4789
        %4791 = vset.pattern.permute.xlu0 6
        %4792 = vperm.xlu0 %4791, %v2234
        %v4793 = vpop.permute.xlu0 %4792
        %4794 = vset.pattern.permute.xlu0 6
        %4795 = vperm.xlu0 %4794, %v2235
        %v4796 = vpop.permute.xlu0 %4795
        %vm4797 = vcmp.eq.s32.totalorder %v4607, 1
        %vm4798 = vcmp.eq.s32.totalorder %v4610, 1
        %vm4799 = vcmp.eq.s32.totalorder %v4613, 1
        %vm4800 = vcmp.eq.s32.totalorder %v4616, 1
        %vm4801 = vcmp.eq.s32.totalorder %v4619, 1
        %vm4802 = vcmp.eq.s32.totalorder %v4622, 1
        %vm4803 = vcmp.eq.s32.totalorder %v4625, 1
        %vm4804 = vcmp.eq.s32.totalorder %v4628, 1
        %vm4805 = vcmp.eq.s32.totalorder %v4631, 1
        %vm4806 = vcmp.eq.s32.totalorder %v4634, 1
        %vm4807 = vcmp.eq.s32.totalorder %v4637, 1
        %vm4808 = vcmp.eq.s32.totalorder %v4640, 1
        %vm4809 = vcmp.eq.s32.totalorder %v4643, 1
        %vm4810 = vcmp.eq.s32.totalorder %v4646, 1
        %vm4811 = vcmp.eq.s32.totalorder %v4649, 1
        %vm4812 = vcmp.eq.s32.totalorder %v4652, 1
        %vm4813 = vcmp.eq.s32.totalorder %v4655, 1
        %vm4814 = vcmp.eq.s32.totalorder %v4658, 1
        %vm4815 = vcmp.eq.s32.totalorder %v4661, 1
        %vm4816 = vcmp.eq.s32.totalorder %v4664, 1
        %vm4817 = vcmp.eq.s32.totalorder %v4667, 1
        %vm4818 = vcmp.eq.s32.totalorder %v4670, 1
        %vm4819 = vcmp.eq.s32.totalorder %v4673, 1
        %vm4820 = vcmp.eq.s32.totalorder %v4676, 1
        %vm4821 = vcmp.eq.s32.totalorder %v4679, 1
        %vm4822 = vcmp.eq.s32.totalorder %v4682, 1
        %vm4823 = vcmp.eq.s32.totalorder %v4685, 1
        %vm4824 = vcmp.eq.s32.totalorder %v4688, 1
        %vm4825 = vcmp.eq.s32.totalorder %v4691, 1
        %vm4826 = vcmp.eq.s32.totalorder %v4694, 1
        %vm4827 = vcmp.eq.s32.totalorder %v4697, 1
        %vm4828 = vcmp.eq.s32.totalorder %v4700, 1
        %vm4829 = vcmp.eq.s32.totalorder %v4703, 1
        %vm4830 = vcmp.eq.s32.totalorder %v4706, 1
        %vm4831 = vcmp.eq.s32.totalorder %v4709, 1
        %vm4832 = vcmp.eq.s32.totalorder %v4712, 1
        %vm4833 = vcmp.eq.s32.totalorder %v4715, 1
        %vm4834 = vcmp.eq.s32.totalorder %v4718, 1
        %vm4835 = vcmp.eq.s32.totalorder %v4721, 1
        %vm4836 = vcmp.eq.s32.totalorder %v4724, 1
        %vm4837 = vcmp.eq.s32.totalorder %v4727, 1
        %vm4838 = vcmp.eq.s32.totalorder %v4730, 1
        %vm4839 = vcmp.eq.s32.totalorder %v4733, 1
        %vm4840 = vcmp.eq.s32.totalorder %v4736, 1
        %vm4841 = vcmp.eq.s32.totalorder %v4739, 1
        %vm4842 = vcmp.eq.s32.totalorder %v4742, 1
        %vm4843 = vcmp.eq.s32.totalorder %v4745, 1
        %vm4844 = vcmp.eq.s32.totalorder %v4748, 1
        %vm4845 = vcmp.eq.s32.totalorder %v4751, 1
        %vm4846 = vcmp.eq.s32.totalorder %v4754, 1
        %vm4847 = vcmp.eq.s32.totalorder %v4757, 1
        %vm4848 = vcmp.eq.s32.totalorder %v4760, 1
        %vm4849 = vcmp.eq.s32.totalorder %v4763, 1
        %vm4850 = vcmp.eq.s32.totalorder %v4766, 1
        %vm4851 = vcmp.eq.s32.totalorder %v4769, 1
        %vm4852 = vcmp.eq.s32.totalorder %v4772, 1
        %vm4853 = vcmp.eq.s32.totalorder %v4775, 1
        %vm4854 = vcmp.eq.s32.totalorder %v4778, 1
        %vm4855 = vcmp.eq.s32.totalorder %v4781, 1
        %vm4856 = vcmp.eq.s32.totalorder %v4784, 1
        %vm4857 = vcmp.eq.s32.totalorder %v4787, 1
        %vm4858 = vcmp.eq.s32.totalorder %v4790, 1
        %vm4859 = vcmp.eq.s32.totalorder %v4793, 1
        %vm4860 = vcmp.eq.s32.totalorder %v4796, 1
        %v4861 = vsel %vm4797, %v2169, -1e+30
        %v4862 = vsel %vm4798, %v2168, -1e+30
        %v4863 = vsel %vm4799, %v2167, -1e+30
        %v4864 = vsel %vm4800, %v2166, -1e+30
        %v4865 = vsel %vm4801, %v2165, -1e+30
        %v4866 = vsel %vm4802, %v2164, -1e+30
        %v4867 = vsel %vm4803, %v2163, -1e+30
        %v4868 = vsel %vm4804, %v2162, -1e+30
        %v4869 = vsel %vm4805, %v2161, -1e+30
        %v4870 = vsel %vm4806, %v2160, -1e+30
        %v4871 = vsel %vm4807, %v2159, -1e+30
        %v4872 = vsel %vm4808, %v2158, -1e+30
        %v4873 = vsel %vm4809, %v2157, -1e+30
        %v4874 = vsel %vm4810, %v2156, -1e+30
        %v4875 = vsel %vm4811, %v2155, -1e+30
        %v4876 = vsel %vm4812, %v2154, -1e+30
        %v4877 = vsel %vm4813, %v2153, -1e+30
        %v4878 = vsel %vm4814, %v2152, -1e+30
        %v4879 = vsel %vm4815, %v2151, -1e+30
        %v4880 = vsel %vm4816, %v2150, -1e+30
        %v4881 = vsel %vm4817, %v2149, -1e+30
        %v4882 = vsel %vm4818, %v2148, -1e+30
        %v4883 = vsel %vm4819, %v2147, -1e+30
        %v4884 = vsel %vm4820, %v2146, -1e+30
        %v4885 = vsel %vm4821, %v2145, -1e+30
        %v4886 = vsel %vm4822, %v2144, -1e+30
        %v4887 = vsel %vm4823, %v2143, -1e+30
        %v4888 = vsel %vm4824, %v2142, -1e+30
        %v4889 = vsel %vm4825, %v2141, -1e+30
        %v4890 = vsel %vm4826, %v2140, -1e+30
        %v4891 = vsel %vm4827, %v2139, -1e+30
        %v4892 = vsel %vm4828, %v2138, -1e+30
        %v4893 = vsel %vm4829, %v2137, -1e+30
        %v4894 = vsel %vm4830, %v2136, -1e+30
        %v4895 = vsel %vm4831, %v2135, -1e+30
        %v4896 = vsel %vm4832, %v2134, -1e+30
        %v4897 = vsel %vm4833, %v2133, -1e+30
        %v4898 = vsel %vm4834, %v2132, -1e+30
        %v4899 = vsel %vm4835, %v2131, -1e+30
        %v4900 = vsel %vm4836, %v2130, -1e+30
        %v4901 = vsel %vm4837, %v2129, -1e+30
        %v4902 = vsel %vm4838, %v2128, -1e+30
        %v4903 = vsel %vm4839, %v2127, -1e+30
        %v4904 = vsel %vm4840, %v2126, -1e+30
        %v4905 = vsel %vm4841, %v2125, -1e+30
        %v4906 = vsel %vm4842, %v2124, -1e+30
        %v4907 = vsel %vm4843, %v2123, -1e+30
        %v4908 = vsel %vm4844, %v2122, -1e+30
        %v4909 = vsel %vm4845, %v2121, -1e+30
        %v4910 = vsel %vm4846, %v2120, -1e+30
        %v4911 = vsel %vm4847, %v2119, -1e+30
        %v4912 = vsel %vm4848, %v2118, -1e+30
        %v4913 = vsel %vm4849, %v2117, -1e+30
        %v4914 = vsel %vm4850, %v2116, -1e+30
        %v4915 = vsel %vm4851, %v2115, -1e+30
        %v4916 = vsel %vm4852, %v2114, -1e+30
        %v4917 = vsel %vm4853, %v2113, -1e+30
        %v4918 = vsel %vm4854, %v2112, -1e+30
        %v4919 = vsel %vm4855, %v2111, -1e+30
        %v4920 = vsel %vm4856, %v2110, -1e+30
        %v4921 = vsel %vm4857, %v2109, -1e+30
        %v4922 = vsel %vm4858, %v2108, -1e+30
        %v4923 = vsel %vm4859, %v2171, -1e+30
        %v4924 = vsel %vm4860, %v2170, -1e+30
        %v4925 = vmax.f32 %v4541, %v4861
        %v4926 = vmax.f32 %v4542, %v4862
        %v4927 = vmax.f32 %v4543, %v4863
        %v4928 = vmax.f32 %v4544, %v4864
        %v4929 = vmax.f32 %v4545, %v4865
        %v4930 = vmax.f32 %v4546, %v4866
        %v4931 = vmax.f32 %v4547, %v4867
        %v4932 = vmax.f32 %v4548, %v4868
        %v4933 = vmax.f32 %v4549, %v4869
        %v4934 = vmax.f32 %v4550, %v4870
        %v4935 = vmax.f32 %v4551, %v4871
        %v4936 = vmax.f32 %v4552, %v4872
        %v4937 = vmax.f32 %v4553, %v4873
        %v4938 = vmax.f32 %v4554, %v4874
        %v4939 = vmax.f32 %v4555, %v4875
        %v4940 = vmax.f32 %v4556, %v4876
        %v4941 = vmax.f32 %v4557, %v4877
        %v4942 = vmax.f32 %v4558, %v4878
        %v4943 = vmax.f32 %v4559, %v4879
        %v4944 = vmax.f32 %v4560, %v4880
        %v4945 = vmax.f32 %v4561, %v4881
        %v4946 = vmax.f32 %v4562, %v4882
        %v4947 = vmax.f32 %v4563, %v4883
        %v4948 = vmax.f32 %v4564, %v4884
        %v4949 = vmax.f32 %v4565, %v4885
        %v4950 = vmax.f32 %v4566, %v4886
        %v4951 = vmax.f32 %v4567, %v4887
        %v4952 = vmax.f32 %v4568, %v4888
        %v4953 = vmax.f32 %v4569, %v4889
        %v4954 = vmax.f32 %v4570, %v4890
        %v4955 = vmax.f32 %v4571, %v4891
        %v4956 = vmax.f32 %v4572, %v4892
        %v4957 = vmax.f32 %v4573, %v4893
        %v4958 = vmax.f32 %v4574, %v4894
        %v4959 = vmax.f32 %v4575, %v4895
        %v4960 = vmax.f32 %v4576, %v4896
        %v4961 = vmax.f32 %v4577, %v4897
        %v4962 = vmax.f32 %v4578, %v4898
        %v4963 = vmax.f32 %v4579, %v4899
        %v4964 = vmax.f32 %v4580, %v4900
        %v4965 = vmax.f32 %v4581, %v4901
        %v4966 = vmax.f32 %v4582, %v4902
        %v4967 = vmax.f32 %v4583, %v4903
        %v4968 = vmax.f32 %v4584, %v4904
        %v4969 = vmax.f32 %v4585, %v4905
        %v4970 = vmax.f32 %v4586, %v4906
        %v4971 = vmax.f32 %v4587, %v4907
        %v4972 = vmax.f32 %v4588, %v4908
        %v4973 = vmax.f32 %v4589, %v4909
        %v4974 = vmax.f32 %v4590, %v4910
        %v4975 = vmax.f32 %v4591, %v4911
        %v4976 = vmax.f32 %v4592, %v4912
        %v4977 = vmax.f32 %v4593, %v4913
        %v4978 = vmax.f32 %v4594, %v4914
        %v4979 = vmax.f32 %v4595, %v4915
        %v4980 = vmax.f32 %v4596, %v4916
        %v4981 = vmax.f32 %v4597, %v4917
        %v4982 = vmax.f32 %v4598, %v4918
        %v4983 = vmax.f32 %v4599, %v4919
        %v4984 = vmax.f32 %v4600, %v4920
        %v4985 = vmax.f32 %v4601, %v4921
        %v4986 = vmax.f32 %v4602, %v4922
        %v4987 = vmax.f32 %v4603, %v4923
        %v4988 = vmax.f32 %v4604, %v4924
        %4989 = vset.pattern.permute.xlu0 7
        %4990 = vperm.xlu0 %4989, %v2172
        %v4991 = vpop.permute.xlu0 %4990
        %4992 = vset.pattern.permute.xlu0 7
        %4993 = vperm.xlu0 %4992, %v2173
        %v4994 = vpop.permute.xlu0 %4993
        %4995 = vset.pattern.permute.xlu0 7
        %4996 = vperm.xlu0 %4995, %v2174
        %v4997 = vpop.permute.xlu0 %4996
        %4998 = vset.pattern.permute.xlu0 7
        %4999 = vperm.xlu0 %4998, %v2175
        %v5000 = vpop.permute.xlu0 %4999
        %5001 = vset.pattern.permute.xlu0 7
        %5002 = vperm.xlu0 %5001, %v2176
        %v5003 = vpop.permute.xlu0 %5002
        %5004 = vset.pattern.permute.xlu0 7
        %5005 = vperm.xlu0 %5004, %v2177
        %v5006 = vpop.permute.xlu0 %5005
        %5007 = vset.pattern.permute.xlu0 7
        %5008 = vperm.xlu0 %5007, %v2178
        %v5009 = vpop.permute.xlu0 %5008
        %5010 = vset.pattern.permute.xlu0 7
        %5011 = vperm.xlu0 %5010, %v2179
        %v5012 = vpop.permute.xlu0 %5011
        %5013 = vset.pattern.permute.xlu0 7
        %5014 = vperm.xlu0 %5013, %v2180
        %v5015 = vpop.permute.xlu0 %5014
        %5016 = vset.pattern.permute.xlu0 7
        %5017 = vperm.xlu0 %5016, %v2181
        %v5018 = vpop.permute.xlu0 %5017
        %5019 = vset.pattern.permute.xlu0 7
        %5020 = vperm.xlu0 %5019, %v2182
        %v5021 = vpop.permute.xlu0 %5020
        %5022 = vset.pattern.permute.xlu0 7
        %5023 = vperm.xlu0 %5022, %v2183
        %v5024 = vpop.permute.xlu0 %5023
        %5025 = vset.pattern.permute.xlu0 7
        %5026 = vperm.xlu0 %5025, %v2184
        %v5027 = vpop.permute.xlu0 %5026
        %5028 = vset.pattern.permute.xlu0 7
        %5029 = vperm.xlu0 %5028, %v2185
        %v5030 = vpop.permute.xlu0 %5029
        %5031 = vset.pattern.permute.xlu0 7
        %5032 = vperm.xlu0 %5031, %v2186
        %v5033 = vpop.permute.xlu0 %5032
        %5034 = vset.pattern.permute.xlu0 7
        %5035 = vperm.xlu0 %5034, %v2187
        %v5036 = vpop.permute.xlu0 %5035
        %5037 = vset.pattern.permute.xlu0 7
        %5038 = vperm.xlu0 %5037, %v2188
        %v5039 = vpop.permute.xlu0 %5038
        %5040 = vset.pattern.permute.xlu0 7
        %5041 = vperm.xlu0 %5040, %v2189
        %v5042 = vpop.permute.xlu0 %5041
        %5043 = vset.pattern.permute.xlu0 7
        %5044 = vperm.xlu0 %5043, %v2190
        %v5045 = vpop.permute.xlu0 %5044
        %5046 = vset.pattern.permute.xlu0 7
        %5047 = vperm.xlu0 %5046, %v2191
        %v5048 = vpop.permute.xlu0 %5047
        %5049 = vset.pattern.permute.xlu0 7
        %5050 = vperm.xlu0 %5049, %v2192
        %v5051 = vpop.permute.xlu0 %5050
        %5052 = vset.pattern.permute.xlu0 7
        %5053 = vperm.xlu0 %5052, %v2193
        %v5054 = vpop.permute.xlu0 %5053
        %5055 = vset.pattern.permute.xlu0 7
        %5056 = vperm.xlu0 %5055, %v2194
        %v5057 = vpop.permute.xlu0 %5056
        %5058 = vset.pattern.permute.xlu0 7
        %5059 = vperm.xlu0 %5058, %v2195
        %v5060 = vpop.permute.xlu0 %5059
        %5061 = vset.pattern.permute.xlu0 7
        %5062 = vperm.xlu0 %5061, %v2196
        %v5063 = vpop.permute.xlu0 %5062
        %5064 = vset.pattern.permute.xlu0 7
        %5065 = vperm.xlu0 %5064, %v2197
        %v5066 = vpop.permute.xlu0 %5065
        %5067 = vset.pattern.permute.xlu0 7
        %5068 = vperm.xlu0 %5067, %v2198
        %v5069 = vpop.permute.xlu0 %5068
        %5070 = vset.pattern.permute.xlu0 7
        %5071 = vperm.xlu0 %5070, %v2199
        %v5072 = vpop.permute.xlu0 %5071
        %5073 = vset.pattern.permute.xlu0 7
        %5074 = vperm.xlu0 %5073, %v2200
        %v5075 = vpop.permute.xlu0 %5074
        %5076 = vset.pattern.permute.xlu0 7
        %5077 = vperm.xlu0 %5076, %v2201
        %v5078 = vpop.permute.xlu0 %5077
        %5079 = vset.pattern.permute.xlu0 7
        %5080 = vperm.xlu0 %5079, %v2202
        %v5081 = vpop.permute.xlu0 %5080
        %5082 = vset.pattern.permute.xlu0 7
        %5083 = vperm.xlu0 %5082, %v2203
        %v5084 = vpop.permute.xlu0 %5083
        %5085 = vset.pattern.permute.xlu0 7
        %5086 = vperm.xlu0 %5085, %v2204
        %v5087 = vpop.permute.xlu0 %5086
        %5088 = vset.pattern.permute.xlu0 7
        %5089 = vperm.xlu0 %5088, %v2205
        %v5090 = vpop.permute.xlu0 %5089
        %5091 = vset.pattern.permute.xlu0 7
        %5092 = vperm.xlu0 %5091, %v2206
        %v5093 = vpop.permute.xlu0 %5092
        %5094 = vset.pattern.permute.xlu0 7
        %5095 = vperm.xlu0 %5094, %v2207
        %v5096 = vpop.permute.xlu0 %5095
        %5097 = vset.pattern.permute.xlu0 7
        %5098 = vperm.xlu0 %5097, %v2208
        %v5099 = vpop.permute.xlu0 %5098
        %5100 = vset.pattern.permute.xlu0 7
        %5101 = vperm.xlu0 %5100, %v2209
        %v5102 = vpop.permute.xlu0 %5101
        %5103 = vset.pattern.permute.xlu0 7
        %5104 = vperm.xlu0 %5103, %v2210
        %v5105 = vpop.permute.xlu0 %5104
        %5106 = vset.pattern.permute.xlu0 7
        %5107 = vperm.xlu0 %5106, %v2211
        %v5108 = vpop.permute.xlu0 %5107
        %5109 = vset.pattern.permute.xlu0 7
        %5110 = vperm.xlu0 %5109, %v2212
        %v5111 = vpop.permute.xlu0 %5110
        %5112 = vset.pattern.permute.xlu0 7
        %5113 = vperm.xlu0 %5112, %v2213
        %v5114 = vpop.permute.xlu0 %5113
        %5115 = vset.pattern.permute.xlu0 7
        %5116 = vperm.xlu0 %5115, %v2214
        %v5117 = vpop.permute.xlu0 %5116
        %5118 = vset.pattern.permute.xlu0 7
        %5119 = vperm.xlu0 %5118, %v2215
        %v5120 = vpop.permute.xlu0 %5119
        %5121 = vset.pattern.permute.xlu0 7
        %5122 = vperm.xlu0 %5121, %v2216
        %v5123 = vpop.permute.xlu0 %5122
        %5124 = vset.pattern.permute.xlu0 7
        %5125 = vperm.xlu0 %5124, %v2217
        %v5126 = vpop.permute.xlu0 %5125
        %5127 = vset.pattern.permute.xlu0 7
        %5128 = vperm.xlu0 %5127, %v2218
        %v5129 = vpop.permute.xlu0 %5128
        %5130 = vset.pattern.permute.xlu0 7
        %5131 = vperm.xlu0 %5130, %v2219
        %v5132 = vpop.permute.xlu0 %5131
        %5133 = vset.pattern.permute.xlu0 7
        %5134 = vperm.xlu0 %5133, %v2220
        %v5135 = vpop.permute.xlu0 %5134
        %5136 = vset.pattern.permute.xlu0 7
        %5137 = vperm.xlu0 %5136, %v2221
        %v5138 = vpop.permute.xlu0 %5137
        %5139 = vset.pattern.permute.xlu0 7
        %5140 = vperm.xlu0 %5139, %v2222
        %v5141 = vpop.permute.xlu0 %5140
        %5142 = vset.pattern.permute.xlu0 7
        %5143 = vperm.xlu0 %5142, %v2223
        %v5144 = vpop.permute.xlu0 %5143
        %5145 = vset.pattern.permute.xlu0 7
        %5146 = vperm.xlu0 %5145, %v2224
        %v5147 = vpop.permute.xlu0 %5146
        %5148 = vset.pattern.permute.xlu0 7
        %5149 = vperm.xlu0 %5148, %v2225
        %v5150 = vpop.permute.xlu0 %5149
        %5151 = vset.pattern.permute.xlu0 7
        %5152 = vperm.xlu0 %5151, %v2226
        %v5153 = vpop.permute.xlu0 %5152
        %5154 = vset.pattern.permute.xlu0 7
        %5155 = vperm.xlu0 %5154, %v2227
        %v5156 = vpop.permute.xlu0 %5155
        %5157 = vset.pattern.permute.xlu0 7
        %5158 = vperm.xlu0 %5157, %v2228
        %v5159 = vpop.permute.xlu0 %5158
        %5160 = vset.pattern.permute.xlu0 7
        %5161 = vperm.xlu0 %5160, %v2229
        %v5162 = vpop.permute.xlu0 %5161
        %5163 = vset.pattern.permute.xlu0 7
        %5164 = vperm.xlu0 %5163, %v2230
        %v5165 = vpop.permute.xlu0 %5164
        %5166 = vset.pattern.permute.xlu0 7
        %5167 = vperm.xlu0 %5166, %v2231
        %v5168 = vpop.permute.xlu0 %5167
        %5169 = vset.pattern.permute.xlu0 7
        %5170 = vperm.xlu0 %5169, %v2232
        %v5171 = vpop.permute.xlu0 %5170
        %5172 = vset.pattern.permute.xlu0 7
        %5173 = vperm.xlu0 %5172, %v2233
        %v5174 = vpop.permute.xlu0 %5173
        %5175 = vset.pattern.permute.xlu0 7
        %5176 = vperm.xlu0 %5175, %v2234
        %v5177 = vpop.permute.xlu0 %5176
        %5178 = vset.pattern.permute.xlu0 7
        %5179 = vperm.xlu0 %5178, %v2235
        %v5180 = vpop.permute.xlu0 %5179
        %vm5181 = vcmp.eq.s32.totalorder %v4991, 1
        %vm5182 = vcmp.eq.s32.totalorder %v4994, 1
        %vm5183 = vcmp.eq.s32.totalorder %v4997, 1
        %vm5184 = vcmp.eq.s32.totalorder %v5000, 1
        %vm5185 = vcmp.eq.s32.totalorder %v5003, 1
        %vm5186 = vcmp.eq.s32.totalorder %v5006, 1
        %vm5187 = vcmp.eq.s32.totalorder %v5009, 1
        %vm5188 = vcmp.eq.s32.totalorder %v5012, 1
        %vm5189 = vcmp.eq.s32.totalorder %v5015, 1
        %vm5190 = vcmp.eq.s32.totalorder %v5018, 1
        %vm5191 = vcmp.eq.s32.totalorder %v5021, 1
        %vm5192 = vcmp.eq.s32.totalorder %v5024, 1
        %vm5193 = vcmp.eq.s32.totalorder %v5027, 1
        %vm5194 = vcmp.eq.s32.totalorder %v5030, 1
        %vm5195 = vcmp.eq.s32.totalorder %v5033, 1
        %vm5196 = vcmp.eq.s32.totalorder %v5036, 1
        %vm5197 = vcmp.eq.s32.totalorder %v5039, 1
        %vm5198 = vcmp.eq.s32.totalorder %v5042, 1
        %vm5199 = vcmp.eq.s32.totalorder %v5045, 1
        %vm5200 = vcmp.eq.s32.totalorder %v5048, 1
        %vm5201 = vcmp.eq.s32.totalorder %v5051, 1
        %vm5202 = vcmp.eq.s32.totalorder %v5054, 1
        %vm5203 = vcmp.eq.s32.totalorder %v5057, 1
        %vm5204 = vcmp.eq.s32.totalorder %v5060, 1
        %vm5205 = vcmp.eq.s32.totalorder %v5063, 1
        %vm5206 = vcmp.eq.s32.totalorder %v5066, 1
        %vm5207 = vcmp.eq.s32.totalorder %v5069, 1
        %vm5208 = vcmp.eq.s32.totalorder %v5072, 1
        %vm5209 = vcmp.eq.s32.totalorder %v5075, 1
        %vm5210 = vcmp.eq.s32.totalorder %v5078, 1
        %vm5211 = vcmp.eq.s32.totalorder %v5081, 1
        %vm5212 = vcmp.eq.s32.totalorder %v5084, 1
        %vm5213 = vcmp.eq.s32.totalorder %v5087, 1
        %vm5214 = vcmp.eq.s32.totalorder %v5090, 1
        %vm5215 = vcmp.eq.s32.totalorder %v5093, 1
        %vm5216 = vcmp.eq.s32.totalorder %v5096, 1
        %vm5217 = vcmp.eq.s32.totalorder %v5099, 1
        %vm5218 = vcmp.eq.s32.totalorder %v5102, 1
        %vm5219 = vcmp.eq.s32.totalorder %v5105, 1
        %vm5220 = vcmp.eq.s32.totalorder %v5108, 1
        %vm5221 = vcmp.eq.s32.totalorder %v5111, 1
        %vm5222 = vcmp.eq.s32.totalorder %v5114, 1
        %vm5223 = vcmp.eq.s32.totalorder %v5117, 1
        %vm5224 = vcmp.eq.s32.totalorder %v5120, 1
        %vm5225 = vcmp.eq.s32.totalorder %v5123, 1
        %vm5226 = vcmp.eq.s32.totalorder %v5126, 1
        %vm5227 = vcmp.eq.s32.totalorder %v5129, 1
        %vm5228 = vcmp.eq.s32.totalorder %v5132, 1
        %vm5229 = vcmp.eq.s32.totalorder %v5135, 1
        %vm5230 = vcmp.eq.s32.totalorder %v5138, 1
        %vm5231 = vcmp.eq.s32.totalorder %v5141, 1
        %vm5232 = vcmp.eq.s32.totalorder %v5144, 1
        %vm5233 = vcmp.eq.s32.totalorder %v5147, 1
        %vm5234 = vcmp.eq.s32.totalorder %v5150, 1
        %vm5235 = vcmp.eq.s32.totalorder %v5153, 1
        %vm5236 = vcmp.eq.s32.totalorder %v5156, 1
        %vm5237 = vcmp.eq.s32.totalorder %v5159, 1
        %vm5238 = vcmp.eq.s32.totalorder %v5162, 1
        %vm5239 = vcmp.eq.s32.totalorder %v5165, 1
        %vm5240 = vcmp.eq.s32.totalorder %v5168, 1
        %vm5241 = vcmp.eq.s32.totalorder %v5171, 1
        %vm5242 = vcmp.eq.s32.totalorder %v5174, 1
        %vm5243 = vcmp.eq.s32.totalorder %v5177, 1
        %vm5244 = vcmp.eq.s32.totalorder %v5180, 1
        %v5245 = vsel %vm5181, %v1851, -1e+30
        %v5246 = vsel %vm5182, %v1852, -1e+30
        %v5247 = vsel %vm5183, %v1853, -1e+30
        %v5248 = vsel %vm5184, %v1854, -1e+30
        %v5249 = vsel %vm5185, %v1855, -1e+30
        %v5250 = vsel %vm5186, %v1856, -1e+30
        %v5251 = vsel %vm5187, %v1857, -1e+30
        %v5252 = vsel %vm5188, %v1858, -1e+30
        %v5253 = vsel %vm5189, %v1859, -1e+30
        %v5254 = vsel %vm5190, %v1860, -1e+30
        %v5255 = vsel %vm5191, %v1861, -1e+30
        %v5256 = vsel %vm5192, %v1862, -1e+30
        %v5257 = vsel %vm5193, %v1863, -1e+30
        %v5258 = vsel %vm5194, %v1864, -1e+30
        %v5259 = vsel %vm5195, %v1865, -1e+30
        %v5260 = vsel %vm5196, %v1866, -1e+30
        %v5261 = vsel %vm5197, %v1867, -1e+30
        %v5262 = vsel %vm5198, %v1868, -1e+30
        %v5263 = vsel %vm5199, %v1869, -1e+30
        %v5264 = vsel %vm5200, %v1870, -1e+30
        %v5265 = vsel %vm5201, %v1871, -1e+30
        %v5266 = vsel %vm5202, %v1872, -1e+30
        %v5267 = vsel %vm5203, %v1873, -1e+30
        %v5268 = vsel %vm5204, %v1874, -1e+30
        %v5269 = vsel %vm5205, %v1875, -1e+30
        %v5270 = vsel %vm5206, %v1876, -1e+30
        %v5271 = vsel %vm5207, %v1877, -1e+30
        %v5272 = vsel %vm5208, %v1878, -1e+30
        %v5273 = vsel %vm5209, %v1879, -1e+30
        %v5274 = vsel %vm5210, %v1880, -1e+30
        %v5275 = vsel %vm5211, %v1881, -1e+30
        %v5276 = vsel %vm5212, %v1882, -1e+30
        %v5277 = vsel %vm5213, %v1883, -1e+30
        %v5278 = vsel %vm5214, %v1884, -1e+30
        %v5279 = vsel %vm5215, %v1885, -1e+30
        %v5280 = vsel %vm5216, %v1886, -1e+30
        %v5281 = vsel %vm5217, %v1887, -1e+30
        %v5282 = vsel %vm5218, %v1888, -1e+30
        %v5283 = vsel %vm5219, %v1889, -1e+30
        %v5284 = vsel %vm5220, %v1890, -1e+30
        %v5285 = vsel %vm5221, %v1891, -1e+30
        %v5286 = vsel %vm5222, %v1892, -1e+30
        %v5287 = vsel %vm5223, %v1893, -1e+30
        %v5288 = vsel %vm5224, %v1894, -1e+30
        %v5289 = vsel %vm5225, %v1895, -1e+30
        %v5290 = vsel %vm5226, %v1896, -1e+30
        %v5291 = vsel %vm5227, %v1897, -1e+30
        %v5292 = vsel %vm5228, %v1898, -1e+30
        %v5293 = vsel %vm5229, %v1899, -1e+30
        %v5294 = vsel %vm5230, %v1900, -1e+30
        %v5295 = vsel %vm5231, %v1901, -1e+30
        %v5296 = vsel %vm5232, %v1902, -1e+30
        %v5297 = vsel %vm5233, %v1903, -1e+30
        %v5298 = vsel %vm5234, %v1904, -1e+30
        %v5299 = vsel %vm5235, %v1905, -1e+30
        %v5300 = vsel %vm5236, %v1906, -1e+30
        %v5301 = vsel %vm5237, %v1907, -1e+30
        %v5302 = vsel %vm5238, %v1908, -1e+30
        %v5303 = vsel %vm5239, %v1909, -1e+30
        %v5304 = vsel %vm5240, %v1910, -1e+30
        %v5305 = vsel %vm5241, %v1911, -1e+30
        %v5306 = vsel %vm5242, %v1912, -1e+30
        %v5307 = vsel %vm5243, %v1849, -1e+30
        %v5308 = vsel %vm5244, %v1850, -1e+30
        %v5309 = vmax.f32 %v4925, %v5245
        %v5310 = vmax.f32 %v4926, %v5246
        %v5311 = vmax.f32 %v4927, %v5247
        %v5312 = vmax.f32 %v4928, %v5248
        %v5313 = vmax.f32 %v4929, %v5249
        %v5314 = vmax.f32 %v4930, %v5250
        %v5315 = vmax.f32 %v4931, %v5251
        %v5316 = vmax.f32 %v4932, %v5252
        %v5317 = vmax.f32 %v4933, %v5253
        %v5318 = vmax.f32 %v4934, %v5254
        %v5319 = vmax.f32 %v4935, %v5255
        %v5320 = vmax.f32 %v4936, %v5256
        %v5321 = vmax.f32 %v4937, %v5257
        %v5322 = vmax.f32 %v4938, %v5258
        %v5323 = vmax.f32 %v4939, %v5259
        %v5324 = vmax.f32 %v4940, %v5260
        %v5325 = vmax.f32 %v4941, %v5261
        %v5326 = vmax.f32 %v4942, %v5262
        %v5327 = vmax.f32 %v4943, %v5263
        %v5328 = vmax.f32 %v4944, %v5264
        %v5329 = vmax.f32 %v4945, %v5265
        %v5330 = vmax.f32 %v4946, %v5266
        %v5331 = vmax.f32 %v4947, %v5267
        %v5332 = vmax.f32 %v4948, %v5268
        %v5333 = vmax.f32 %v4949, %v5269
        %v5334 = vmax.f32 %v4950, %v5270
        %v5335 = vmax.f32 %v4951, %v5271
        %v5336 = vmax.f32 %v4952, %v5272
        %v5337 = vmax.f32 %v4953, %v5273
        %v5338 = vmax.f32 %v4954, %v5274
        %v5339 = vmax.f32 %v4955, %v5275
        %v5340 = vmax.f32 %v4956, %v5276
        %v5341 = vmax.f32 %v4957, %v5277
        %v5342 = vmax.f32 %v4958, %v5278
        %v5343 = vmax.f32 %v4959, %v5279
        %v5344 = vmax.f32 %v4960, %v5280
        %v5345 = vmax.f32 %v4961, %v5281
        %v5346 = vmax.f32 %v4962, %v5282
        %v5347 = vmax.f32 %v4963, %v5283
        %v5348 = vmax.f32 %v4964, %v5284
        %v5349 = vmax.f32 %v4965, %v5285
        %v5350 = vmax.f32 %v4966, %v5286
        %v5351 = vmax.f32 %v4967, %v5287
        %v5352 = vmax.f32 %v4968, %v5288
        %v5353 = vmax.f32 %v4969, %v5289
        %v5354 = vmax.f32 %v4970, %v5290
        %v5355 = vmax.f32 %v4971, %v5291
        %v5356 = vmax.f32 %v4972, %v5292
        %v5357 = vmax.f32 %v4973, %v5293
        %v5358 = vmax.f32 %v4974, %v5294
        %v5359 = vmax.f32 %v4975, %v5295
        %v5360 = vmax.f32 %v4976, %v5296
        %v5361 = vmax.f32 %v4977, %v5297
        %v5362 = vmax.f32 %v4978, %v5298
        %v5363 = vmax.f32 %v4979, %v5299
        %v5364 = vmax.f32 %v4980, %v5300
        %v5365 = vmax.f32 %v4981, %v5301
        %v5366 = vmax.f32 %v4982, %v5302
        %v5367 = vmax.f32 %v4983, %v5303
        %v5368 = vmax.f32 %v4984, %v5304
        %v5369 = vmax.f32 %v4985, %v5305
        %v5370 = vmax.f32 %v4986, %v5306
        %v5371 = vmax.f32 %v4987, %v5307
        %v5372 = vmax.f32 %v4988, %v5308
        %5373 = vset.pattern.permute.xlu0 8
        %5374 = vperm.xlu0 %5373, %v2172
        %v5375 = vpop.permute.xlu0 %5374
        %5376 = vset.pattern.permute.xlu0 8
        %5377 = vperm.xlu0 %5376, %v2173
        %v5378 = vpop.permute.xlu0 %5377
        %5379 = vset.pattern.permute.xlu0 8
        %5380 = vperm.xlu0 %5379, %v2174
        %v5381 = vpop.permute.xlu0 %5380
        %5382 = vset.pattern.permute.xlu0 8
        %5383 = vperm.xlu0 %5382, %v2175
        %v5384 = vpop.permute.xlu0 %5383
        %5385 = vset.pattern.permute.xlu0 8
        %5386 = vperm.xlu0 %5385, %v2176
        %v5387 = vpop.permute.xlu0 %5386
        %5388 = vset.pattern.permute.xlu0 8
        %5389 = vperm.xlu0 %5388, %v2177
        %v5390 = vpop.permute.xlu0 %5389
        %5391 = vset.pattern.permute.xlu0 8
        %5392 = vperm.xlu0 %5391, %v2178
        %v5393 = vpop.permute.xlu0 %5392
        %5394 = vset.pattern.permute.xlu0 8
        %5395 = vperm.xlu0 %5394, %v2179
        %v5396 = vpop.permute.xlu0 %5395
        %5397 = vset.pattern.permute.xlu0 8
        %5398 = vperm.xlu0 %5397, %v2180
        %v5399 = vpop.permute.xlu0 %5398
        %5400 = vset.pattern.permute.xlu0 8
        %5401 = vperm.xlu0 %5400, %v2181
        %v5402 = vpop.permute.xlu0 %5401
        %5403 = vset.pattern.permute.xlu0 8
        %5404 = vperm.xlu0 %5403, %v2182
        %v5405 = vpop.permute.xlu0 %5404
        %5406 = vset.pattern.permute.xlu0 8
        %5407 = vperm.xlu0 %5406, %v2183
        %v5408 = vpop.permute.xlu0 %5407
        %5409 = vset.pattern.permute.xlu0 8
        %5410 = vperm.xlu0 %5409, %v2184
        %v5411 = vpop.permute.xlu0 %5410
        %5412 = vset.pattern.permute.xlu0 8
        %5413 = vperm.xlu0 %5412, %v2185
        %v5414 = vpop.permute.xlu0 %5413
        %5415 = vset.pattern.permute.xlu0 8
        %5416 = vperm.xlu0 %5415, %v2186
        %v5417 = vpop.permute.xlu0 %5416
        %5418 = vset.pattern.permute.xlu0 8
        %5419 = vperm.xlu0 %5418, %v2187
        %v5420 = vpop.permute.xlu0 %5419
        %5421 = vset.pattern.permute.xlu0 8
        %5422 = vperm.xlu0 %5421, %v2188
        %v5423 = vpop.permute.xlu0 %5422
        %5424 = vset.pattern.permute.xlu0 8
        %5425 = vperm.xlu0 %5424, %v2189
        %v5426 = vpop.permute.xlu0 %5425
        %5427 = vset.pattern.permute.xlu0 8
        %5428 = vperm.xlu0 %5427, %v2190
        %v5429 = vpop.permute.xlu0 %5428
        %5430 = vset.pattern.permute.xlu0 8
        %5431 = vperm.xlu0 %5430, %v2191
        %v5432 = vpop.permute.xlu0 %5431
        %5433 = vset.pattern.permute.xlu0 8
        %5434 = vperm.xlu0 %5433, %v2192
        %v5435 = vpop.permute.xlu0 %5434
        %5436 = vset.pattern.permute.xlu0 8
        %5437 = vperm.xlu0 %5436, %v2193
        %v5438 = vpop.permute.xlu0 %5437
        %5439 = vset.pattern.permute.xlu0 8
        %5440 = vperm.xlu0 %5439, %v2194
        %v5441 = vpop.permute.xlu0 %5440
        %5442 = vset.pattern.permute.xlu0 8
        %5443 = vperm.xlu0 %5442, %v2195
        %v5444 = vpop.permute.xlu0 %5443
        %5445 = vset.pattern.permute.xlu0 8
        %5446 = vperm.xlu0 %5445, %v2196
        %v5447 = vpop.permute.xlu0 %5446
        %5448 = vset.pattern.permute.xlu0 8
        %5449 = vperm.xlu0 %5448, %v2197
        %v5450 = vpop.permute.xlu0 %5449
        %5451 = vset.pattern.permute.xlu0 8
        %5452 = vperm.xlu0 %5451, %v2198
        %v5453 = vpop.permute.xlu0 %5452
        %5454 = vset.pattern.permute.xlu0 8
        %5455 = vperm.xlu0 %5454, %v2199
        %v5456 = vpop.permute.xlu0 %5455
        %5457 = vset.pattern.permute.xlu0 8
        %5458 = vperm.xlu0 %5457, %v2200
        %v5459 = vpop.permute.xlu0 %5458
        %5460 = vset.pattern.permute.xlu0 8
        %5461 = vperm.xlu0 %5460, %v2201
        %v5462 = vpop.permute.xlu0 %5461
        %5463 = vset.pattern.permute.xlu0 8
        %5464 = vperm.xlu0 %5463, %v2202
        %v5465 = vpop.permute.xlu0 %5464
        %5466 = vset.pattern.permute.xlu0 8
        %5467 = vperm.xlu0 %5466, %v2203
        %v5468 = vpop.permute.xlu0 %5467
        %5469 = vset.pattern.permute.xlu0 8
        %5470 = vperm.xlu0 %5469, %v2204
        %v5471 = vpop.permute.xlu0 %5470
        %5472 = vset.pattern.permute.xlu0 8
        %5473 = vperm.xlu0 %5472, %v2205
        %v5474 = vpop.permute.xlu0 %5473
        %5475 = vset.pattern.permute.xlu0 8
        %5476 = vperm.xlu0 %5475, %v2206
        %v5477 = vpop.permute.xlu0 %5476
        %5478 = vset.pattern.permute.xlu0 8
        %5479 = vperm.xlu0 %5478, %v2207
        %v5480 = vpop.permute.xlu0 %5479
        %5481 = vset.pattern.permute.xlu0 8
        %5482 = vperm.xlu0 %5481, %v2208
        %v5483 = vpop.permute.xlu0 %5482
        %5484 = vset.pattern.permute.xlu0 8
        %5485 = vperm.xlu0 %5484, %v2209
        %v5486 = vpop.permute.xlu0 %5485
        %5487 = vset.pattern.permute.xlu0 8
        %5488 = vperm.xlu0 %5487, %v2210
        %v5489 = vpop.permute.xlu0 %5488
        %5490 = vset.pattern.permute.xlu0 8
        %5491 = vperm.xlu0 %5490, %v2211
        %v5492 = vpop.permute.xlu0 %5491
        %5493 = vset.pattern.permute.xlu0 8
        %5494 = vperm.xlu0 %5493, %v2212
        %v5495 = vpop.permute.xlu0 %5494
        %5496 = vset.pattern.permute.xlu0 8
        %5497 = vperm.xlu0 %5496, %v2213
        %v5498 = vpop.permute.xlu0 %5497
        %5499 = vset.pattern.permute.xlu0 8
        %5500 = vperm.xlu0 %5499, %v2214
        %v5501 = vpop.permute.xlu0 %5500
        %5502 = vset.pattern.permute.xlu0 8
        %5503 = vperm.xlu0 %5502, %v2215
        %v5504 = vpop.permute.xlu0 %5503
        %5505 = vset.pattern.permute.xlu0 8
        %5506 = vperm.xlu0 %5505, %v2216
        %v5507 = vpop.permute.xlu0 %5506
        %5508 = vset.pattern.permute.xlu0 8
        %5509 = vperm.xlu0 %5508, %v2217
        %v5510 = vpop.permute.xlu0 %5509
        %5511 = vset.pattern.permute.xlu0 8
        %5512 = vperm.xlu0 %5511, %v2218
        %v5513 = vpop.permute.xlu0 %5512
        %5514 = vset.pattern.permute.xlu0 8
        %5515 = vperm.xlu0 %5514, %v2219
        %v5516 = vpop.permute.xlu0 %5515
        %5517 = vset.pattern.permute.xlu0 8
        %5518 = vperm.xlu0 %5517, %v2220
        %v5519 = vpop.permute.xlu0 %5518
        %5520 = vset.pattern.permute.xlu0 8
        %5521 = vperm.xlu0 %5520, %v2221
        %v5522 = vpop.permute.xlu0 %5521
        %5523 = vset.pattern.permute.xlu0 8
        %5524 = vperm.xlu0 %5523, %v2222
        %v5525 = vpop.permute.xlu0 %5524
        %5526 = vset.pattern.permute.xlu0 8
        %5527 = vperm.xlu0 %5526, %v2223
        %v5528 = vpop.permute.xlu0 %5527
        %5529 = vset.pattern.permute.xlu0 8
        %5530 = vperm.xlu0 %5529, %v2224
        %v5531 = vpop.permute.xlu0 %5530
        %5532 = vset.pattern.permute.xlu0 8
        %5533 = vperm.xlu0 %5532, %v2225
        %v5534 = vpop.permute.xlu0 %5533
        %5535 = vset.pattern.permute.xlu0 8
        %5536 = vperm.xlu0 %5535, %v2226
        %v5537 = vpop.permute.xlu0 %5536
        %5538 = vset.pattern.permute.xlu0 8
        %5539 = vperm.xlu0 %5538, %v2227
        %v5540 = vpop.permute.xlu0 %5539
        %5541 = vset.pattern.permute.xlu0 8
        %5542 = vperm.xlu0 %5541, %v2228
        %v5543 = vpop.permute.xlu0 %5542
        %5544 = vset.pattern.permute.xlu0 8
        %5545 = vperm.xlu0 %5544, %v2229
        %v5546 = vpop.permute.xlu0 %5545
        %5547 = vset.pattern.permute.xlu0 8
        %5548 = vperm.xlu0 %5547, %v2230
        %v5549 = vpop.permute.xlu0 %5548
        %5550 = vset.pattern.permute.xlu0 8
        %5551 = vperm.xlu0 %5550, %v2231
        %v5552 = vpop.permute.xlu0 %5551
        %5553 = vset.pattern.permute.xlu0 8
        %5554 = vperm.xlu0 %5553, %v2232
        %v5555 = vpop.permute.xlu0 %5554
        %5556 = vset.pattern.permute.xlu0 8
        %5557 = vperm.xlu0 %5556, %v2233
        %v5558 = vpop.permute.xlu0 %5557
        %5559 = vset.pattern.permute.xlu0 8
        %5560 = vperm.xlu0 %5559, %v2234
        %v5561 = vpop.permute.xlu0 %5560
        %5562 = vset.pattern.permute.xlu0 8
        %5563 = vperm.xlu0 %5562, %v2235
        %v5564 = vpop.permute.xlu0 %5563
        %vm5565 = vcmp.eq.s32.totalorder %v5375, 1
        %vm5566 = vcmp.eq.s32.totalorder %v5378, 1
        %vm5567 = vcmp.eq.s32.totalorder %v5381, 1
        %vm5568 = vcmp.eq.s32.totalorder %v5384, 1
        %vm5569 = vcmp.eq.s32.totalorder %v5387, 1
        %vm5570 = vcmp.eq.s32.totalorder %v5390, 1
        %vm5571 = vcmp.eq.s32.totalorder %v5393, 1
        %vm5572 = vcmp.eq.s32.totalorder %v5396, 1
        %vm5573 = vcmp.eq.s32.totalorder %v5399, 1
        %vm5574 = vcmp.eq.s32.totalorder %v5402, 1
        %vm5575 = vcmp.eq.s32.totalorder %v5405, 1
        %vm5576 = vcmp.eq.s32.totalorder %v5408, 1
        %vm5577 = vcmp.eq.s32.totalorder %v5411, 1
        %vm5578 = vcmp.eq.s32.totalorder %v5414, 1
        %vm5579 = vcmp.eq.s32.totalorder %v5417, 1
        %vm5580 = vcmp.eq.s32.totalorder %v5420, 1
        %vm5581 = vcmp.eq.s32.totalorder %v5423, 1
        %vm5582 = vcmp.eq.s32.totalorder %v5426, 1
        %vm5583 = vcmp.eq.s32.totalorder %v5429, 1
        %vm5584 = vcmp.eq.s32.totalorder %v5432, 1
        %vm5585 = vcmp.eq.s32.totalorder %v5435, 1
        %vm5586 = vcmp.eq.s32.totalorder %v5438, 1
        %vm5587 = vcmp.eq.s32.totalorder %v5441, 1
        %vm5588 = vcmp.eq.s32.totalorder %v5444, 1
        %vm5589 = vcmp.eq.s32.totalorder %v5447, 1
        %vm5590 = vcmp.eq.s32.totalorder %v5450, 1
        %vm5591 = vcmp.eq.s32.totalorder %v5453, 1
        %vm5592 = vcmp.eq.s32.totalorder %v5456, 1
        %vm5593 = vcmp.eq.s32.totalorder %v5459, 1
        %vm5594 = vcmp.eq.s32.totalorder %v5462, 1
        %vm5595 = vcmp.eq.s32.totalorder %v5465, 1
        %vm5596 = vcmp.eq.s32.totalorder %v5468, 1
        %vm5597 = vcmp.eq.s32.totalorder %v5471, 1
        %vm5598 = vcmp.eq.s32.totalorder %v5474, 1
        %vm5599 = vcmp.eq.s32.totalorder %v5477, 1
        %vm5600 = vcmp.eq.s32.totalorder %v5480, 1
        %vm5601 = vcmp.eq.s32.totalorder %v5483, 1
        %vm5602 = vcmp.eq.s32.totalorder %v5486, 1
        %vm5603 = vcmp.eq.s32.totalorder %v5489, 1
        %vm5604 = vcmp.eq.s32.totalorder %v5492, 1
        %vm5605 = vcmp.eq.s32.totalorder %v5495, 1
        %vm5606 = vcmp.eq.s32.totalorder %v5498, 1
        %vm5607 = vcmp.eq.s32.totalorder %v5501, 1
        %vm5608 = vcmp.eq.s32.totalorder %v5504, 1
        %vm5609 = vcmp.eq.s32.totalorder %v5507, 1
        %vm5610 = vcmp.eq.s32.totalorder %v5510, 1
        %vm5611 = vcmp.eq.s32.totalorder %v5513, 1
        %vm5612 = vcmp.eq.s32.totalorder %v5516, 1
        %vm5613 = vcmp.eq.s32.totalorder %v5519, 1
        %vm5614 = vcmp.eq.s32.totalorder %v5522, 1
        %vm5615 = vcmp.eq.s32.totalorder %v5525, 1
        %vm5616 = vcmp.eq.s32.totalorder %v5528, 1
        %vm5617 = vcmp.eq.s32.totalorder %v5531, 1
        %vm5618 = vcmp.eq.s32.totalorder %v5534, 1
        %vm5619 = vcmp.eq.s32.totalorder %v5537, 1
        %vm5620 = vcmp.eq.s32.totalorder %v5540, 1
        %vm5621 = vcmp.eq.s32.totalorder %v5543, 1
        %vm5622 = vcmp.eq.s32.totalorder %v5546, 1
        %vm5623 = vcmp.eq.s32.totalorder %v5549, 1
        %vm5624 = vcmp.eq.s32.totalorder %v5552, 1
        %vm5625 = vcmp.eq.s32.totalorder %v5555, 1
        %vm5626 = vcmp.eq.s32.totalorder %v5558, 1
        %vm5627 = vcmp.eq.s32.totalorder %v5561, 1
        %vm5628 = vcmp.eq.s32.totalorder %v5564, 1
        %v5629 = vsel %vm5565, %v3065, -1e+30
        %v5630 = vsel %vm5566, %v3064, -1e+30
        %v5631 = vsel %vm5567, %v3063, -1e+30
        %v5632 = vsel %vm5568, %v3062, -1e+30
        %v5633 = vsel %vm5569, %v3061, -1e+30
        %v5634 = vsel %vm5570, %v3060, -1e+30
        %v5635 = vsel %vm5571, %v3059, -1e+30
        %v5636 = vsel %vm5572, %v3058, -1e+30
        %v5637 = vsel %vm5573, %v3057, -1e+30
        %v5638 = vsel %vm5574, %v3056, -1e+30
        %v5639 = vsel %vm5575, %v3055, -1e+30
        %v5640 = vsel %vm5576, %v3054, -1e+30
        %v5641 = vsel %vm5577, %v3053, -1e+30
        %v5642 = vsel %vm5578, %v3052, -1e+30
        %v5643 = vsel %vm5579, %v3051, -1e+30
        %v5644 = vsel %vm5580, %v3050, -1e+30
        %v5645 = vsel %vm5581, %v3049, -1e+30
        %v5646 = vsel %vm5582, %v3048, -1e+30
        %v5647 = vsel %vm5583, %v3047, -1e+30
        %v5648 = vsel %vm5584, %v3046, -1e+30
        %v5649 = vsel %vm5585, %v3045, -1e+30
        %v5650 = vsel %vm5586, %v3044, -1e+30
        %v5651 = vsel %vm5587, %v3043, -1e+30
        %v5652 = vsel %vm5588, %v3042, -1e+30
        %v5653 = vsel %vm5589, %v3041, -1e+30
        %v5654 = vsel %vm5590, %v3040, -1e+30
        %v5655 = vsel %vm5591, %v3039, -1e+30
        %v5656 = vsel %vm5592, %v3038, -1e+30
        %v5657 = vsel %vm5593, %v3037, -1e+30
        %v5658 = vsel %vm5594, %v3036, -1e+30
        %v5659 = vsel %vm5595, %v3035, -1e+30
        %v5660 = vsel %vm5596, %v3034, -1e+30
        %v5661 = vsel %vm5597, %v3033, -1e+30
        %v5662 = vsel %vm5598, %v3032, -1e+30
        %v5663 = vsel %vm5599, %v3031, -1e+30
        %v5664 = vsel %vm5600, %v3030, -1e+30
        %v5665 = vsel %vm5601, %v3029, -1e+30
        %v5666 = vsel %vm5602, %v3028, -1e+30
        %v5667 = vsel %vm5603, %v3027, -1e+30
        %v5668 = vsel %vm5604, %v3026, -1e+30
        %v5669 = vsel %vm5605, %v3025, -1e+30
        %v5670 = vsel %vm5606, %v3024, -1e+30
        %v5671 = vsel %vm5607, %v3023, -1e+30
        %v5672 = vsel %vm5608, %v3022, -1e+30
        %v5673 = vsel %vm5609, %v3021, -1e+30
        %v5674 = vsel %vm5610, %v3020, -1e+30
        %v5675 = vsel %vm5611, %v3019, -1e+30
        %v5676 = vsel %vm5612, %v3018, -1e+30
        %v5677 = vsel %vm5613, %v3017, -1e+30
        %v5678 = vsel %vm5614, %v3016, -1e+30
        %v5679 = vsel %vm5615, %v3015, -1e+30
        %v5680 = vsel %vm5616, %v3014, -1e+30
        %v5681 = vsel %vm5617, %v3013, -1e+30
        %v5682 = vsel %vm5618, %v3012, -1e+30
        %v5683 = vsel %vm5619, %v3011, -1e+30
        %v5684 = vsel %vm5620, %v3010, -1e+30
        %v5685 = vsel %vm5621, %v3009, -1e+30
        %v5686 = vsel %vm5622, %v3008, -1e+30
        %v5687 = vsel %vm5623, %v3007, -1e+30
        %v5688 = vsel %vm5624, %v3006, -1e+30
        %v5689 = vsel %vm5625, %v3005, -1e+30
        %v5690 = vsel %vm5626, %v3068, -1e+30
        %v5691 = vsel %vm5627, %v3067, -1e+30
        %v5692 = vsel %vm5628, %v3066, -1e+30
        %v5693 = vmax.f32 %v5309, %v5629
        %v5694 = vmax.f32 %v5310, %v5630
        %v5695 = vmax.f32 %v5311, %v5631
        %v5696 = vmax.f32 %v5312, %v5632
        %v5697 = vmax.f32 %v5313, %v5633
        %v5698 = vmax.f32 %v5314, %v5634
        %v5699 = vmax.f32 %v5315, %v5635
        %v5700 = vmax.f32 %v5316, %v5636
        %v5701 = vmax.f32 %v5317, %v5637
        %v5702 = vmax.f32 %v5318, %v5638
        %v5703 = vmax.f32 %v5319, %v5639
        %v5704 = vmax.f32 %v5320, %v5640
        %v5705 = vmax.f32 %v5321, %v5641
        %v5706 = vmax.f32 %v5322, %v5642
        %v5707 = vmax.f32 %v5323, %v5643
        %v5708 = vmax.f32 %v5324, %v5644
        %v5709 = vmax.f32 %v5325, %v5645
        %v5710 = vmax.f32 %v5326, %v5646
        %v5711 = vmax.f32 %v5327, %v5647
        %v5712 = vmax.f32 %v5328, %v5648
        %v5713 = vmax.f32 %v5329, %v5649
        %v5714 = vmax.f32 %v5330, %v5650
        %v5715 = vmax.f32 %v5331, %v5651
        %v5716 = vmax.f32 %v5332, %v5652
        %v5717 = vmax.f32 %v5333, %v5653
        %v5718 = vmax.f32 %v5334, %v5654
        %v5719 = vmax.f32 %v5335, %v5655
        %v5720 = vmax.f32 %v5336, %v5656
        %v5721 = vmax.f32 %v5337, %v5657
        %v5722 = vmax.f32 %v5338, %v5658
        %v5723 = vmax.f32 %v5339, %v5659
        %v5724 = vmax.f32 %v5340, %v5660
        %v5725 = vmax.f32 %v5341, %v5661
        %v5726 = vmax.f32 %v5342, %v5662
        %v5727 = vmax.f32 %v5343, %v5663
        %v5728 = vmax.f32 %v5344, %v5664
        %v5729 = vmax.f32 %v5345, %v5665
        %v5730 = vmax.f32 %v5346, %v5666
        %v5731 = vmax.f32 %v5347, %v5667
        %v5732 = vmax.f32 %v5348, %v5668
        %v5733 = vmax.f32 %v5349, %v5669
        %v5734 = vmax.f32 %v5350, %v5670
        %v5735 = vmax.f32 %v5351, %v5671
        %v5736 = vmax.f32 %v5352, %v5672
        %v5737 = vmax.f32 %v5353, %v5673
        %v5738 = vmax.f32 %v5354, %v5674
        %v5739 = vmax.f32 %v5355, %v5675
        %v5740 = vmax.f32 %v5356, %v5676
        %v5741 = vmax.f32 %v5357, %v5677
        %v5742 = vmax.f32 %v5358, %v5678
        %v5743 = vmax.f32 %v5359, %v5679
        %v5744 = vmax.f32 %v5360, %v5680
        %v5745 = vmax.f32 %v5361, %v5681
        %v5746 = vmax.f32 %v5362, %v5682
        %v5747 = vmax.f32 %v5363, %v5683
        %v5748 = vmax.f32 %v5364, %v5684
        %v5749 = vmax.f32 %v5365, %v5685
        %v5750 = vmax.f32 %v5366, %v5686
        %v5751 = vmax.f32 %v5367, %v5687
        %v5752 = vmax.f32 %v5368, %v5688
        %v5753 = vmax.f32 %v5369, %v5689
        %v5754 = vmax.f32 %v5370, %v5690
        %v5755 = vmax.f32 %v5371, %v5691
        %v5756 = vmax.f32 %v5372, %v5692
        %v5757 = vld [vmem:[%s3] sm:$0xff]
        %v5758 = vld [vmem:[%s3 + $0x8] sm:$0xff]
        %v5759 = vld [vmem:[%s3 + $0x10] sm:$0xff]
        %v5760 = vld [vmem:[%s3 + $0x18] sm:$0xff]
        %v5761 = vld [vmem:[%s3 + $0x20] sm:$0xff]
        %v5762 = vld [vmem:[%s3 + $0x28] sm:$0xff]
        %v5763 = vld [vmem:[%s3 + $0x30] sm:$0xff]
        %v5764 = vld [vmem:[%s3 + $0x38] sm:$0xff]
        %v5765 = vld [vmem:[%s3 + $0x40] sm:$0xff]
        %v5766 = vld [vmem:[%s3 + $0x48] sm:$0xff]
        %v5767 = vld [vmem:[%s3 + $0x50] sm:$0xff]
        %v5768 = vld [vmem:[%s3 + $0x58] sm:$0xff]
        %v5769 = vld [vmem:[%s3 + $0x60] sm:$0xff]
        %v5770 = vld [vmem:[%s3 + $0x68] sm:$0xff]
        %v5771 = vld [vmem:[%s3 + $0x70] sm:$0xff]
        %v5772 = vld [vmem:[%s3 + $0x78] sm:$0xff]
        %v5773 = vld [vmem:[%s3 + $0x80] sm:$0xff]
        %v5774 = vld [vmem:[%s3 + $0x88] sm:$0xff]
        %v5775 = vld [vmem:[%s3 + $0x90] sm:$0xff]
        %v5776 = vld [vmem:[%s3 + $0x98] sm:$0xff]
        %v5777 = vld [vmem:[%s3 + $0xa0] sm:$0xff]
        %v5778 = vld [vmem:[%s3 + $0xa8] sm:$0xff]
        %v5779 = vld [vmem:[%s3 + $0xb0] sm:$0xff]
        %v5780 = vld [vmem:[%s3 + $0xb8] sm:$0xff]
        %v5781 = vld [vmem:[%s3 + $0xc0] sm:$0xff]
        %v5782 = vld [vmem:[%s3 + $0xc8] sm:$0xff]
        %v5783 = vld [vmem:[%s3 + $0xd0] sm:$0xff]
        %v5784 = vld [vmem:[%s3 + $0xd8] sm:$0xff]
        %v5785 = vld [vmem:[%s3 + $0xe0] sm:$0xff]
        %v5786 = vld [vmem:[%s3 + $0xe8] sm:$0xff]
        %v5787 = vld [vmem:[%s3 + $0xf0] sm:$0xff]
        %v5788 = vld [vmem:[%s3 + $0xf8] sm:$0xff]
        %v5789 = vpack.c.bf16 %v5694, %v5693
        %v5790 = vpack.c.bf16 %v5696, %v5695
        %v5791 = vpack.c.bf16 %v5698, %v5697
        %v5792 = vpack.c.bf16 %v5700, %v5699
        %v5793 = vpack.c.bf16 %v5702, %v5701
        %v5794 = vpack.c.bf16 %v5704, %v5703
        %v5795 = vpack.c.bf16 %v5706, %v5705
        %v5796 = vpack.c.bf16 %v5708, %v5707
        %v5797 = vpack.c.bf16 %v5710, %v5709
        %v5798 = vpack.c.bf16 %v5712, %v5711
        %v5799 = vpack.c.bf16 %v5714, %v5713
        %v5800 = vpack.c.bf16 %v5716, %v5715
        %v5801 = vpack.c.bf16 %v5718, %v5717
        %v5802 = vpack.c.bf16 %v5720, %v5719
        %v5803 = vpack.c.bf16 %v5722, %v5721
        %v5804 = vpack.c.bf16 %v5724, %v5723
        %v5805 = vpack.c.bf16 %v5726, %v5725
        %v5806 = vpack.c.bf16 %v5728, %v5727
        %v5807 = vpack.c.bf16 %v5730, %v5729
        %v5808 = vpack.c.bf16 %v5732, %v5731
        %v5809 = vpack.c.bf16 %v5734, %v5733
        %v5810 = vpack.c.bf16 %v5736, %v5735
        %v5811 = vpack.c.bf16 %v5738, %v5737
        %v5812 = vpack.c.bf16 %v5740, %v5739
        %v5813 = vpack.c.bf16 %v5742, %v5741
        %v5814 = vpack.c.bf16 %v5744, %v5743
        %v5815 = vpack.c.bf16 %v5746, %v5745
        %v5816 = vpack.c.bf16 %v5748, %v5747
        %v5817 = vpack.c.bf16 %v5750, %v5749
        %v5818 = vpack.c.bf16 %v5752, %v5751
        %v5819 = vpack.c.bf16 %v5754, %v5753
        %v5820 = vpack.c.bf16 %v5756, %v5755
        %v5853 = vunpack.c.l.b16 %v5757
        %v5854 = vunpack.c.h.b16 %v5757
        %v5855 = vunpack.c.l.b16 %v5758
        %v5856 = vunpack.c.h.b16 %v5758
        %v5857 = vunpack.c.l.b16 %v5759
        %v5858 = vunpack.c.h.b16 %v5759
        %v5859 = vunpack.c.l.b16 %v5760
        %v5860 = vunpack.c.h.b16 %v5760
        %v5861 = vunpack.c.l.b16 %v5761
        %v5862 = vunpack.c.h.b16 %v5761
        %v5863 = vunpack.c.l.b16 %v5762
        %v5864 = vunpack.c.h.b16 %v5762
        %v5865 = vunpack.c.l.b16 %v5763
        %v5866 = vunpack.c.h.b16 %v5763
        %v5867 = vunpack.c.l.b16 %v5764
        %v5868 = vunpack.c.h.b16 %v5764
        %v5869 = vunpack.c.l.b16 %v5765
        %v5870 = vunpack.c.h.b16 %v5765
        %v5871 = vunpack.c.l.b16 %v5766
        %v5872 = vunpack.c.h.b16 %v5766
        %v5873 = vunpack.c.l.b16 %v5767
        %v5874 = vunpack.c.h.b16 %v5767
        %v5875 = vunpack.c.l.b16 %v5768
        %v5876 = vunpack.c.h.b16 %v5768
        %v5877 = vunpack.c.l.b16 %v5769
        %v5878 = vunpack.c.h.b16 %v5769
        %v5879 = vunpack.c.l.b16 %v5770
        %v5880 = vunpack.c.h.b16 %v5770
        %v5881 = vunpack.c.l.b16 %v5771
        %v5882 = vunpack.c.h.b16 %v5771
        %v5883 = vunpack.c.l.b16 %v5772
        %v5884 = vunpack.c.h.b16 %v5772
        %v5885 = vunpack.c.l.b16 %v5773
        %v5886 = vunpack.c.h.b16 %v5773
        %v5887 = vunpack.c.l.b16 %v5774
        %v5888 = vunpack.c.h.b16 %v5774
        %v5889 = vunpack.c.l.b16 %v5775
        %v5890 = vunpack.c.h.b16 %v5775
        %v5891 = vunpack.c.l.b16 %v5776
        %v5892 = vunpack.c.h.b16 %v5776
        %v5893 = vunpack.c.l.b16 %v5777
        %v5894 = vunpack.c.h.b16 %v5777
        %v5895 = vunpack.c.l.b16 %v5778
        %v5896 = vunpack.c.h.b16 %v5778
        %v5897 = vunpack.c.l.b16 %v5779
        %v5898 = vunpack.c.h.b16 %v5779
        %v5899 = vunpack.c.l.b16 %v5780
        %v5900 = vunpack.c.h.b16 %v5780
        %v5901 = vunpack.c.l.b16 %v5781
        %v5902 = vunpack.c.h.b16 %v5781
        %v5903 = vunpack.c.l.b16 %v5782
        %v5904 = vunpack.c.h.b16 %v5782
        %v5905 = vunpack.c.l.b16 %v5783
        %v5906 = vunpack.c.h.b16 %v5783
        %v5907 = vunpack.c.l.b16 %v5784
        %v5908 = vunpack.c.h.b16 %v5784
        %v5909 = vunpack.c.l.b16 %v5785
        %v5910 = vunpack.c.h.b16 %v5785
        %v5911 = vunpack.c.l.b16 %v5786
        %v5912 = vunpack.c.h.b16 %v5786
        %v5913 = vunpack.c.l.b16 %v5787
        %v5914 = vunpack.c.h.b16 %v5787
        %v5915 = vunpack.c.l.b16 %v5788
        %v5916 = vunpack.c.h.b16 %v5788
        %v5917 = vpack.c.b16 %v5857, %v5853
        %v5918 = vpack.c.b16 %v5858, %v5854
        %v5919 = vpack.c.b16 %v5859, %v5855
        %v5920 = vpack.c.b16 %v5860, %v5856
        %v5921 = vpack.c.b16 %v5865, %v5861
        %v5922 = vpack.c.b16 %v5866, %v5862
        %v5923 = vpack.c.b16 %v5867, %v5863
        %v5924 = vpack.c.b16 %v5868, %v5864
        %v5925 = vpack.c.b16 %v5873, %v5869
        %v5926 = vpack.c.b16 %v5874, %v5870
        %v5927 = vpack.c.b16 %v5875, %v5871
        %v5928 = vpack.c.b16 %v5876, %v5872
        %v5929 = vpack.c.b16 %v5881, %v5877
        %v5930 = vpack.c.b16 %v5882, %v5878
        %v5931 = vpack.c.b16 %v5883, %v5879
        %v5932 = vpack.c.b16 %v5884, %v5880
        %v5933 = vpack.c.b16 %v5889, %v5885
        %v5934 = vpack.c.b16 %v5890, %v5886
        %v5935 = vpack.c.b16 %v5891, %v5887
        %v5936 = vpack.c.b16 %v5892, %v5888
        %v5937 = vpack.c.b16 %v5897, %v5893
        %v5938 = vpack.c.b16 %v5898, %v5894
        %v5939 = vpack.c.b16 %v5899, %v5895
        %v5940 = vpack.c.b16 %v5900, %v5896
        %v5941 = vpack.c.b16 %v5905, %v5901
        %v5942 = vpack.c.b16 %v5906, %v5902
        %v5943 = vpack.c.b16 %v5907, %v5903
        %v5944 = vpack.c.b16 %v5908, %v5904
        %v5945 = vpack.c.b16 %v5913, %v5909
        %v5946 = vpack.c.b16 %v5914, %v5910
        %v5947 = vpack.c.b16 %v5915, %v5911
        %v5948 = vpack.c.b16 %v5916, %v5912
        %5981 = vmatpush.bf16.msra.mxu0 %v5796
        %5982 = vmatpush.bf16.msra.mxu0 %v5795
        %5983 = vmatpush.bf16.msra.mxu0 %v5794
        %5984 = vmatpush.bf16.msra.mxu0 %v5793
        %5985 = vmatpush.bf16.msra.mxu0 %v5792
        %5986 = vmatpush.bf16.msra.mxu0 %v5791
        %5987 = vmatpush.bf16.msra.mxu0 %v5790
        %5988 = vmatpush.bf16.msra.mxu0 %v5789
        %5989 = vmatmul.bf16.gmra.mxu0 %v5917
        %v5990 = vpop.f32.mrf.mxu0
        %v5991 = vadd.f32 0.0, %v5990
        %v5992 = vpop.f32.mrf.mxu0
        %v5993 = vadd.f32 0.0, %v5992
        %5994 = vmatmul.bf16.gmra.mxu0 %v5921
        %v5995 = vpop.f32.mrf.mxu0
        %v5996 = vadd.f32 0.0, %v5995
        %v5997 = vpop.f32.mrf.mxu0
        %v5998 = vadd.f32 0.0, %v5997
        %5999 = vmatmul.bf16.gmra.mxu0 %v5925
        %v6000 = vpop.f32.mrf.mxu0
        %v6001 = vadd.f32 0.0, %v6000
        %v6002 = vpop.f32.mrf.mxu0
        %v6003 = vadd.f32 0.0, %v6002
        %6004 = vmatmul.bf16.gmra.mxu0 %v5929
        %v6005 = vpop.f32.mrf.mxu0
        %v6006 = vadd.f32 0.0, %v6005
        %v6007 = vpop.f32.mrf.mxu0
        %v6008 = vadd.f32 0.0, %v6007
        %6009 = vmatmul.bf16.gmra.mxu0 %v5933
        %v6010 = vpop.f32.mrf.mxu0
        %v6011 = vadd.f32 0.0, %v6010
        %v6012 = vpop.f32.mrf.mxu0
        %v6013 = vadd.f32 0.0, %v6012
        %6014 = vmatmul.bf16.gmra.mxu0 %v5937
        %v6015 = vpop.f32.mrf.mxu0
        %v6016 = vadd.f32 0.0, %v6015
        %v6017 = vpop.f32.mrf.mxu0
        %v6018 = vadd.f32 0.0, %v6017
        %6019 = vmatmul.bf16.gmra.mxu0 %v5941
        %v6020 = vpop.f32.mrf.mxu0
        %v6021 = vadd.f32 0.0, %v6020
        %v6022 = vpop.f32.mrf.mxu0
        %v6023 = vadd.f32 0.0, %v6022
        %6024 = vmatmul.bf16.gmra.mxu0 %v5945
        %v6025 = vpop.f32.mrf.mxu0
        %v6026 = vadd.f32 0.0, %v6025
        %v6027 = vpop.f32.mrf.mxu0
        %v6028 = vadd.f32 0.0, %v6027
        %6029 = vdwg.mxu0
        %6030 = vmatpush.bf16.msra.mxu0 %v5804
        %6031 = vmatpush.bf16.msra.mxu0 %v5803
        %6032 = vmatpush.bf16.msra.mxu0 %v5802
        %6033 = vmatpush.bf16.msra.mxu0 %v5801
        %6034 = vmatpush.bf16.msra.mxu0 %v5800
        %6035 = vmatpush.bf16.msra.mxu0 %v5799
        %6036 = vmatpush.bf16.msra.mxu0 %v5798
        %6037 = vmatpush.bf16.msra.mxu0 %v5797
        %6038 = vmatmul.bf16.gmra.mxu0 %v5918
        %v6039 = vpop.f32.mrf.mxu0
        %v6040 = vadd.f32 %v5991, %v6039
        %v6041 = vpop.f32.mrf.mxu0
        %v6042 = vadd.f32 %v5993, %v6041
        %6043 = vmatmul.bf16.gmra.mxu0 %v5922
        %v6044 = vpop.f32.mrf.mxu0
        %v6045 = vadd.f32 %v5996, %v6044
        %v6046 = vpop.f32.mrf.mxu0
        %v6047 = vadd.f32 %v5998, %v6046
        %6048 = vmatmul.bf16.gmra.mxu0 %v5926
        %v6049 = vpop.f32.mrf.mxu0
        %v6050 = vadd.f32 %v6001, %v6049
        %v6051 = vpop.f32.mrf.mxu0
        %v6052 = vadd.f32 %v6003, %v6051
        %6053 = vmatmul.bf16.gmra.mxu0 %v5930
        %v6054 = vpop.f32.mrf.mxu0
        %v6055 = vadd.f32 %v6006, %v6054
        %v6056 = vpop.f32.mrf.mxu0
        %v6057 = vadd.f32 %v6008, %v6056
        %6058 = vmatmul.bf16.gmra.mxu0 %v5934
        %v6059 = vpop.f32.mrf.mxu0
        %v6060 = vadd.f32 %v6011, %v6059
        %v6061 = vpop.f32.mrf.mxu0
        %v6062 = vadd.f32 %v6013, %v6061
        %6063 = vmatmul.bf16.gmra.mxu0 %v5938
        %v6064 = vpop.f32.mrf.mxu0
        %v6065 = vadd.f32 %v6016, %v6064
        %v6066 = vpop.f32.mrf.mxu0
        %v6067 = vadd.f32 %v6018, %v6066
        %6068 = vmatmul.bf16.gmra.mxu0 %v5942
        %v6069 = vpop.f32.mrf.mxu0
        %v6070 = vadd.f32 %v6021, %v6069
        %v6071 = vpop.f32.mrf.mxu0
        %v6072 = vadd.f32 %v6023, %v6071
        %6073 = vmatmul.bf16.gmra.mxu0 %v5946
        %v6074 = vpop.f32.mrf.mxu0
        %v6075 = vadd.f32 %v6026, %v6074
        %v6076 = vpop.f32.mrf.mxu0
        %v6077 = vadd.f32 %v6028, %v6076
        %6078 = vdwg.mxu0
        %6079 = vmatpush.bf16.msra.mxu0 %v5812
        %6080 = vmatpush.bf16.msra.mxu0 %v5811
        %6081 = vmatpush.bf16.msra.mxu0 %v5810
        %6082 = vmatpush.bf16.msra.mxu0 %v5809
        %6083 = vmatpush.bf16.msra.mxu0 %v5808
        %6084 = vmatpush.bf16.msra.mxu0 %v5807
        %6085 = vmatpush.bf16.msra.mxu0 %v5806
        %6086 = vmatpush.bf16.msra.mxu0 %v5805
        %6087 = vmatmul.bf16.gmra.mxu0 %v5919
        %v6088 = vpop.f32.mrf.mxu0
        %v6089 = vadd.f32 %v6040, %v6088
        %v6090 = vpop.f32.mrf.mxu0
        %v6091 = vadd.f32 %v6042, %v6090
        %6092 = vmatmul.bf16.gmra.mxu0 %v5923
        %v6093 = vpop.f32.mrf.mxu0
        %v6094 = vadd.f32 %v6045, %v6093
        %v6095 = vpop.f32.mrf.mxu0
        %v6096 = vadd.f32 %v6047, %v6095
        %6097 = vmatmul.bf16.gmra.mxu0 %v5927
        %v6098 = vpop.f32.mrf.mxu0
        %v6099 = vadd.f32 %v6050, %v6098
        %v6100 = vpop.f32.mrf.mxu0
        %v6101 = vadd.f32 %v6052, %v6100
        %6102 = vmatmul.bf16.gmra.mxu0 %v5931
        %v6103 = vpop.f32.mrf.mxu0
        %v6104 = vadd.f32 %v6055, %v6103
        %v6105 = vpop.f32.mrf.mxu0
        %v6106 = vadd.f32 %v6057, %v6105
        %6107 = vmatmul.bf16.gmra.mxu0 %v5935
        %v6108 = vpop.f32.mrf.mxu0
        %v6109 = vadd.f32 %v6060, %v6108
        %v6110 = vpop.f32.mrf.mxu0
        %v6111 = vadd.f32 %v6062, %v6110
        %6112 = vmatmul.bf16.gmra.mxu0 %v5939
        %v6113 = vpop.f32.mrf.mxu0
        %v6114 = vadd.f32 %v6065, %v6113
        %v6115 = vpop.f32.mrf.mxu0
        %v6116 = vadd.f32 %v6067, %v6115
        %6117 = vmatmul.bf16.gmra.mxu0 %v5943
        %v6118 = vpop.f32.mrf.mxu0
        %v6119 = vadd.f32 %v6070, %v6118
        %v6120 = vpop.f32.mrf.mxu0
        %v6121 = vadd.f32 %v6072, %v6120
        %6122 = vmatmul.bf16.gmra.mxu0 %v5947
        %v6123 = vpop.f32.mrf.mxu0
        %v6124 = vadd.f32 %v6075, %v6123
        %v6125 = vpop.f32.mrf.mxu0
        %v6126 = vadd.f32 %v6077, %v6125
        %6127 = vdwg.mxu0
        %6128 = vmatpush.bf16.msra.mxu0 %v5820
        %6129 = vmatpush.bf16.msra.mxu0 %v5819
        %6130 = vmatpush.bf16.msra.mxu0 %v5818
        %6131 = vmatpush.bf16.msra.mxu0 %v5817
        %6132 = vmatpush.bf16.msra.mxu0 %v5816
        %6133 = vmatpush.bf16.msra.mxu0 %v5815
        %6134 = vmatpush.bf16.msra.mxu0 %v5814
        %6135 = vmatpush.bf16.msra.mxu0 %v5813
        %6136 = vmatmul.bf16.gmra.mxu0 %v5920
        %v6137 = vpop.f32.mrf.mxu0
        %v6138 = vadd.f32 %v6089, %v6137
        %v6139 = vpop.f32.mrf.mxu0
        %v6140 = vadd.f32 %v6091, %v6139
        %6141 = vmatmul.bf16.gmra.mxu0 %v5924
        %v6142 = vpop.f32.mrf.mxu0
        %v6143 = vadd.f32 %v6094, %v6142
        %v6144 = vpop.f32.mrf.mxu0
        %v6145 = vadd.f32 %v6096, %v6144
        %6146 = vmatmul.bf16.gmra.mxu0 %v5928
        %v6147 = vpop.f32.mrf.mxu0
        %v6148 = vadd.f32 %v6099, %v6147
        %v6149 = vpop.f32.mrf.mxu0
        %v6150 = vadd.f32 %v6101, %v6149
        %6151 = vmatmul.bf16.gmra.mxu0 %v5932
        %v6152 = vpop.f32.mrf.mxu0
        %v6153 = vadd.f32 %v6104, %v6152
        %v6154 = vpop.f32.mrf.mxu0
        %v6155 = vadd.f32 %v6106, %v6154
        %6156 = vmatmul.bf16.gmra.mxu0 %v5936
        %v6157 = vpop.f32.mrf.mxu0
        %v6158 = vadd.f32 %v6109, %v6157
        %v6159 = vpop.f32.mrf.mxu0
        %v6160 = vadd.f32 %v6111, %v6159
        %6161 = vmatmul.bf16.gmra.mxu0 %v5940
        %v6162 = vpop.f32.mrf.mxu0
        %v6163 = vadd.f32 %v6114, %v6162
        %v6164 = vpop.f32.mrf.mxu0
        %v6165 = vadd.f32 %v6116, %v6164
        %6166 = vmatmul.bf16.gmra.mxu0 %v5944
        %v6167 = vpop.f32.mrf.mxu0
        %v6168 = vadd.f32 %v6119, %v6167
        %v6169 = vpop.f32.mrf.mxu0
        %v6170 = vadd.f32 %v6121, %v6169
        %6171 = vmatmul.bf16.gmra.mxu0 %v5948
        %v6172 = vpop.f32.mrf.mxu0
        %v6173 = vadd.f32 %v6124, %v6172
        %v6174 = vpop.f32.mrf.mxu0
        %v6175 = vadd.f32 %v6126, %v6174
        %6176 = vdwg.mxu0
        %6177 = vst [vmem:[%s205] sm:$0xff] %v6138
        %6178 = vst [vmem:[%s205 + $0x8] sm:$0xff] %v6140
        %6179 = vst [vmem:[%s205 + $0x10] sm:$0xff] %v6143
        %6180 = vst [vmem:[%s205 + $0x18] sm:$0xff] %v6145
        %6181 = vst [vmem:[%s205 + $0x20] sm:$0xff] %v6148
        %6182 = vst [vmem:[%s205 + $0x28] sm:$0xff] %v6150
        %6183 = vst [vmem:[%s205 + $0x30] sm:$0xff] %v6153
        %6184 = vst [vmem:[%s205 + $0x38] sm:$0xff] %v6155
        %6185 = vst [vmem:[%s205 + $0x40] sm:$0xff] %v6158
        %6186 = vst [vmem:[%s205 + $0x48] sm:$0xff] %v6160
        %6187 = vst [vmem:[%s205 + $0x50] sm:$0xff] %v6163
        %6188 = vst [vmem:[%s205 + $0x58] sm:$0xff] %v6165
        %6189 = vst [vmem:[%s205 + $0x60] sm:$0xff] %v6168
        %6190 = vst [vmem:[%s205 + $0x68] sm:$0xff] %v6170
        %6191 = vst [vmem:[%s205 + $0x70] sm:$0xff] %v6173
        %6192 = vst [vmem:[%s205 + $0x78] sm:$0xff] %v6175
        %s6193 = sand.u32 %s120, 1
        %s6194 = scalar_lea.sflag [#allocation3], %s6193
        %s6195 = sand.u32 %s120, 1
        %s6196 = smul.addr %s6195, 128
        %s6197 = scalar_lea.vmem [#allocation2], %s6196
        // Predicated region
        $region37: #{tpu_custom_call.1} parent=35 // pred_check
          %p6198 = pneg %p130
        $region38: #{tpu_custom_call.1} parent=35 // pred_check_branch
          %6200 = sbr.rel (%p6198) target = $region40
        $region39: #{tpu_custom_call.1} parent=35 // pred_region
          %6202 = vsyncadd %s6194, 0
          %s6203 = smul.addr %s18, 16
          %s6204 = smul.addr %s6203, 8
          %s6205 = scalar_lea.hbm %s4, %s6204
          %s6206 = sshll.u32 %s6197, 4
          %s6207 = int_to_ptr.vmem [resolvable:$true] %s6206
          %s6208 = sshll.u32 %s6205, 4
          %s6209 = int_to_ptr.hbm [resolvable:$true] %s6208
          %6214 = dma.vmem_to_hbm [thread:$0]  %s6207, 2048, %s6209, %s6194, 128, 128, 8
        $region40: #{tpu_custom_call.1} parent=35 // pred_fallthru
          _
      $region36: #{tpu_custom_call.1} parent=5 // pred_fallthru
        _
      %p6215 = scmp.le.s32.totalorder 2, %s13
      // Predicated region
      $region41: #{tpu_custom_call.1} parent=5 // pred_check
        %p6216 = pneg %p6215
      $region42: #{tpu_custom_call.1} parent=5 // pred_check_branch
        %6218 = sbr.rel (%p6216) target = $region44
      $region43: #{tpu_custom_call.1} parent=5 // pred_region
        %s6219 = ssub.s32 %s13, 2
        // Predicated region
        $region45: #{tpu_custom_call.1} parent=43 // pred_check
          %p6220 = pneg %p136
        $region46: #{tpu_custom_call.1} parent=43 // pred_check_branch
          %6222 = sbr.rel (%p6220) target = $region48
        $region47: #{tpu_custom_call.1} parent=43 // pred_region
          %s6223 = sand.u32 %s121, 1
          %s6224 = scalar_lea.sflag [#allocation3], %s6223
          %s6225 = sand.u32 %s121, 1
          %s6226 = smul.addr %s6225, 128
          %s6227 = scalar_lea.vmem [#allocation2], %s6226
          %6229 = dma.done %s6224, 2048
        $region48: #{tpu_custom_call.1} parent=43 // pred_fallthru
          _
      $region44: #{tpu_custom_call.1} parent=5 // pred_fallthru
        _
    $region6: #{tpu_custom_call.1} parent=1 // loop_footer
      %s17 = sadd.s32 1, %s13
    $region7: #{tpu_custom_call.1} parent=1 // loop_footer_branch
      %12 = sbr.rel target = $region3
    $region8: #{tpu_custom_call.1} parent=1 // loop_exit
      _
    %6230 = vsyncpa [#allocation3], 1
    %s6231 = scalar_lea.sflag [#allocation3], 1
    %6232 = vsyncpa %s6231, 1

</llo_original>
